<compile_context>
chip_gen: v5e
topology: v5e:2x2
jax: 0.10.0
libtpu: 0.0.40
codegen_flags: <defaults>
</compile_context>

<pallas_src>
import jax
import jax.numpy as jnp
import numpy as np
from jax import lax
from jax.experimental import pallas as pl
from jax.experimental.pallas import tpu as pltpu

C_IN = 512        # conv1 in channels (fixed by the module)
C_MID = 512       # conv1 out channels
C_CLF = 15        # conv2 out channels
C_REG = 60        # conv3 out channels
C_OUT_PAD = 128   # fused conv2||conv3 output lanes, padded to a full lane width
KH = KW = 2       # conv1 kernel size
K_DIM = KH * KW * C_IN   # 2048


def _cdiv(a, b):
    return (a + b - 1) // b


def _round_up(x, m):
    return ((x + m - 1) // m) * m


def _vmem_plan():
    """Generation-aware (max matmul rows per step, vmem_limit_bytes)."""
    try:
        phys = int(pltpu.get_tpu_info().vmem_capacity_bytes)
    except Exception:
        phys = 64 * 1024 * 1024          # unknown chip -> assume v7x-sized VMEM
    vmem_limit = min((phys * 3) // 4, 96 * 1024 * 1024)
    # Per-step working set ~= 13 KiB per flat pixel row (two bf16 inputs double-
    # buffered, f32 acc + rolled partial, bf16 h, f32 out double-buffered) plus
    # ~2.3 MiB of resident weights -> 1024 rows ~15 MiB, 2048 rows ~29 MiB.
    budget = vmem_limit // 2
    max_m_rows = 2048 if budget >= 40 * 1024 * 1024 else 1024
    return max_m_rows, vmem_limit


def _select_tile_r(R, W, max_m_rows):
    """Output rows per grid step: multiple of 8, VMEM-bounded, >=2 (even) grid
    steps when there is enough work (v7x megacore), minimal padding waste."""
    r8 = _round_up(max(R, 1), 8)
    tile_r = max(8, min(r8, ((max_m_rows // max(W, 1)) // 8) * 8))
    steps = _cdiv(r8, tile_r)
    if steps == 1 and r8 >= 16:
        steps = 2                        # give both v7x TensorCores work
    elif steps > 1 and steps % 2 == 1:
        steps += 1                       # even step count -> balanced 2-core split
    return _round_up(_cdiv(R, steps), 8)


def rcnn_kernel(top_ref, bot_ref, w1_ref, b1_ref, w23_ref, b23_ref, out_ref):
    # top/bot: (M, 512) bf16 flat pixels, W pixels per image row, row-major.
    t = top_ref[...]
    b = bot_ref[...]
    m_rows = t.shape[0]
    c = C_IN
    # conv1 (2x2) as 4 shifted K=512 dots (in-kernel im2col), f32 MXU accum.
    # w1 rows are ordered (kh, kw, cin).
    h = jnp.dot(t, w1_ref[0 * c:1 * c, :], preferred_element_type=jnp.float32)   # (kh=0, kw=0)
    h += jnp.dot(b, w1_ref[2 * c:3 * c, :], preferred_element_type=jnp.float32)  # (kh=1, kw=0)
    g = jnp.dot(t, w1_ref[1 * c:2 * c, :], preferred_element_type=jnp.float32)   # (kh=0, kw=1)
    g += jnp.dot(b, w1_ref[3 * c:4 * c, :], preferred_element_type=jnp.float32)  # (kh=1, kw=1)
    # kw=+1 contribution: output pixel m needs g[m + 1]; roll by M-1 == -1.
    # The wrapped row and the last column of each image row are discarded later.
    h += pltpu.roll(g, shift=m_rows - 1, axis=0)
    h = jnp.maximum(h + b1_ref[...], 0.0).astype(jnp.bfloat16)
    # fused conv2||conv3 (1x1) as a single 128-lane matmul.
    y = jnp.dot(h, w23_ref[...], preferred_element_type=jnp.float32) + b23_ref[...]
    lane = lax.broadcasted_iota(jnp.int32, y.shape, 1)
    # lanes [0:15] -> sigmoid (clf), lanes [15:75] -> ReLU (reg); rest is padding.
    out_ref[...] = jnp.where(lane < C_CLF, jax.nn.sigmoid(y), jnp.maximum(y, 0.0))


def init_params(key):
    """Deterministic synthetic params, PyTorch Conv2d layouts (OIHW)."""
    ks = jax.random.split(key, 6)
    s1 = 1.0 / np.sqrt(C_IN * KH * KW)
    s2 = 1.0 / np.sqrt(C_MID * 1 * 1)
    w1_oihw = jax.random.uniform(ks[0], (C_MID, C_IN, KH, KW), jnp.float32, -s1, s1)
    b1 = jax.random.uniform(ks[1], (C_MID,), jnp.float32, -s1, s1)
    w2_oihw = jax.random.uniform(ks[2], (C_CLF, C_MID, 1, 1), jnp.float32, -s2, s2)
    b2 = jax.random.uniform(ks[3], (C_CLF,), jnp.float32, -s2, s2)
    w3_oihw = jax.random.uniform(ks[4], (C_REG, C_MID, 1, 1), jnp.float32, -s2, s2)
    b3 = jax.random.uniform(ks[5], (C_REG,), jnp.float32, -s2, s2)
    return (w1_oihw, b1, w2_oihw, b2, w3_oihw, b3)


def to_matmul_params(params):
    """Convert OIHW conv weights to the (bf16) matmul layouts used by the kernel."""
    w1_oihw, b1, w2_oihw, b2, w3_oihw, b3 = params
    # row order must be (kh, kw, cin) to match the kernel's 4-way split
    w1 = jnp.transpose(w1_oihw, (2, 3, 1, 0)).reshape(K_DIM, C_MID)
    w1 = w1.astype(jnp.bfloat16)
    # fuse conv2 || conv3 into one (C_MID, 128) weight, zero-padded lanes
    w2 = w2_oihw.reshape(C_CLF, C_MID).T            # (C_MID, 15)
    w3 = w3_oihw.reshape(C_REG, C_MID).T            # (C_MID, 60)
    w23 = jnp.concatenate([w2, w3], axis=1)         # (C_MID, 75)
    w23 = jnp.pad(w23, ((0, 0), (0, C_OUT_PAD - (C_CLF + C_REG))))
    w23 = w23.astype(jnp.bfloat16)
    b23 = jnp.concatenate([b2, b3])
    b23 = jnp.pad(b23, (0, C_OUT_PAD - (C_CLF + C_REG)))
    return (w1, b1.reshape(1, C_MID).astype(jnp.float32),
            w23, b23.reshape(1, C_OUT_PAD).astype(jnp.float32))


def rcnn_forward(x, params):
    """x: NCHW float32 (N, 512, H, W) -> (clf (N,15,H-1,W-1), reg (N,60,H-1,W-1))."""
    N, C, H, W = x.shape
    assert C == C_IN
    Ho, Wo = H - 1, W - 1
    R = N * Ho                                 # output rows across the batch

    # bf16 NHWC view; cast happens BEFORE any copies so the row-shifted slices
    # (the whole in-kernel im2col feed) move bf16, never f32 patch matrices.
    x_nhwc = jnp.transpose(x, (0, 2, 3, 1)).astype(jnp.bfloat16)   # (N, H, W, C)
    top = x_nhwc[:, 0:Ho, :, :].reshape(R, W, C_IN)                # image rows i
    bot = x_nhwc[:, 1:H, :, :].reshape(R, W, C_IN)                 # image rows i+1

    max_m_rows, vmem_limit = _vmem_plan()
    tile_r = _select_tile_r(R, W, max_m_rows)
    grid_steps = _cdiv(R, tile_r)
    R_pad = grid_steps * tile_r
    m_tile = tile_r * W

    pad = ((0, R_pad - R), (0, 0), (0, 0))
    top = jnp.pad(top, pad).reshape(R_pad * W, C_IN)
    bot = jnp.pad(bot, pad).reshape(R_pad * W, C_IN)

    w1, b1, w23, b23 = to_matmul_params(params)

    # TODO(synk): single-buffer the resident weight specs (pipeline_mode=
    # pl.Buffered(1)) to shave ~2.3 MiB of VMEM for even larger tiles.
    out = pl.pallas_call(
        rcnn_kernel,
        out_shape=jax.ShapeDtypeStruct((R_pad * W, C_OUT_PAD), jnp.float32),
        grid=(grid_steps,),
        in_specs=[
            pl.BlockSpec((m_tile, C_IN), lambda i: (i, 0)),        # top rows: tiled
            pl.BlockSpec((m_tile, C_IN), lambda i: (i, 0)),        # bot rows: tiled
            pl.BlockSpec((K_DIM, C_MID), lambda i: (0, 0)),        # w1: resident
            pl.BlockSpec((1, C_MID), lambda i: (0, 0)),            # b1: resident
            pl.BlockSpec((C_MID, C_OUT_PAD), lambda i: (0, 0)),    # w2||w3: resident
            pl.BlockSpec((1, C_OUT_PAD), lambda i: (0, 0)),        # b2||b3: resident
        ],
        out_specs=pl.BlockSpec((m_tile, C_OUT_PAD), lambda i: (i, 0)),
        compiler_params=pltpu.CompilerParams(
            dimension_semantics=("parallel",),
            vmem_limit_bytes=int(vmem_limit)),
    )(top, bot, w1, b1, w23, b23)

    out = out.reshape(R_pad, W, C_OUT_PAD)[:R, :Wo, :]   # drop pad rows / wrap column
    clf = out[..., :C_CLF].reshape(N, Ho, Wo, C_CLF).transpose(0, 3, 1, 2)
    reg = out[..., C_CLF:C_CLF + C_REG].reshape(N, Ho, Wo, C_REG).transpose(0, 3, 1, 2)
    return clf, reg


def rcnn_reference(x, params):
    """Pure-JAX reference matching the PyTorch forward (NCHW convs, f32)."""
    w1_oihw, b1, w2_oihw, b2, w3_oihw, b3 = params
    dn = ('NCHW', 'OIHW', 'NCHW')
    h = lax.conv_general_dilated(x, w1_oihw, (1, 1), 'VALID',
                                 dimension_numbers=dn) + b1.reshape(1, -1, 1, 1)
    h = jnp.maximum(h, 0.0)
    clf = jax.nn.sigmoid(
        lax.conv_general_dilated(h, w2_oihw, (1, 1), 'VALID',
                                 dimension_numbers=dn) + b2.reshape(1, -1, 1, 1))
    reg = jnp.maximum(
        lax.conv_general_dilated(h, w3_oihw, (1, 1), 'VALID',
                                 dimension_numbers=dn) + b3.reshape(1, -1, 1, 1),
        0.0)
    return clf, reg


if __name__ == "__main__":
    key = jax.random.PRNGKey(0)
    k_x, k_p = jax.random.split(key)

    # Small spatial/batch; channel count (512) is fixed by the module.
    N, H, W = 2, 8, 8
    x = jax.random.normal(k_x, (N, C_IN, H, W), jnp.float32)
    params = init_params(k_p)

    clf, reg = jax.jit(rcnn_forward)(x, params)
    jax.block_until_ready((clf, reg))

    assert clf.shape == (N, C_CLF, H - 1, W - 1)
    assert reg.shape == (N, C_REG, H - 1, W - 1)

    clf_ref, reg_ref = rcnn_reference(x, params)
    np.testing.assert_allclose(np.asarray(clf), np.asarray(clf_ref),
                               rtol=5e-2, atol=5e-2)
    np.testing.assert_allclose(np.asarray(reg), np.asarray(reg_ref),
                               rtol=5e-2, atol=5e-2)

    print("KERNEL_OK")
</pallas_src>

<mosaic_0001>
module attributes {stable_mosaic.version = 11 : i64} {
  func.func @rcnn_kernel(%arg0: i32, %arg1: memref<64x512xbf16, #tpu.memory_space<vmem>>, %arg2: memref<64x512xbf16, #tpu.memory_space<vmem>>, %arg3: memref<2048x512xbf16, #tpu.memory_space<vmem>>, %arg4: memref<1x512xf32, #tpu.memory_space<vmem>>, %arg5: memref<512x128xbf16, #tpu.memory_space<vmem>>, %arg6: memref<1x128xf32, #tpu.memory_space<vmem>>, %arg7: memref<64x128xf32, #tpu.memory_space<vmem>>) attributes {dimension_semantics = [#tpu.dimension_semantics<parallel>], iteration_bounds = array<i64: 2>, scalar_prefetch = 0 : i64, scratch_operands = 0 : i64, tpu.core_type = #tpu.core_type<tc>, window_params = [{transform_indices = @transform_0, window_bounds = array<i64: 64, 512>}, {transform_indices = @transform_1, window_bounds = array<i64: 64, 512>}, {pipeline_mode = #tpu.pipeline_mode<synchronous>, transform_indices = @transform_2, window_bounds = array<i64: 2048, 512>}, {pipeline_mode = #tpu.pipeline_mode<synchronous>, transform_indices = @transform_3, window_bounds = array<i64: 1, 512>}, {pipeline_mode = #tpu.pipeline_mode<synchronous>, transform_indices = @transform_4, window_bounds = array<i64: 512, 128>}, {pipeline_mode = #tpu.pipeline_mode<synchronous>, transform_indices = @transform_5, window_bounds = array<i64: 1, 128>}, {transform_indices = @transform_6, window_bounds = array<i64: 64, 128>}]} {
    %c0 = arith.constant 0 : index
    %c0_0 = arith.constant 0 : index
    %0 = vector.load %arg1[%c0, %c0_0] : memref<64x512xbf16, #tpu.memory_space<vmem>>, vector<64x512xbf16>
    %c0_1 = arith.constant 0 : index
    %c0_2 = arith.constant 0 : index
    %1 = vector.load %arg2[%c0_1, %c0_2] : memref<64x512xbf16, #tpu.memory_space<vmem>>, vector<64x512xbf16>
    %c0_3 = arith.constant 0 : index
    %c0_4 = arith.constant 0 : index
    %2 = vector.load %arg3[%c0_3, %c0_4] : memref<2048x512xbf16, #tpu.memory_space<vmem>>, vector<512x512xbf16>
    %cst = arith.constant dense<0.000000e+00> : vector<64x512xf32>
    %3 = tpu.matmul %0, %2, %cst {dimension_numbers = #tpu.dot_dimension_numbers<[1], [0], [0], [1], [0, 0, 1, 1], [], []>} : vector<64x512xbf16>, vector<512x512xbf16>, vector<64x512xf32> -> vector<64x512xf32>
    %c1024 = arith.constant 1024 : index
    %c0_5 = arith.constant 0 : index
    %4 = vector.load %arg3[%c1024, %c0_5] : memref<2048x512xbf16, #tpu.memory_space<vmem>>, vector<512x512xbf16>
    %cst_6 = arith.constant dense<0.000000e+00> : vector<64x512xf32>
    %5 = tpu.matmul %1, %4, %cst_6 {dimension_numbers = #tpu.dot_dimension_numbers<[1], [0], [0], [1], [0, 0, 1, 1], [], []>} : vector<64x512xbf16>, vector<512x512xbf16>, vector<64x512xf32> -> vector<64x512xf32>
    %6 = arith.addf %3, %5 : vector<64x512xf32>
    %c512 = arith.constant 512 : index
    %c0_7 = arith.constant 0 : index
    %7 = vector.load %arg3[%c512, %c0_7] : memref<2048x512xbf16, #tpu.memory_space<vmem>>, vector<512x512xbf16>
    %cst_8 = arith.constant dense<0.000000e+00> : vector<64x512xf32>
    %8 = tpu.matmul %0, %7, %cst_8 {dimension_numbers = #tpu.dot_dimension_numbers<[1], [0], [0], [1], [0, 0, 1, 1], [], []>} : vector<64x512xbf16>, vector<512x512xbf16>, vector<64x512xf32> -> vector<64x512xf32>
    %c1536 = arith.constant 1536 : index
    %c0_9 = arith.constant 0 : index
    %9 = vector.load %arg3[%c1536, %c0_9] : memref<2048x512xbf16, #tpu.memory_space<vmem>>, vector<512x512xbf16>
    %cst_10 = arith.constant dense<0.000000e+00> : vector<64x512xf32>
    %10 = tpu.matmul %1, %9, %cst_10 {dimension_numbers = #tpu.dot_dimension_numbers<[1], [0], [0], [1], [0, 0, 1, 1], [], []>} : vector<64x512xbf16>, vector<512x512xbf16>, vector<64x512xf32> -> vector<64x512xf32>
    %11 = arith.addf %8, %10 : vector<64x512xf32>
    %c63_i32 = arith.constant 63 : i32
    %12 = tpu.dynamic_rotate %11 by %c63_i32 dim 0 : vector<64x512xf32>, i32 -> vector<64x512xf32>
    %13 = arith.addf %6, %12 : vector<64x512xf32>
    %c0_11 = arith.constant 0 : index
    %c0_12 = arith.constant 0 : index
    %14 = vector.load %arg4[%c0_11, %c0_12] : memref<1x512xf32, #tpu.memory_space<vmem>>, vector<1x512xf32>
    %15 = vector.broadcast %14 : vector<1x512xf32> to vector<64x512xf32>
    %16 = arith.addf %13, %15 : vector<64x512xf32>
    %cst_13 = arith.constant 0.000000e+00 : f32
    %17 = vector.broadcast %cst_13 : f32 to vector<64x512xf32>
    %18 = arith.maximumf %16, %17 : vector<64x512xf32>
    %19 = arith.truncf %18 : vector<64x512xf32> to vector<64x512xbf16>
    %c0_14 = arith.constant 0 : index
    %c0_15 = arith.constant 0 : index
    %20 = vector.load %arg5[%c0_14, %c0_15] : memref<512x128xbf16, #tpu.memory_space<vmem>>, vector<512x128xbf16>
    %cst_16 = arith.constant dense<0.000000e+00> : vector<64x128xf32>
    %21 = tpu.matmul %19, %20, %cst_16 {dimension_numbers = #tpu.dot_dimension_numbers<[1], [0], [0], [1], [0, 0, 1, 1], [], []>} : vector<64x512xbf16>, vector<512x128xbf16>, vector<64x128xf32> -> vector<64x128xf32>
    %c0_17 = arith.constant 0 : index
    %c0_18 = arith.constant 0 : index
    %22 = vector.load %arg6[%c0_17, %c0_18] : memref<1x128xf32, #tpu.memory_space<vmem>>, vector<1x128xf32>
    %23 = vector.broadcast %22 : vector<1x128xf32> to vector<64x128xf32>
    %24 = arith.addf %21, %23 : vector<64x128xf32>
    %25 = tpu.iota {dimensions = array<i32: 1>} : vector<64x128xi32>
    %c15_i32 = arith.constant 15 : i32
    %26 = vector.broadcast %c15_i32 : i32 to vector<64x128xi32>
    %27 = arith.cmpi slt, %25, %26 : vector<64x128xi32>
    %28 = arith.negf %24 : vector<64x128xf32>
    %29 = math.exp %28 : vector<64x128xf32>
    %cst_19 = arith.constant 1.000000e+00 : f32
    %30 = vector.broadcast %cst_19 : f32 to vector<64x128xf32>
    %31 = arith.addf %30, %29 : vector<64x128xf32>
    %32 = arith.divf %30, %31 : vector<64x128xf32>
    %cst_20 = arith.constant 0.000000e+00 : f32
    %33 = vector.broadcast %cst_20 : f32 to vector<64x128xf32>
    %34 = arith.maximumf %24, %33 : vector<64x128xf32>
    %35 = arith.select %27, %32, %34 : vector<64x128xi1>, vector<64x128xf32>
    %c0_21 = arith.constant 0 : index
    %c0_22 = arith.constant 0 : index
    %36 = vector.load %arg7[%c0_21, %c0_22] : memref<64x128xf32, #tpu.memory_space<vmem>>, vector<64x128xf32>
    tpu.vector_store %arg7[%c0_21, %c0_22], %35 {strides = array<i32>} : memref<64x128xf32, #tpu.memory_space<vmem>>, vector<64x128xf32>,
    return
  }
  func.func @transform_0(%arg0: i32) -> (i32, i32) {
    %c0_i32 = arith.constant 0 : i32
    %c0_i32_0 = arith.constant 0 : i32
    return %arg0, %c0_i32 : i32, i32
  }
  func.func @transform_1(%arg0: i32) -> (i32, i32) {
    %c0_i32 = arith.constant 0 : i32
    %c0_i32_0 = arith.constant 0 : i32
    return %arg0, %c0_i32 : i32, i32
  }
  func.func @transform_2(%arg0: i32) -> (i32, i32) {
    %c0_i32 = arith.constant 0 : i32
    %c0_i32_0 = arith.constant 0 : i32
    %c0_i32_1 = arith.constant 0 : i32
    return %c0_i32, %c0_i32_0 : i32, i32
  }
  func.func @transform_3(%arg0: i32) -> (i32, i32) {
    %c0_i32 = arith.constant 0 : i32
    %c0_i32_0 = arith.constant 0 : i32
    %c0_i32_1 = arith.constant 0 : i32
    return %c0_i32, %c0_i32_0 : i32, i32
  }
  func.func @transform_4(%arg0: i32) -> (i32, i32) {
    %c0_i32 = arith.constant 0 : i32
    %c0_i32_0 = arith.constant 0 : i32
    %c0_i32_1 = arith.constant 0 : i32
    return %c0_i32, %c0_i32_0 : i32, i32
  }
  func.func @transform_5(%arg0: i32) -> (i32, i32) {
    %c0_i32 = arith.constant 0 : i32
    %c0_i32_0 = arith.constant 0 : i32
    %c0_i32_1 = arith.constant 0 : i32
    return %c0_i32, %c0_i32_0 : i32, i32
  }
  func.func @transform_6(%arg0: i32) -> (i32, i32) {
    %c0_i32 = arith.constant 0 : i32
    %c0_i32_0 = arith.constant 0 : i32
    return %arg0, %c0_i32 : i32, i32
  }
}

</mosaic_0001>

<llo_original>
// kernel: rcnn_forward.1
$region0: #{rcnn_forward.1}
  #allocation0 [shape = 'u32[]', space=smem, size = 0x4, offset = 0x4, fixed_abs, tag = 'smem constant byte address 0x4 - core index']
  #allocation1 [shape = 'u32[72,128]{1,0:T(1,128)}', space=vmem, size = 0x9000, scoped, tag = 'internal scratch']
  %s0 = inlined_call_operand.vmem [shape: bf16[128,512], index: 0, kind: input, shape index: {}]
  %s1 = inlined_call_operand.vmem [shape: bf16[128,512], index: 1, kind: input, shape index: {}]
  %s2 = inlined_call_operand.vmem [shape: bf16[2048,512], index: 2, kind: input, shape index: {}]
  %s3 = inlined_call_operand.vmem [shape: f32[1,512], index: 3, kind: input, shape index: {}]
  %s4 = inlined_call_operand.vmem [shape: bf16[512,128], index: 4, kind: input, shape index: {}]
  %s5 = inlined_call_operand.vmem [shape: f32[1,128], index: 5, kind: input, shape index: {}]
  %s6 = inlined_call_operand.vmem [shape: f32[128,128], index: 6, kind: output, shape index: {}]
  %s7 = sld [smem:[#allocation0]]
  $region57: #{rcnn_forward.1} parent=0
    _
  %s9 = ssub.s32 1, %s7
  %s10 = scalar_select 0, %s9, %s7
  loop: start=0, step=1, limit=4
  $region2: #{rcnn_forward.1} parent=0 // loop_pre_header
    _
  $region3: #{rcnn_forward.1} parent=0 // loop_header
    %s12 = sphi 0, %s16
    %p13 = scmp.ge.s32.totalorder %s12, 4
    %s22 = sphi 0, %s24
    %s25 = sphi 0, %s22
    %s26 = sphi 0, %s25
    %s42 = sphi 0, %s26
    %s48 = sphi 0, %s50
    %s51 = sphi 0, %s48
    %s52 = sphi 0, %s51
    %s68 = sphi 0, %s52
    %s72 = sphi 0, %s72
    %s74 = sphi 0, %s72
    %s75 = sphi 0, %s74
    %s89 = sphi 0, %s75
    %s93 = sphi 0, %s93
    %s95 = sphi 0, %s93
    %s96 = sphi 0, %s95
    %s110 = sphi 0, %s96
    %s114 = sphi 0, %s114
    %s116 = sphi 0, %s114
    %s117 = sphi 0, %s116
    %s131 = sphi 0, %s117
    %s135 = sphi 0, %s135
    %s137 = sphi 0, %s135
    %s138 = sphi 0, %s137
    %s152 = sphi 0, %s138
    %s158 = sphi 0, %s160
    %s161 = sphi 0, %s158
    %s162 = sphi 0, %s161
    %s178 = sphi 0, %s162
  $region4: #{rcnn_forward.1} parent=0 // loop_header_branch
    %15 = sbr.rel (%p13) target = $region8
  $region5: #{rcnn_forward.1} parent=0 // loop_body
    %s17 = ssub.s32 %s12, 1
    %s18 = ssub.s32 %s12, 2
    %s19 = sadd.s32 %s12, 1
    %s20 = ssub.s32 %s12, %s19
    %p21 = scmp.eq.s32.totalorder %s20, 0
    %s23 = sadd.s32 %s22, 1
    %s24 = scalar_select %p21, %s22, %s23
    %p27 = pneg %p21
    %p28 = scmp.eq.s32.totalorder %s12, 1
    %p29 = por %p27, %p28
    %p30 = scmp.ne.s32.totalorder %s22, %s25
    %p31 = scmp.eq.s32.totalorder %s12, 0
    %p32 = por %p30, %p31
    %p33 = scmp.ne.s32.totalorder %s22, %s25
    %p34 = scmp.eq.s32.totalorder %s17, 1
    %p35 = por %p33, %p34
    %p36 = scmp.ne.s32.totalorder %s25, %s26
    %p37 = scmp.eq.s32.totalorder %s17, 0
    %p38 = por %p36, %p37
    %p39 = scmp.ne.s32.totalorder %s25, %s26
    %p40 = scmp.eq.s32.totalorder %s18, 1
    %p41 = por %p39, %p40
    %p43 = scmp.ne.s32.totalorder %s26, %s42
    %p44 = scmp.eq.s32.totalorder %s18, 0
    %p45 = por %p43, %p44
    %s46 = ssub.s32 %s12, %s19
    %p47 = scmp.eq.s32.totalorder %s46, 0
    %s49 = sadd.s32 %s48, 1
    %s50 = scalar_select %p47, %s48, %s49
    %p53 = pneg %p47
    %p54 = scmp.eq.s32.totalorder %s12, 1
    %p55 = por %p53, %p54
    %p56 = scmp.ne.s32.totalorder %s48, %s51
    %p57 = scmp.eq.s32.totalorder %s12, 0
    %p58 = por %p56, %p57
    %p59 = scmp.ne.s32.totalorder %s48, %s51
    %p60 = scmp.eq.s32.totalorder %s17, 1
    %p61 = por %p59, %p60
    %p62 = scmp.ne.s32.totalorder %s51, %s52
    %p63 = scmp.eq.s32.totalorder %s17, 0
    %p64 = por %p62, %p63
    %p65 = scmp.ne.s32.totalorder %s51, %s52
    %p66 = scmp.eq.s32.totalorder %s18, 1
    %p67 = por %p65, %p66
    %p69 = scmp.ne.s32.totalorder %s52, %s68
    %p70 = scmp.eq.s32.totalorder %s18, 0
    %p71 = por %p69, %p70
    %s73 = sadd.s32 %s72, 1
    %p76 = scmp.eq.s32.totalorder %s12, 1
    %p77 = scmp.ne.s32.totalorder %s72, %s74
    %p78 = scmp.eq.s32.totalorder %s12, 0
    %p79 = por %p77, %p78
    %p80 = scmp.ne.s32.totalorder %s72, %s74
    %p81 = scmp.eq.s32.totalorder %s17, 1
    %p82 = por %p80, %p81
    %p83 = scmp.ne.s32.totalorder %s74, %s75
    %p84 = scmp.eq.s32.totalorder %s17, 0
    %p85 = por %p83, %p84
    %p86 = scmp.ne.s32.totalorder %s74, %s75
    %p87 = scmp.eq.s32.totalorder %s18, 1
    %p88 = por %p86, %p87
    %p90 = scmp.ne.s32.totalorder %s75, %s89
    %p91 = scmp.eq.s32.totalorder %s18, 0
    %p92 = por %p90, %p91
    %s94 = sadd.s32 %s93, 1
    %p97 = scmp.eq.s32.totalorder %s12, 1
    %p98 = scmp.ne.s32.totalorder %s93, %s95
    %p99 = scmp.eq.s32.totalorder %s12, 0
    %p100 = por %p98, %p99
    %p101 = scmp.ne.s32.totalorder %s93, %s95
    %p102 = scmp.eq.s32.totalorder %s17, 1
    %p103 = por %p101, %p102
    %p104 = scmp.ne.s32.totalorder %s95, %s96
    %p105 = scmp.eq.s32.totalorder %s17, 0
    %p106 = por %p104, %p105
    %p107 = scmp.ne.s32.totalorder %s95, %s96
    %p108 = scmp.eq.s32.totalorder %s18, 1
    %p109 = por %p107, %p108
    %p111 = scmp.ne.s32.totalorder %s96, %s110
    %p112 = scmp.eq.s32.totalorder %s18, 0
    %p113 = por %p111, %p112
    %s115 = sadd.s32 %s114, 1
    %p118 = scmp.eq.s32.totalorder %s12, 1
    %p119 = scmp.ne.s32.totalorder %s114, %s116
    %p120 = scmp.eq.s32.totalorder %s12, 0
    %p121 = por %p119, %p120
    %p122 = scmp.ne.s32.totalorder %s114, %s116
    %p123 = scmp.eq.s32.totalorder %s17, 1
    %p124 = por %p122, %p123
    %p125 = scmp.ne.s32.totalorder %s116, %s117
    %p126 = scmp.eq.s32.totalorder %s17, 0
    %p127 = por %p125, %p126
    %p128 = scmp.ne.s32.totalorder %s116, %s117
    %p129 = scmp.eq.s32.totalorder %s18, 1
    %p130 = por %p128, %p129
    %p132 = scmp.ne.s32.totalorder %s117, %s131
    %p133 = scmp.eq.s32.totalorder %s18, 0
    %p134 = por %p132, %p133
    %s136 = sadd.s32 %s135, 1
    %p139 = scmp.eq.s32.totalorder %s12, 1
    %p140 = scmp.ne.s32.totalorder %s135, %s137
    %p141 = scmp.eq.s32.totalorder %s12, 0
    %p142 = por %p140, %p141
    %p143 = scmp.ne.s32.totalorder %s135, %s137
    %p144 = scmp.eq.s32.totalorder %s17, 1
    %p145 = por %p143, %p144
    %p146 = scmp.ne.s32.totalorder %s137, %s138
    %p147 = scmp.eq.s32.totalorder %s17, 0
    %p148 = por %p146, %p147
    %p149 = scmp.ne.s32.totalorder %s137, %s138
    %p150 = scmp.eq.s32.totalorder %s18, 1
    %p151 = por %p149, %p150
    %p153 = scmp.ne.s32.totalorder %s138, %s152
    %p154 = scmp.eq.s32.totalorder %s18, 0
    %p155 = por %p153, %p154
    %s156 = ssub.s32 %s12, %s19
    %p157 = scmp.eq.s32.totalorder %s156, 0
    %s159 = sadd.s32 %s158, 1
    %s160 = scalar_select %p157, %s158, %s159
    %p163 = pneg %p157
    %p164 = scmp.eq.s32.totalorder %s12, 1
    %p165 = por %p163, %p164
    %p166 = scmp.ne.s32.totalorder %s158, %s161
    %p167 = scmp.eq.s32.totalorder %s12, 0
    %p168 = por %p166, %p167
    %p169 = scmp.ne.s32.totalorder %s158, %s161
    %p170 = scmp.eq.s32.totalorder %s17, 1
    %p171 = por %p169, %p170
    %p172 = scmp.ne.s32.totalorder %s161, %s162
    %p173 = scmp.eq.s32.totalorder %s17, 0
    %p174 = por %p172, %p173
    %p175 = scmp.ne.s32.totalorder %s161, %s162
    %p176 = scmp.eq.s32.totalorder %s18, 1
    %p177 = por %p175, %p176
    %p179 = scmp.ne.s32.totalorder %s162, %s178
    %p180 = scmp.eq.s32.totalorder %s18, 0
    %p181 = por %p179, %p180
    %p182 = scmp.le.s32.totalorder 1, %s12
    %p183 = scmp.lt.s32.totalorder %s12, 3
    %p184 = pnand %p182, %p183
    %p185 = pneg %p184
    // Predicated region
    $region9: #{rcnn_forward.1} parent=5 // pred_check
      _
    $region10: #{rcnn_forward.1} parent=5 // pred_check_branch
      %187 = sbr.rel (%p184) target = $region12
    $region11: #{rcnn_forward.1} parent=5 // pred_region
      %s188 = ssub.s32 %s12, 1
      // Predicated region
      $region13: #{rcnn_forward.1} parent=11 // pred_check
        %p189 = pneg %p85
      $region14: #{rcnn_forward.1} parent=11 // pred_check_branch
        %191 = sbr.rel (%p189) target = $region16
      $region15: #{rcnn_forward.1} parent=11 // pred_region
        _
      $region16: #{rcnn_forward.1} parent=11 // pred_fallthru
        _
      // Predicated region
      $region17: #{rcnn_forward.1} parent=11 // pred_check
        %p192 = pneg %p106
      $region18: #{rcnn_forward.1} parent=11 // pred_check_branch
        %194 = sbr.rel (%p192) target = $region20
      $region19: #{rcnn_forward.1} parent=11 // pred_region
        _
      $region20: #{rcnn_forward.1} parent=11 // pred_fallthru
        _
      // Predicated region
      $region21: #{rcnn_forward.1} parent=11 // pred_check
        %p195 = pneg %p127
      $region22: #{rcnn_forward.1} parent=11 // pred_check_branch
        %197 = sbr.rel (%p195) target = $region24
      $region23: #{rcnn_forward.1} parent=11 // pred_region
        _
      $region24: #{rcnn_forward.1} parent=11 // pred_fallthru
        _
      // Predicated region
      $region25: #{rcnn_forward.1} parent=11 // pred_check
        %p198 = pneg %p148
      $region26: #{rcnn_forward.1} parent=11 // pred_check_branch
        %200 = sbr.rel (%p198) target = $region28
      $region27: #{rcnn_forward.1} parent=11 // pred_region
        _
      $region28: #{rcnn_forward.1} parent=11 // pred_fallthru
        _
    $region12: #{rcnn_forward.1} parent=5 // pred_fallthru
      _
    %p201 = scmp.lt.s32.totalorder %s12, 2
    // Predicated region
    $region29: #{rcnn_forward.1} parent=5 // pred_check
      %p202 = pneg %p201
    $region30: #{rcnn_forward.1} parent=5 // pred_check_branch
      %204 = sbr.rel (%p202) target = $region32
    $region31: #{rcnn_forward.1} parent=5 // pred_region
      // Predicated region
      $region33: #{rcnn_forward.1} parent=31 // pred_check
        %p205 = pneg %p32
      $region34: #{rcnn_forward.1} parent=31 // pred_check_branch
        %207 = sbr.rel (%p205) target = $region36
      $region35: #{rcnn_forward.1} parent=31 // pred_region
        %s208 = smul.u32 8, %s12
        %p209 = scmp.lt.s32.totalorder %s208, 15
        %s210 = scalar_select %p209, %s208, 15
        %s211 = smul.addr %s210, 4
        %s212 = smul.addr %s211, 4
        %s213 = scalar_lea.vmem %s0, %s212
        %s214 = smul.u32 8, %s12
      $region36: #{rcnn_forward.1} parent=31 // pred_fallthru
        _
      // Predicated region
      $region37: #{rcnn_forward.1} parent=31 // pred_check
        %p215 = pneg %p58
      $region38: #{rcnn_forward.1} parent=31 // pred_check_branch
        %217 = sbr.rel (%p215) target = $region40
      $region39: #{rcnn_forward.1} parent=31 // pred_region
        %s218 = smul.u32 8, %s12
        %p219 = scmp.lt.s32.totalorder %s218, 15
        %s220 = scalar_select %p219, %s218, 15
        %s221 = smul.addr %s220, 4
        %s222 = smul.addr %s221, 4
        %s223 = scalar_lea.vmem %s1, %s222
        %s224 = smul.u32 8, %s12
      $region40: #{rcnn_forward.1} parent=31 // pred_fallthru
        _
    $region32: #{rcnn_forward.1} parent=5 // pred_fallthru
      _
    %p225 = scmp.le.s32.totalorder 1, %s12
    %p226 = scmp.lt.s32.totalorder %s12, 3
    %p227 = pnand %p225, %p226
    %p228 = pneg %p227
    // Predicated region
    $region41: #{rcnn_forward.1} parent=5 // pred_check
      _
    $region42: #{rcnn_forward.1} parent=5 // pred_check_branch
      %230 = sbr.rel (%p227) target = $region44
    $region43: #{rcnn_forward.1} parent=5 // pred_region
      %s231 = ssub.s32 %s12, 1
      %s232 = smul.u32 8, %s17
      %p233 = scmp.lt.s32.totalorder %s232, 15
      %s234 = scalar_select %p233, %s232, 15
      %s235 = smul.addr %s234, 4
      %s236 = smul.addr %s235, 4
      %s237 = scalar_lea.vmem %s0, %s236
      %p238 = pneg %p38
      %p239 = pneg %p35
      %s240 = smul.u32 8, %s17
      %p241 = scmp.lt.s32.totalorder %s240, 15
      %s242 = scalar_select %p241, %s240, 15
      %s243 = smul.addr %s242, 4
      %s244 = smul.addr %s243, 4
      %s245 = scalar_lea.vmem %s1, %s244
      %p246 = pneg %p64
      %p247 = pneg %p61
      %p248 = pneg %p85
      %p249 = pneg %p82
      %p250 = pneg %p106
      %p251 = pneg %p103
      %p252 = pneg %p127
      %p253 = pneg %p124
      %p254 = pneg %p148
      %p255 = pneg %p145
      %p256 = pneg %p174
      %p257 = pneg %p171
      %s258 = smul.u32 8, %s17
      %p259 = scmp.lt.s32.totalorder %s258, 15
      %s260 = scalar_select %p259, %s258, 15
      %s261 = smul.addr %s260, 8
      %s262 = scalar_lea.vmem %s6, %s261
      %s263 = smul.u32 8, %s17
      %p264 = scmp.lt.s32.totalorder %s263, 15
      %s265 = scalar_select %p264, %s263, 15
      %s266 = smul.addr %s265, 4
      %s267 = smul.addr %s266, 4
      %s268 = scalar_lea.vmem %s0, %s267
      %s269 = smul.u32 8, %s17
      %s270 = smul.u32 8, %s17
      %p271 = scmp.lt.s32.totalorder %s270, 15
      %s272 = scalar_select %p271, %s270, 15
      %s273 = smul.addr %s272, 4
      %s274 = smul.addr %s273, 4
      %s275 = scalar_lea.vmem %s1, %s274
      %s276 = smul.u32 8, %s17
      %s277 = smul.u32 8, %s17
      %p278 = scmp.lt.s32.totalorder %s277, 15
      %s279 = scalar_select %p278, %s277, 15
      %s280 = smul.addr %s279, 8
      %s281 = scalar_lea.vmem %s6, %s280
      %s282 = smul.u32 8, %s17
      %v283 = vld [vmem:[%s268] sm:$0xff]
      %v284 = vld [vmem:[%s268 + $0x8] sm:$0xff]
      %v285 = vld [vmem:[%s268 + $0x10] sm:$0xff]
      %v286 = vld [vmem:[%s268 + $0x18] sm:$0xff]
      %v287 = vld [vmem:[%s268 + $0x20] sm:$0xff]
      %v288 = vld [vmem:[%s268 + $0x28] sm:$0xff]
      %v289 = vld [vmem:[%s268 + $0x30] sm:$0xff]
      %v290 = vld [vmem:[%s268 + $0x38] sm:$0xff]
      %v291 = vld [vmem:[%s268 + $0x40] sm:$0xff]
      %v292 = vld [vmem:[%s268 + $0x48] sm:$0xff]
      %v293 = vld [vmem:[%s268 + $0x50] sm:$0xff]
      %v294 = vld [vmem:[%s268 + $0x58] sm:$0xff]
      %v295 = vld [vmem:[%s268 + $0x60] sm:$0xff]
      %v296 = vld [vmem:[%s268 + $0x68] sm:$0xff]
      %v297 = vld [vmem:[%s268 + $0x70] sm:$0xff]
      %v298 = vld [vmem:[%s268 + $0x78] sm:$0xff]
      %v299 = vld [vmem:[%s275] sm:$0xff]
      %v300 = vld [vmem:[%s275 + $0x8] sm:$0xff]
      %v301 = vld [vmem:[%s275 + $0x10] sm:$0xff]
      %v302 = vld [vmem:[%s275 + $0x18] sm:$0xff]
      %v303 = vld [vmem:[%s275 + $0x20] sm:$0xff]
      %v304 = vld [vmem:[%s275 + $0x28] sm:$0xff]
      %v305 = vld [vmem:[%s275 + $0x30] sm:$0xff]
      %v306 = vld [vmem:[%s275 + $0x38] sm:$0xff]
      %v307 = vld [vmem:[%s275 + $0x40] sm:$0xff]
      %v308 = vld [vmem:[%s275 + $0x48] sm:$0xff]
      %v309 = vld [vmem:[%s275 + $0x50] sm:$0xff]
      %v310 = vld [vmem:[%s275 + $0x58] sm:$0xff]
      %v311 = vld [vmem:[%s275 + $0x60] sm:$0xff]
      %v312 = vld [vmem:[%s275 + $0x68] sm:$0xff]
      %v313 = vld [vmem:[%s275 + $0x70] sm:$0xff]
      %v314 = vld [vmem:[%s275 + $0x78] sm:$0xff]
      %v315 = vld [vmem:[%s2] sm:$0xff]
      %v316 = vld [vmem:[%s2 + $0x8] sm:$0xff]
      %v317 = vld [vmem:[%s2 + $0x10] sm:$0xff]
      %v318 = vld [vmem:[%s2 + $0x18] sm:$0xff]
      %v319 = vld [vmem:[%s2 + $0x20] sm:$0xff]
      %v320 = vld [vmem:[%s2 + $0x28] sm:$0xff]
      %v321 = vld [vmem:[%s2 + $0x30] sm:$0xff]
      %v322 = vld [vmem:[%s2 + $0x38] sm:$0xff]
      %v323 = vld [vmem:[%s2 + $0x40] sm:$0xff]
      %v324 = vld [vmem:[%s2 + $0x48] sm:$0xff]
      %v325 = vld [vmem:[%s2 + $0x50] sm:$0xff]
      %v326 = vld [vmem:[%s2 + $0x58] sm:$0xff]
      %v327 = vld [vmem:[%s2 + $0x60] sm:$0xff]
      %v328 = vld [vmem:[%s2 + $0x68] sm:$0xff]
      %v329 = vld [vmem:[%s2 + $0x70] sm:$0xff]
      %v330 = vld [vmem:[%s2 + $0x78] sm:$0xff]
      %v331 = vld [vmem:[%s2 + $0x80] sm:$0xff]
      %v332 = vld [vmem:[%s2 + $0x88] sm:$0xff]
      %v333 = vld [vmem:[%s2 + $0x90] sm:$0xff]
      %v334 = vld [vmem:[%s2 + $0x98] sm:$0xff]
      %v335 = vld [vmem:[%s2 + $0xa0] sm:$0xff]
      %v336 = vld [vmem:[%s2 + $0xa8] sm:$0xff]
      %v337 = vld [vmem:[%s2 + $0xb0] sm:$0xff]
      %v338 = vld [vmem:[%s2 + $0xb8] sm:$0xff]
      %v339 = vld [vmem:[%s2 + $0xc0] sm:$0xff]
      %v340 = vld [vmem:[%s2 + $0xc8] sm:$0xff]
      %v341 = vld [vmem:[%s2 + $0xd0] sm:$0xff]
      %v342 = vld [vmem:[%s2 + $0xd8] sm:$0xff]
      %v343 = vld [vmem:[%s2 + $0xe0] sm:$0xff]
      %v344 = vld [vmem:[%s2 + $0xe8] sm:$0xff]
      %v345 = vld [vmem:[%s2 + $0xf0] sm:$0xff]
      %v346 = vld [vmem:[%s2 + $0xf8] sm:$0xff]
      %v347 = vld [vmem:[%s2 + $0x100] sm:$0xff]
      %v348 = vld [vmem:[%s2 + $0x108] sm:$0xff]
      %v349 = vld [vmem:[%s2 + $0x110] sm:$0xff]
      %v350 = vld [vmem:[%s2 + $0x118] sm:$0xff]
      %v351 = vld [vmem:[%s2 + $0x120] sm:$0xff]
      %v352 = vld [vmem:[%s2 + $0x128] sm:$0xff]
      %v353 = vld [vmem:[%s2 + $0x130] sm:$0xff]
      %v354 = vld [vmem:[%s2 + $0x138] sm:$0xff]
      %v355 = vld [vmem:[%s2 + $0x140] sm:$0xff]
      %v356 = vld [vmem:[%s2 + $0x148] sm:$0xff]
      %v357 = vld [vmem:[%s2 + $0x150] sm:$0xff]
      %v358 = vld [vmem:[%s2 + $0x158] sm:$0xff]
      %v359 = vld [vmem:[%s2 + $0x160] sm:$0xff]
      %v360 = vld [vmem:[%s2 + $0x168] sm:$0xff]
      %v361 = vld [vmem:[%s2 + $0x170] sm:$0xff]
      %v362 = vld [vmem:[%s2 + $0x178] sm:$0xff]
      %v363 = vld [vmem:[%s2 + $0x180] sm:$0xff]
      %v364 = vld [vmem:[%s2 + $0x188] sm:$0xff]
      %v365 = vld [vmem:[%s2 + $0x190] sm:$0xff]
      %v366 = vld [vmem:[%s2 + $0x198] sm:$0xff]
      %v367 = vld [vmem:[%s2 + $0x1a0] sm:$0xff]
      %v368 = vld [vmem:[%s2 + $0x1a8] sm:$0xff]
      %v369 = vld [vmem:[%s2 + $0x1b0] sm:$0xff]
      %v370 = vld [vmem:[%s2 + $0x1b8] sm:$0xff]
      %v371 = vld [vmem:[%s2 + $0x1c0] sm:$0xff]
      %v372 = vld [vmem:[%s2 + $0x1c8] sm:$0xff]
      %v373 = vld [vmem:[%s2 + $0x1d0] sm:$0xff]
      %v374 = vld [vmem:[%s2 + $0x1d8] sm:$0xff]
      %v375 = vld [vmem:[%s2 + $0x1e0] sm:$0xff]
      %v376 = vld [vmem:[%s2 + $0x1e8] sm:$0xff]
      %v377 = vld [vmem:[%s2 + $0x1f0] sm:$0xff]
      %v378 = vld [vmem:[%s2 + $0x1f8] sm:$0xff]
      %v379 = vld [vmem:[%s2 + $0x200] sm:$0xff]
      %v380 = vld [vmem:[%s2 + $0x208] sm:$0xff]
      %v381 = vld [vmem:[%s2 + $0x210] sm:$0xff]
      %v382 = vld [vmem:[%s2 + $0x218] sm:$0xff]
      %v383 = vld [vmem:[%s2 + $0x220] sm:$0xff]
      %v384 = vld [vmem:[%s2 + $0x228] sm:$0xff]
      %v385 = vld [vmem:[%s2 + $0x230] sm:$0xff]
      %v386 = vld [vmem:[%s2 + $0x238] sm:$0xff]
      %v387 = vld [vmem:[%s2 + $0x240] sm:$0xff]
      %v388 = vld [vmem:[%s2 + $0x248] sm:$0xff]
      %v389 = vld [vmem:[%s2 + $0x250] sm:$0xff]
      %v390 = vld [vmem:[%s2 + $0x258] sm:$0xff]
      %v391 = vld [vmem:[%s2 + $0x260] sm:$0xff]
      %v392 = vld [vmem:[%s2 + $0x268] sm:$0xff]
      %v393 = vld [vmem:[%s2 + $0x270] sm:$0xff]
      %v394 = vld [vmem:[%s2 + $0x278] sm:$0xff]
      %v395 = vld [vmem:[%s2 + $0x280] sm:$0xff]
      %v396 = vld [vmem:[%s2 + $0x288] sm:$0xff]
      %v397 = vld [vmem:[%s2 + $0x290] sm:$0xff]
      %v398 = vld [vmem:[%s2 + $0x298] sm:$0xff]
      %v399 = vld [vmem:[%s2 + $0x2a0] sm:$0xff]
      %v400 = vld [vmem:[%s2 + $0x2a8] sm:$0xff]
      %v401 = vld [vmem:[%s2 + $0x2b0] sm:$0xff]
      %v402 = vld [vmem:[%s2 + $0x2b8] sm:$0xff]
      %v403 = vld [vmem:[%s2 + $0x2c0] sm:$0xff]
      %v404 = vld [vmem:[%s2 + $0x2c8] sm:$0xff]
      %v405 = vld [vmem:[%s2 + $0x2d0] sm:$0xff]
      %v406 = vld [vmem:[%s2 + $0x2d8] sm:$0xff]
      %v407 = vld [vmem:[%s2 + $0x2e0] sm:$0xff]
      %v408 = vld [vmem:[%s2 + $0x2e8] sm:$0xff]
      %v409 = vld [vmem:[%s2 + $0x2f0] sm:$0xff]
      %v410 = vld [vmem:[%s2 + $0x2f8] sm:$0xff]
      %v411 = vld [vmem:[%s2 + $0x300] sm:$0xff]
      %v412 = vld [vmem:[%s2 + $0x308] sm:$0xff]
      %v413 = vld [vmem:[%s2 + $0x310] sm:$0xff]
      %v414 = vld [vmem:[%s2 + $0x318] sm:$0xff]
      %v415 = vld [vmem:[%s2 + $0x320] sm:$0xff]
      %v416 = vld [vmem:[%s2 + $0x328] sm:$0xff]
      %v417 = vld [vmem:[%s2 + $0x330] sm:$0xff]
      %v418 = vld [vmem:[%s2 + $0x338] sm:$0xff]
      %v419 = vld [vmem:[%s2 + $0x340] sm:$0xff]
      %v420 = vld [vmem:[%s2 + $0x348] sm:$0xff]
      %v421 = vld [vmem:[%s2 + $0x350] sm:$0xff]
      %v422 = vld [vmem:[%s2 + $0x358] sm:$0xff]
      %v423 = vld [vmem:[%s2 + $0x360] sm:$0xff]
      %v424 = vld [vmem:[%s2 + $0x368] sm:$0xff]
      %v425 = vld [vmem:[%s2 + $0x370] sm:$0xff]
      %v426 = vld [vmem:[%s2 + $0x378] sm:$0xff]
      %v427 = vld [vmem:[%s2 + $0x380] sm:$0xff]
      %v428 = vld [vmem:[%s2 + $0x388] sm:$0xff]
      %v429 = vld [vmem:[%s2 + $0x390] sm:$0xff]
      %v430 = vld [vmem:[%s2 + $0x398] sm:$0xff]
      %v431 = vld [vmem:[%s2 + $0x3a0] sm:$0xff]
      %v432 = vld [vmem:[%s2 + $0x3a8] sm:$0xff]
      %v433 = vld [vmem:[%s2 + $0x3b0] sm:$0xff]
      %v434 = vld [vmem:[%s2 + $0x3b8] sm:$0xff]
      %v435 = vld [vmem:[%s2 + $0x3c0] sm:$0xff]
      %v436 = vld [vmem:[%s2 + $0x3c8] sm:$0xff]
      %v437 = vld [vmem:[%s2 + $0x3d0] sm:$0xff]
      %v438 = vld [vmem:[%s2 + $0x3d8] sm:$0xff]
      %v439 = vld [vmem:[%s2 + $0x3e0] sm:$0xff]
      %v440 = vld [vmem:[%s2 + $0x3e8] sm:$0xff]
      %v441 = vld [vmem:[%s2 + $0x3f0] sm:$0xff]
      %v442 = vld [vmem:[%s2 + $0x3f8] sm:$0xff]
      %v443 = vld [vmem:[%s2 + $0x800] sm:$0xff]
      %v444 = vld [vmem:[%s2 + $0x808] sm:$0xff]
      %v445 = vld [vmem:[%s2 + $0x810] sm:$0xff]
      %v446 = vld [vmem:[%s2 + $0x818] sm:$0xff]
      %v447 = vld [vmem:[%s2 + $0x820] sm:$0xff]
      %v448 = vld [vmem:[%s2 + $0x828] sm:$0xff]
      %v449 = vld [vmem:[%s2 + $0x830] sm:$0xff]
      %v450 = vld [vmem:[%s2 + $0x838] sm:$0xff]
      %v451 = vld [vmem:[%s2 + $0x840] sm:$0xff]
      %v452 = vld [vmem:[%s2 + $0x848] sm:$0xff]
      %v453 = vld [vmem:[%s2 + $0x850] sm:$0xff]
      %v454 = vld [vmem:[%s2 + $0x858] sm:$0xff]
      %v455 = vld [vmem:[%s2 + $0x860] sm:$0xff]
      %v456 = vld [vmem:[%s2 + $0x868] sm:$0xff]
      %v457 = vld [vmem:[%s2 + $0x870] sm:$0xff]
      %v458 = vld [vmem:[%s2 + $0x878] sm:$0xff]
      %v459 = vld [vmem:[%s2 + $0x880] sm:$0xff]
      %v460 = vld [vmem:[%s2 + $0x888] sm:$0xff]
      %v461 = vld [vmem:[%s2 + $0x890] sm:$0xff]
      %v462 = vld [vmem:[%s2 + $0x898] sm:$0xff]
      %v463 = vld [vmem:[%s2 + $0x8a0] sm:$0xff]
      %v464 = vld [vmem:[%s2 + $0x8a8] sm:$0xff]
      %v465 = vld [vmem:[%s2 + $0x8b0] sm:$0xff]
      %v466 = vld [vmem:[%s2 + $0x8b8] sm:$0xff]
      %v467 = vld [vmem:[%s2 + $0x8c0] sm:$0xff]
      %v468 = vld [vmem:[%s2 + $0x8c8] sm:$0xff]
      %v469 = vld [vmem:[%s2 + $0x8d0] sm:$0xff]
      %v470 = vld [vmem:[%s2 + $0x8d8] sm:$0xff]
      %v471 = vld [vmem:[%s2 + $0x8e0] sm:$0xff]
      %v472 = vld [vmem:[%s2 + $0x8e8] sm:$0xff]
      %v473 = vld [vmem:[%s2 + $0x8f0] sm:$0xff]
      %v474 = vld [vmem:[%s2 + $0x8f8] sm:$0xff]
      %v475 = vld [vmem:[%s2 + $0x900] sm:$0xff]
      %v476 = vld [vmem:[%s2 + $0x908] sm:$0xff]
      %v477 = vld [vmem:[%s2 + $0x910] sm:$0xff]
      %v478 = vld [vmem:[%s2 + $0x918] sm:$0xff]
      %v479 = vld [vmem:[%s2 + $0x920] sm:$0xff]
      %v480 = vld [vmem:[%s2 + $0x928] sm:$0xff]
      %v481 = vld [vmem:[%s2 + $0x930] sm:$0xff]
      %v482 = vld [vmem:[%s2 + $0x938] sm:$0xff]
      %v483 = vld [vmem:[%s2 + $0x940] sm:$0xff]
      %v484 = vld [vmem:[%s2 + $0x948] sm:$0xff]
      %v485 = vld [vmem:[%s2 + $0x950] sm:$0xff]
      %v486 = vld [vmem:[%s2 + $0x958] sm:$0xff]
      %v487 = vld [vmem:[%s2 + $0x960] sm:$0xff]
      %v488 = vld [vmem:[%s2 + $0x968] sm:$0xff]
      %v489 = vld [vmem:[%s2 + $0x970] sm:$0xff]
      %v490 = vld [vmem:[%s2 + $0x978] sm:$0xff]
      %v491 = vld [vmem:[%s2 + $0x980] sm:$0xff]
      %v492 = vld [vmem:[%s2 + $0x988] sm:$0xff]
      %v493 = vld [vmem:[%s2 + $0x990] sm:$0xff]
      %v494 = vld [vmem:[%s2 + $0x998] sm:$0xff]
      %v495 = vld [vmem:[%s2 + $0x9a0] sm:$0xff]
      %v496 = vld [vmem:[%s2 + $0x9a8] sm:$0xff]
      %v497 = vld [vmem:[%s2 + $0x9b0] sm:$0xff]
      %v498 = vld [vmem:[%s2 + $0x9b8] sm:$0xff]
      %v499 = vld [vmem:[%s2 + $0x9c0] sm:$0xff]
      %v500 = vld [vmem:[%s2 + $0x9c8] sm:$0xff]
      %v501 = vld [vmem:[%s2 + $0x9d0] sm:$0xff]
      %v502 = vld [vmem:[%s2 + $0x9d8] sm:$0xff]
      %v503 = vld [vmem:[%s2 + $0x9e0] sm:$0xff]
      %v504 = vld [vmem:[%s2 + $0x9e8] sm:$0xff]
      %v505 = vld [vmem:[%s2 + $0x9f0] sm:$0xff]
      %v506 = vld [vmem:[%s2 + $0x9f8] sm:$0xff]
      %v507 = vld [vmem:[%s2 + $0xa00] sm:$0xff]
      %v508 = vld [vmem:[%s2 + $0xa08] sm:$0xff]
      %v509 = vld [vmem:[%s2 + $0xa10] sm:$0xff]
      %v510 = vld [vmem:[%s2 + $0xa18] sm:$0xff]
      %v511 = vld [vmem:[%s2 + $0xa20] sm:$0xff]
      %v512 = vld [vmem:[%s2 + $0xa28] sm:$0xff]
      %v513 = vld [vmem:[%s2 + $0xa30] sm:$0xff]
      %v514 = vld [vmem:[%s2 + $0xa38] sm:$0xff]
      %v515 = vld [vmem:[%s2 + $0xa40] sm:$0xff]
      %v516 = vld [vmem:[%s2 + $0xa48] sm:$0xff]
      %v517 = vld [vmem:[%s2 + $0xa50] sm:$0xff]
      %v518 = vld [vmem:[%s2 + $0xa58] sm:$0xff]
      %v519 = vld [vmem:[%s2 + $0xa60] sm:$0xff]
      %v520 = vld [vmem:[%s2 + $0xa68] sm:$0xff]
      %v521 = vld [vmem:[%s2 + $0xa70] sm:$0xff]
      %v522 = vld [vmem:[%s2 + $0xa78] sm:$0xff]
      %v523 = vld [vmem:[%s2 + $0xa80] sm:$0xff]
      %v524 = vld [vmem:[%s2 + $0xa88] sm:$0xff]
      %v525 = vld [vmem:[%s2 + $0xa90] sm:$0xff]
      %v526 = vld [vmem:[%s2 + $0xa98] sm:$0xff]
      %v527 = vld [vmem:[%s2 + $0xaa0] sm:$0xff]
      %v528 = vld [vmem:[%s2 + $0xaa8] sm:$0xff]
      %v529 = vld [vmem:[%s2 + $0xab0] sm:$0xff]
      %v530 = vld [vmem:[%s2 + $0xab8] sm:$0xff]
      %v531 = vld [vmem:[%s2 + $0xac0] sm:$0xff]
      %v532 = vld [vmem:[%s2 + $0xac8] sm:$0xff]
      %v533 = vld [vmem:[%s2 + $0xad0] sm:$0xff]
      %v534 = vld [vmem:[%s2 + $0xad8] sm:$0xff]
      %v535 = vld [vmem:[%s2 + $0xae0] sm:$0xff]
      %v536 = vld [vmem:[%s2 + $0xae8] sm:$0xff]
      %v537 = vld [vmem:[%s2 + $0xaf0] sm:$0xff]
      %v538 = vld [vmem:[%s2 + $0xaf8] sm:$0xff]
      %v539 = vld [vmem:[%s2 + $0xb00] sm:$0xff]
      %v540 = vld [vmem:[%s2 + $0xb08] sm:$0xff]
      %v541 = vld [vmem:[%s2 + $0xb10] sm:$0xff]
      %v542 = vld [vmem:[%s2 + $0xb18] sm:$0xff]
      %v543 = vld [vmem:[%s2 + $0xb20] sm:$0xff]
      %v544 = vld [vmem:[%s2 + $0xb28] sm:$0xff]
      %v545 = vld [vmem:[%s2 + $0xb30] sm:$0xff]
      %v546 = vld [vmem:[%s2 + $0xb38] sm:$0xff]
      %v547 = vld [vmem:[%s2 + $0xb40] sm:$0xff]
      %v548 = vld [vmem:[%s2 + $0xb48] sm:$0xff]
      %v549 = vld [vmem:[%s2 + $0xb50] sm:$0xff]
      %v550 = vld [vmem:[%s2 + $0xb58] sm:$0xff]
      %v551 = vld [vmem:[%s2 + $0xb60] sm:$0xff]
      %v552 = vld [vmem:[%s2 + $0xb68] sm:$0xff]
      %v553 = vld [vmem:[%s2 + $0xb70] sm:$0xff]
      %v554 = vld [vmem:[%s2 + $0xb78] sm:$0xff]
      %v555 = vld [vmem:[%s2 + $0xb80] sm:$0xff]
      %v556 = vld [vmem:[%s2 + $0xb88] sm:$0xff]
      %v557 = vld [vmem:[%s2 + $0xb90] sm:$0xff]
      %v558 = vld [vmem:[%s2 + $0xb98] sm:$0xff]
      %v559 = vld [vmem:[%s2 + $0xba0] sm:$0xff]
      %v560 = vld [vmem:[%s2 + $0xba8] sm:$0xff]
      %v561 = vld [vmem:[%s2 + $0xbb0] sm:$0xff]
      %v562 = vld [vmem:[%s2 + $0xbb8] sm:$0xff]
      %v563 = vld [vmem:[%s2 + $0xbc0] sm:$0xff]
      %v564 = vld [vmem:[%s2 + $0xbc8] sm:$0xff]
      %v565 = vld [vmem:[%s2 + $0xbd0] sm:$0xff]
      %v566 = vld [vmem:[%s2 + $0xbd8] sm:$0xff]
      %v567 = vld [vmem:[%s2 + $0xbe0] sm:$0xff]
      %v568 = vld [vmem:[%s2 + $0xbe8] sm:$0xff]
      %v569 = vld [vmem:[%s2 + $0xbf0] sm:$0xff]
      %v570 = vld [vmem:[%s2 + $0xbf8] sm:$0xff]
      %v587 = vunpack.c.l.b16 %v299
      %v588 = vunpack.c.h.b16 %v299
      %v589 = vunpack.c.l.b16 %v300
      %v590 = vunpack.c.h.b16 %v300
      %v591 = vunpack.c.l.b16 %v301
      %v592 = vunpack.c.h.b16 %v301
      %v593 = vunpack.c.l.b16 %v302
      %v594 = vunpack.c.h.b16 %v302
      %v595 = vunpack.c.l.b16 %v303
      %v596 = vunpack.c.h.b16 %v303
      %v597 = vunpack.c.l.b16 %v304
      %v598 = vunpack.c.h.b16 %v304
      %v599 = vunpack.c.l.b16 %v305
      %v600 = vunpack.c.h.b16 %v305
      %v601 = vunpack.c.l.b16 %v306
      %v602 = vunpack.c.h.b16 %v306
      %v603 = vunpack.c.l.b16 %v307
      %v604 = vunpack.c.h.b16 %v307
      %v605 = vunpack.c.l.b16 %v308
      %v606 = vunpack.c.h.b16 %v308
      %v607 = vunpack.c.l.b16 %v309
      %v608 = vunpack.c.h.b16 %v309
      %v609 = vunpack.c.l.b16 %v310
      %v610 = vunpack.c.h.b16 %v310
      %v611 = vunpack.c.l.b16 %v311
      %v612 = vunpack.c.h.b16 %v311
      %v613 = vunpack.c.l.b16 %v312
      %v614 = vunpack.c.h.b16 %v312
      %v615 = vunpack.c.l.b16 %v313
      %v616 = vunpack.c.h.b16 %v313
      %v617 = vunpack.c.l.b16 %v314
      %v618 = vunpack.c.h.b16 %v314
      %v619 = vpack.c.b16 %v591, %v587
      %v620 = vpack.c.b16 %v592, %v588
      %v621 = vpack.c.b16 %v593, %v589
      %v622 = vpack.c.b16 %v594, %v590
      %v623 = vpack.c.b16 %v599, %v595
      %v624 = vpack.c.b16 %v600, %v596
      %v625 = vpack.c.b16 %v601, %v597
      %v626 = vpack.c.b16 %v602, %v598
      %v627 = vpack.c.b16 %v607, %v603
      %v628 = vpack.c.b16 %v608, %v604
      %v629 = vpack.c.b16 %v609, %v605
      %v630 = vpack.c.b16 %v610, %v606
      %v631 = vpack.c.b16 %v615, %v611
      %v632 = vpack.c.b16 %v616, %v612
      %v633 = vpack.c.b16 %v617, %v613
      %v634 = vpack.c.b16 %v618, %v614
      %v779 = vunpack.c.l.b16 %v443
      %v780 = vunpack.c.h.b16 %v443
      %v781 = vunpack.c.l.b16 %v444
      %v782 = vunpack.c.h.b16 %v444
      %v783 = vunpack.c.l.b16 %v445
      %v784 = vunpack.c.h.b16 %v445
      %v785 = vunpack.c.l.b16 %v446
      %v786 = vunpack.c.h.b16 %v446
      %v787 = vunpack.c.l.b16 %v447
      %v788 = vunpack.c.h.b16 %v447
      %v789 = vunpack.c.l.b16 %v448
      %v790 = vunpack.c.h.b16 %v448
      %v791 = vunpack.c.l.b16 %v449
      %v792 = vunpack.c.h.b16 %v449
      %v793 = vunpack.c.l.b16 %v450
      %v794 = vunpack.c.h.b16 %v450
      %v795 = vunpack.c.l.b16 %v451
      %v796 = vunpack.c.h.b16 %v451
      %v797 = vunpack.c.l.b16 %v452
      %v798 = vunpack.c.h.b16 %v452
      %v799 = vunpack.c.l.b16 %v453
      %v800 = vunpack.c.h.b16 %v453
      %v801 = vunpack.c.l.b16 %v454
      %v802 = vunpack.c.h.b16 %v454
      %v803 = vunpack.c.l.b16 %v455
      %v804 = vunpack.c.h.b16 %v455
      %v805 = vunpack.c.l.b16 %v456
      %v806 = vunpack.c.h.b16 %v456
      %v807 = vunpack.c.l.b16 %v457
      %v808 = vunpack.c.h.b16 %v457
      %v809 = vunpack.c.l.b16 %v458
      %v810 = vunpack.c.h.b16 %v458
      %v811 = vunpack.c.l.b16 %v459
      %v812 = vunpack.c.h.b16 %v459
      %v813 = vunpack.c.l.b16 %v460
      %v814 = vunpack.c.h.b16 %v460
      %v815 = vunpack.c.l.b16 %v461
      %v816 = vunpack.c.h.b16 %v461
      %v817 = vunpack.c.l.b16 %v462
      %v818 = vunpack.c.h.b16 %v462
      %v819 = vunpack.c.l.b16 %v463
      %v820 = vunpack.c.h.b16 %v463
      %v821 = vunpack.c.l.b16 %v464
      %v822 = vunpack.c.h.b16 %v464
      %v823 = vunpack.c.l.b16 %v465
      %v824 = vunpack.c.h.b16 %v465
      %v825 = vunpack.c.l.b16 %v466
      %v826 = vunpack.c.h.b16 %v466
      %v827 = vunpack.c.l.b16 %v467
      %v828 = vunpack.c.h.b16 %v467
      %v829 = vunpack.c.l.b16 %v468
      %v830 = vunpack.c.h.b16 %v468
      %v831 = vunpack.c.l.b16 %v469
      %v832 = vunpack.c.h.b16 %v469
      %v833 = vunpack.c.l.b16 %v470
      %v834 = vunpack.c.h.b16 %v470
      %v835 = vunpack.c.l.b16 %v471
      %v836 = vunpack.c.h.b16 %v471
      %v837 = vunpack.c.l.b16 %v472
      %v838 = vunpack.c.h.b16 %v472
      %v839 = vunpack.c.l.b16 %v473
      %v840 = vunpack.c.h.b16 %v473
      %v841 = vunpack.c.l.b16 %v474
      %v842 = vunpack.c.h.b16 %v474
      %v843 = vunpack.c.l.b16 %v475
      %v844 = vunpack.c.h.b16 %v475
      %v845 = vunpack.c.l.b16 %v476
      %v846 = vunpack.c.h.b16 %v476
      %v847 = vunpack.c.l.b16 %v477
      %v848 = vunpack.c.h.b16 %v477
      %v849 = vunpack.c.l.b16 %v478
      %v850 = vunpack.c.h.b16 %v478
      %v851 = vunpack.c.l.b16 %v479
      %v852 = vunpack.c.h.b16 %v479
      %v853 = vunpack.c.l.b16 %v480
      %v854 = vunpack.c.h.b16 %v480
      %v855 = vunpack.c.l.b16 %v481
      %v856 = vunpack.c.h.b16 %v481
      %v857 = vunpack.c.l.b16 %v482
      %v858 = vunpack.c.h.b16 %v482
      %v859 = vunpack.c.l.b16 %v483
      %v860 = vunpack.c.h.b16 %v483
      %v861 = vunpack.c.l.b16 %v484
      %v862 = vunpack.c.h.b16 %v484
      %v863 = vunpack.c.l.b16 %v485
      %v864 = vunpack.c.h.b16 %v485
      %v865 = vunpack.c.l.b16 %v486
      %v866 = vunpack.c.h.b16 %v486
      %v867 = vunpack.c.l.b16 %v487
      %v868 = vunpack.c.h.b16 %v487
      %v869 = vunpack.c.l.b16 %v488
      %v870 = vunpack.c.h.b16 %v488
      %v871 = vunpack.c.l.b16 %v489
      %v872 = vunpack.c.h.b16 %v489
      %v873 = vunpack.c.l.b16 %v490
      %v874 = vunpack.c.h.b16 %v490
      %v875 = vunpack.c.l.b16 %v491
      %v876 = vunpack.c.h.b16 %v491
      %v877 = vunpack.c.l.b16 %v492
      %v878 = vunpack.c.h.b16 %v492
      %v879 = vunpack.c.l.b16 %v493
      %v880 = vunpack.c.h.b16 %v493
      %v881 = vunpack.c.l.b16 %v494
      %v882 = vunpack.c.h.b16 %v494
      %v883 = vunpack.c.l.b16 %v495
      %v884 = vunpack.c.h.b16 %v495
      %v885 = vunpack.c.l.b16 %v496
      %v886 = vunpack.c.h.b16 %v496
      %v887 = vunpack.c.l.b16 %v497
      %v888 = vunpack.c.h.b16 %v497
      %v889 = vunpack.c.l.b16 %v498
      %v890 = vunpack.c.h.b16 %v498
      %v891 = vunpack.c.l.b16 %v499
      %v892 = vunpack.c.h.b16 %v499
      %v893 = vunpack.c.l.b16 %v500
      %v894 = vunpack.c.h.b16 %v500
      %v895 = vunpack.c.l.b16 %v501
      %v896 = vunpack.c.h.b16 %v501
      %v897 = vunpack.c.l.b16 %v502
      %v898 = vunpack.c.h.b16 %v502
      %v899 = vunpack.c.l.b16 %v503
      %v900 = vunpack.c.h.b16 %v503
      %v901 = vunpack.c.l.b16 %v504
      %v902 = vunpack.c.h.b16 %v504
      %v903 = vunpack.c.l.b16 %v505
      %v904 = vunpack.c.h.b16 %v505
      %v905 = vunpack.c.l.b16 %v506
      %v906 = vunpack.c.h.b16 %v506
      %v907 = vunpack.c.l.b16 %v507
      %v908 = vunpack.c.h.b16 %v507
      %v909 = vunpack.c.l.b16 %v508
      %v910 = vunpack.c.h.b16 %v508
      %v911 = vunpack.c.l.b16 %v509
      %v912 = vunpack.c.h.b16 %v509
      %v913 = vunpack.c.l.b16 %v510
      %v914 = vunpack.c.h.b16 %v510
      %v915 = vunpack.c.l.b16 %v511
      %v916 = vunpack.c.h.b16 %v511
      %v917 = vunpack.c.l.b16 %v512
      %v918 = vunpack.c.h.b16 %v512
      %v919 = vunpack.c.l.b16 %v513
      %v920 = vunpack.c.h.b16 %v513
      %v921 = vunpack.c.l.b16 %v514
      %v922 = vunpack.c.h.b16 %v514
      %v923 = vunpack.c.l.b16 %v515
      %v924 = vunpack.c.h.b16 %v515
      %v925 = vunpack.c.l.b16 %v516
      %v926 = vunpack.c.h.b16 %v516
      %v927 = vunpack.c.l.b16 %v517
      %v928 = vunpack.c.h.b16 %v517
      %v929 = vunpack.c.l.b16 %v518
      %v930 = vunpack.c.h.b16 %v518
      %v931 = vunpack.c.l.b16 %v519
      %v932 = vunpack.c.h.b16 %v519
      %v933 = vunpack.c.l.b16 %v520
      %v934 = vunpack.c.h.b16 %v520
      %v935 = vunpack.c.l.b16 %v521
      %v936 = vunpack.c.h.b16 %v521
      %v937 = vunpack.c.l.b16 %v522
      %v938 = vunpack.c.h.b16 %v522
      %v939 = vunpack.c.l.b16 %v523
      %v940 = vunpack.c.h.b16 %v523
      %v941 = vunpack.c.l.b16 %v524
      %v942 = vunpack.c.h.b16 %v524
      %v943 = vunpack.c.l.b16 %v525
      %v944 = vunpack.c.h.b16 %v525
      %v945 = vunpack.c.l.b16 %v526
      %v946 = vunpack.c.h.b16 %v526
      %v947 = vunpack.c.l.b16 %v527
      %v948 = vunpack.c.h.b16 %v527
      %v949 = vunpack.c.l.b16 %v528
      %v950 = vunpack.c.h.b16 %v528
      %v951 = vunpack.c.l.b16 %v529
      %v952 = vunpack.c.h.b16 %v529
      %v953 = vunpack.c.l.b16 %v530
      %v954 = vunpack.c.h.b16 %v530
      %v955 = vunpack.c.l.b16 %v531
      %v956 = vunpack.c.h.b16 %v531
      %v957 = vunpack.c.l.b16 %v532
      %v958 = vunpack.c.h.b16 %v532
      %v959 = vunpack.c.l.b16 %v533
      %v960 = vunpack.c.h.b16 %v533
      %v961 = vunpack.c.l.b16 %v534
      %v962 = vunpack.c.h.b16 %v534
      %v963 = vunpack.c.l.b16 %v535
      %v964 = vunpack.c.h.b16 %v535
      %v965 = vunpack.c.l.b16 %v536
      %v966 = vunpack.c.h.b16 %v536
      %v967 = vunpack.c.l.b16 %v537
      %v968 = vunpack.c.h.b16 %v537
      %v969 = vunpack.c.l.b16 %v538
      %v970 = vunpack.c.h.b16 %v538
      %v971 = vunpack.c.l.b16 %v539
      %v972 = vunpack.c.h.b16 %v539
      %v973 = vunpack.c.l.b16 %v540
      %v974 = vunpack.c.h.b16 %v540
      %v975 = vunpack.c.l.b16 %v541
      %v976 = vunpack.c.h.b16 %v541
      %v977 = vunpack.c.l.b16 %v542
      %v978 = vunpack.c.h.b16 %v542
      %v979 = vunpack.c.l.b16 %v543
      %v980 = vunpack.c.h.b16 %v543
      %v981 = vunpack.c.l.b16 %v544
      %v982 = vunpack.c.h.b16 %v544
      %v983 = vunpack.c.l.b16 %v545
      %v984 = vunpack.c.h.b16 %v545
      %v985 = vunpack.c.l.b16 %v546
      %v986 = vunpack.c.h.b16 %v546
      %v987 = vunpack.c.l.b16 %v547
      %v988 = vunpack.c.h.b16 %v547
      %v989 = vunpack.c.l.b16 %v548
      %v990 = vunpack.c.h.b16 %v548
      %v991 = vunpack.c.l.b16 %v549
      %v992 = vunpack.c.h.b16 %v549
      %v993 = vunpack.c.l.b16 %v550
      %v994 = vunpack.c.h.b16 %v550
      %v995 = vunpack.c.l.b16 %v551
      %v996 = vunpack.c.h.b16 %v551
      %v997 = vunpack.c.l.b16 %v552
      %v998 = vunpack.c.h.b16 %v552
      %v999 = vunpack.c.l.b16 %v553
      %v1000 = vunpack.c.h.b16 %v553
      %v1001 = vunpack.c.l.b16 %v554
      %v1002 = vunpack.c.h.b16 %v554
      %v1003 = vunpack.c.l.b16 %v555
      %v1004 = vunpack.c.h.b16 %v555
      %v1005 = vunpack.c.l.b16 %v556
      %v1006 = vunpack.c.h.b16 %v556
      %v1007 = vunpack.c.l.b16 %v557
      %v1008 = vunpack.c.h.b16 %v557
      %v1009 = vunpack.c.l.b16 %v558
      %v1010 = vunpack.c.h.b16 %v558
      %v1011 = vunpack.c.l.b16 %v559
      %v1012 = vunpack.c.h.b16 %v559
      %v1013 = vunpack.c.l.b16 %v560
      %v1014 = vunpack.c.h.b16 %v560
      %v1015 = vunpack.c.l.b16 %v561
      %v1016 = vunpack.c.h.b16 %v561
      %v1017 = vunpack.c.l.b16 %v562
      %v1018 = vunpack.c.h.b16 %v562
      %v1019 = vunpack.c.l.b16 %v563
      %v1020 = vunpack.c.h.b16 %v563
      %v1021 = vunpack.c.l.b16 %v564
      %v1022 = vunpack.c.h.b16 %v564
      %v1023 = vunpack.c.l.b16 %v565
      %v1024 = vunpack.c.h.b16 %v565
      %v1025 = vunpack.c.l.b16 %v566
      %v1026 = vunpack.c.h.b16 %v566
      %v1027 = vunpack.c.l.b16 %v567
      %v1028 = vunpack.c.h.b16 %v567
      %v1029 = vunpack.c.l.b16 %v568
      %v1030 = vunpack.c.h.b16 %v568
      %v1031 = vunpack.c.l.b16 %v569
      %v1032 = vunpack.c.h.b16 %v569
      %v1033 = vunpack.c.l.b16 %v570
      %v1034 = vunpack.c.h.b16 %v570
      %v1035 = vpack.c.b16 %v783, %v779
      %v1036 = vpack.c.b16 %v784, %v780
      %v1037 = vpack.c.b16 %v785, %v781
      %v1038 = vpack.c.b16 %v786, %v782
      %v1039 = vpack.c.b16 %v791, %v787
      %v1040 = vpack.c.b16 %v792, %v788
      %v1041 = vpack.c.b16 %v793, %v789
      %v1042 = vpack.c.b16 %v794, %v790
      %v1043 = vpack.c.b16 %v799, %v795
      %v1044 = vpack.c.b16 %v800, %v796
      %v1045 = vpack.c.b16 %v801, %v797
      %v1046 = vpack.c.b16 %v802, %v798
      %v1047 = vpack.c.b16 %v807, %v803
      %v1048 = vpack.c.b16 %v808, %v804
      %v1049 = vpack.c.b16 %v809, %v805
      %v1050 = vpack.c.b16 %v810, %v806
      %v1051 = vpack.c.b16 %v815, %v811
      %v1052 = vpack.c.b16 %v816, %v812
      %v1053 = vpack.c.b16 %v817, %v813
      %v1054 = vpack.c.b16 %v818, %v814
      %v1055 = vpack.c.b16 %v823, %v819
      %v1056 = vpack.c.b16 %v824, %v820
      %v1057 = vpack.c.b16 %v825, %v821
      %v1058 = vpack.c.b16 %v826, %v822
      %v1059 = vpack.c.b16 %v831, %v827
      %v1060 = vpack.c.b16 %v832, %v828
      %v1061 = vpack.c.b16 %v833, %v829
      %v1062 = vpack.c.b16 %v834, %v830
      %v1063 = vpack.c.b16 %v839, %v835
      %v1064 = vpack.c.b16 %v840, %v836
      %v1065 = vpack.c.b16 %v841, %v837
      %v1066 = vpack.c.b16 %v842, %v838
      %v1067 = vpack.c.b16 %v847, %v843
      %v1068 = vpack.c.b16 %v848, %v844
      %v1069 = vpack.c.b16 %v849, %v845
      %v1070 = vpack.c.b16 %v850, %v846
      %v1071 = vpack.c.b16 %v855, %v851
      %v1072 = vpack.c.b16 %v856, %v852
      %v1073 = vpack.c.b16 %v857, %v853
      %v1074 = vpack.c.b16 %v858, %v854
      %v1075 = vpack.c.b16 %v863, %v859
      %v1076 = vpack.c.b16 %v864, %v860
      %v1077 = vpack.c.b16 %v865, %v861
      %v1078 = vpack.c.b16 %v866, %v862
      %v1079 = vpack.c.b16 %v871, %v867
      %v1080 = vpack.c.b16 %v872, %v868
      %v1081 = vpack.c.b16 %v873, %v869
      %v1082 = vpack.c.b16 %v874, %v870
      %v1083 = vpack.c.b16 %v879, %v875
      %v1084 = vpack.c.b16 %v880, %v876
      %v1085 = vpack.c.b16 %v881, %v877
      %v1086 = vpack.c.b16 %v882, %v878
      %v1087 = vpack.c.b16 %v887, %v883
      %v1088 = vpack.c.b16 %v888, %v884
      %v1089 = vpack.c.b16 %v889, %v885
      %v1090 = vpack.c.b16 %v890, %v886
      %v1091 = vpack.c.b16 %v895, %v891
      %v1092 = vpack.c.b16 %v896, %v892
      %v1093 = vpack.c.b16 %v897, %v893
      %v1094 = vpack.c.b16 %v898, %v894
      %v1095 = vpack.c.b16 %v903, %v899
      %v1096 = vpack.c.b16 %v904, %v900
      %v1097 = vpack.c.b16 %v905, %v901
      %v1098 = vpack.c.b16 %v906, %v902
      %v1099 = vpack.c.b16 %v911, %v907
      %v1100 = vpack.c.b16 %v912, %v908
      %v1101 = vpack.c.b16 %v913, %v909
      %v1102 = vpack.c.b16 %v914, %v910
      %v1103 = vpack.c.b16 %v919, %v915
      %v1104 = vpack.c.b16 %v920, %v916
      %v1105 = vpack.c.b16 %v921, %v917
      %v1106 = vpack.c.b16 %v922, %v918
      %v1107 = vpack.c.b16 %v927, %v923
      %v1108 = vpack.c.b16 %v928, %v924
      %v1109 = vpack.c.b16 %v929, %v925
      %v1110 = vpack.c.b16 %v930, %v926
      %v1111 = vpack.c.b16 %v935, %v931
      %v1112 = vpack.c.b16 %v936, %v932
      %v1113 = vpack.c.b16 %v937, %v933
      %v1114 = vpack.c.b16 %v938, %v934
      %v1115 = vpack.c.b16 %v943, %v939
      %v1116 = vpack.c.b16 %v944, %v940
      %v1117 = vpack.c.b16 %v945, %v941
      %v1118 = vpack.c.b16 %v946, %v942
      %v1119 = vpack.c.b16 %v951, %v947
      %v1120 = vpack.c.b16 %v952, %v948
      %v1121 = vpack.c.b16 %v953, %v949
      %v1122 = vpack.c.b16 %v954, %v950
      %v1123 = vpack.c.b16 %v959, %v955
      %v1124 = vpack.c.b16 %v960, %v956
      %v1125 = vpack.c.b16 %v961, %v957
      %v1126 = vpack.c.b16 %v962, %v958
      %v1127 = vpack.c.b16 %v967, %v963
      %v1128 = vpack.c.b16 %v968, %v964
      %v1129 = vpack.c.b16 %v969, %v965
      %v1130 = vpack.c.b16 %v970, %v966
      %v1131 = vpack.c.b16 %v975, %v971
      %v1132 = vpack.c.b16 %v976, %v972
      %v1133 = vpack.c.b16 %v977, %v973
      %v1134 = vpack.c.b16 %v978, %v974
      %v1135 = vpack.c.b16 %v983, %v979
      %v1136 = vpack.c.b16 %v984, %v980
      %v1137 = vpack.c.b16 %v985, %v981
      %v1138 = vpack.c.b16 %v986, %v982
      %v1139 = vpack.c.b16 %v991, %v987
      %v1140 = vpack.c.b16 %v992, %v988
      %v1141 = vpack.c.b16 %v993, %v989
      %v1142 = vpack.c.b16 %v994, %v990
      %v1143 = vpack.c.b16 %v999, %v995
      %v1144 = vpack.c.b16 %v1000, %v996
      %v1145 = vpack.c.b16 %v1001, %v997
      %v1146 = vpack.c.b16 %v1002, %v998
      %v1147 = vpack.c.b16 %v1007, %v1003
      %v1148 = vpack.c.b16 %v1008, %v1004
      %v1149 = vpack.c.b16 %v1009, %v1005
      %v1150 = vpack.c.b16 %v1010, %v1006
      %v1151 = vpack.c.b16 %v1015, %v1011
      %v1152 = vpack.c.b16 %v1016, %v1012
      %v1153 = vpack.c.b16 %v1017, %v1013
      %v1154 = vpack.c.b16 %v1018, %v1014
      %v1155 = vpack.c.b16 %v1023, %v1019
      %v1156 = vpack.c.b16 %v1024, %v1020
      %v1157 = vpack.c.b16 %v1025, %v1021
      %v1158 = vpack.c.b16 %v1026, %v1022
      %v1159 = vpack.c.b16 %v1031, %v1027
      %v1160 = vpack.c.b16 %v1032, %v1028
      %v1161 = vpack.c.b16 %v1033, %v1029
      %v1162 = vpack.c.b16 %v1034, %v1030
      %1291 = vmatpush.bf16.msra.mxu0 %v1063
      %1292 = vmatpush.bf16.msra.mxu0 %v1059
      %1293 = vmatpush.bf16.msra.mxu0 %v1055
      %1294 = vmatpush.bf16.msra.mxu0 %v1051
      %1295 = vmatpush.bf16.msra.mxu0 %v1047
      %1296 = vmatpush.bf16.msra.mxu0 %v1043
      %1297 = vmatpush.bf16.msra.mxu0 %v1039
      %1298 = vmatpush.bf16.msra.mxu0 %v1035
      %1299 = vmatmul.bf16.gmra.mxu0 %v619
      %v1300 = vpop.f32.mrf.mxu0
      %v1301 = vadd.f32 0.0, %v1300
      %v1302 = vpop.f32.mrf.mxu0
      %v1303 = vadd.f32 0.0, %v1302
      %1304 = vmatmul.bf16.gmra.mxu0 %v623
      %v1305 = vpop.f32.mrf.mxu0
      %v1306 = vadd.f32 0.0, %v1305
      %v1307 = vpop.f32.mrf.mxu0
      %v1308 = vadd.f32 0.0, %v1307
      %1309 = vmatmul.bf16.gmra.mxu0 %v627
      %v1310 = vpop.f32.mrf.mxu0
      %v1311 = vadd.f32 0.0, %v1310
      %v1312 = vpop.f32.mrf.mxu0
      %v1313 = vadd.f32 0.0, %v1312
      %1314 = vmatmul.bf16.gmra.mxu0 %v631
      %v1315 = vpop.f32.mrf.mxu0
      %v1316 = vadd.f32 0.0, %v1315
      %v1317 = vpop.f32.mrf.mxu0
      %v1318 = vadd.f32 0.0, %v1317
      %1319 = vdwg.mxu0
      %1320 = vmatpush.bf16.msra.mxu0 %v1095
      %1321 = vmatpush.bf16.msra.mxu0 %v1091
      %1322 = vmatpush.bf16.msra.mxu0 %v1087
      %1323 = vmatpush.bf16.msra.mxu0 %v1083
      %1324 = vmatpush.bf16.msra.mxu0 %v1079
      %1325 = vmatpush.bf16.msra.mxu0 %v1075
      %1326 = vmatpush.bf16.msra.mxu0 %v1071
      %1327 = vmatpush.bf16.msra.mxu0 %v1067
      %1328 = vmatmul.bf16.gmra.mxu0 %v620
      %v1329 = vpop.f32.mrf.mxu0
      %v1330 = vadd.f32 %v1301, %v1329
      %v1331 = vpop.f32.mrf.mxu0
      %v1332 = vadd.f32 %v1303, %v1331
      %1333 = vmatmul.bf16.gmra.mxu0 %v624
      %v1334 = vpop.f32.mrf.mxu0
      %v1335 = vadd.f32 %v1306, %v1334
      %v1336 = vpop.f32.mrf.mxu0
      %v1337 = vadd.f32 %v1308, %v1336
      %1338 = vmatmul.bf16.gmra.mxu0 %v628
      %v1339 = vpop.f32.mrf.mxu0
      %v1340 = vadd.f32 %v1311, %v1339
      %v1341 = vpop.f32.mrf.mxu0
      %v1342 = vadd.f32 %v1313, %v1341
      %1343 = vmatmul.bf16.gmra.mxu0 %v632
      %v1344 = vpop.f32.mrf.mxu0
      %v1345 = vadd.f32 %v1316, %v1344
      %v1346 = vpop.f32.mrf.mxu0
      %v1347 = vadd.f32 %v1318, %v1346
      %1348 = vdwg.mxu0
      %1349 = vmatpush.bf16.msra.mxu0 %v1127
      %1350 = vmatpush.bf16.msra.mxu0 %v1123
      %1351 = vmatpush.bf16.msra.mxu0 %v1119
      %1352 = vmatpush.bf16.msra.mxu0 %v1115
      %1353 = vmatpush.bf16.msra.mxu0 %v1111
      %1354 = vmatpush.bf16.msra.mxu0 %v1107
      %1355 = vmatpush.bf16.msra.mxu0 %v1103
      %1356 = vmatpush.bf16.msra.mxu0 %v1099
      %1357 = vmatmul.bf16.gmra.mxu0 %v621
      %v1358 = vpop.f32.mrf.mxu0
      %v1359 = vadd.f32 %v1330, %v1358
      %v1360 = vpop.f32.mrf.mxu0
      %v1361 = vadd.f32 %v1332, %v1360
      %1362 = vmatmul.bf16.gmra.mxu0 %v625
      %v1363 = vpop.f32.mrf.mxu0
      %v1364 = vadd.f32 %v1335, %v1363
      %v1365 = vpop.f32.mrf.mxu0
      %v1366 = vadd.f32 %v1337, %v1365
      %1367 = vmatmul.bf16.gmra.mxu0 %v629
      %v1368 = vpop.f32.mrf.mxu0
      %v1369 = vadd.f32 %v1340, %v1368
      %v1370 = vpop.f32.mrf.mxu0
      %v1371 = vadd.f32 %v1342, %v1370
      %1372 = vmatmul.bf16.gmra.mxu0 %v633
      %v1373 = vpop.f32.mrf.mxu0
      %v1374 = vadd.f32 %v1345, %v1373
      %v1375 = vpop.f32.mrf.mxu0
      %v1376 = vadd.f32 %v1347, %v1375
      %1377 = vdwg.mxu0
      %1378 = vmatpush.bf16.msra.mxu0 %v1159
      %1379 = vmatpush.bf16.msra.mxu0 %v1155
      %1380 = vmatpush.bf16.msra.mxu0 %v1151
      %1381 = vmatpush.bf16.msra.mxu0 %v1147
      %1382 = vmatpush.bf16.msra.mxu0 %v1143
      %1383 = vmatpush.bf16.msra.mxu0 %v1139
      %1384 = vmatpush.bf16.msra.mxu0 %v1135
      %1385 = vmatpush.bf16.msra.mxu0 %v1131
      %1386 = vmatmul.bf16.gmra.mxu0 %v622
      %v1387 = vpop.f32.mrf.mxu0
      %v1388 = vadd.f32 %v1359, %v1387
      %v1389 = vpop.f32.mrf.mxu0
      %v1390 = vadd.f32 %v1361, %v1389
      %1391 = vmatmul.bf16.gmra.mxu0 %v626
      %v1392 = vpop.f32.mrf.mxu0
      %v1393 = vadd.f32 %v1364, %v1392
      %v1394 = vpop.f32.mrf.mxu0
      %v1395 = vadd.f32 %v1366, %v1394
      %1396 = vmatmul.bf16.gmra.mxu0 %v630
      %v1397 = vpop.f32.mrf.mxu0
      %v1398 = vadd.f32 %v1369, %v1397
      %v1399 = vpop.f32.mrf.mxu0
      %v1400 = vadd.f32 %v1371, %v1399
      %1401 = vmatmul.bf16.gmra.mxu0 %v634
      %v1402 = vpop.f32.mrf.mxu0
      %v1403 = vadd.f32 %v1374, %v1402
      %v1404 = vpop.f32.mrf.mxu0
      %v1405 = vadd.f32 %v1376, %v1404
      %1406 = vdwg.mxu0
      %1407 = vmatpush.bf16.msra.mxu0 %v1064
      %1408 = vmatpush.bf16.msra.mxu0 %v1060
      %1409 = vmatpush.bf16.msra.mxu0 %v1056
      %1410 = vmatpush.bf16.msra.mxu0 %v1052
      %1411 = vmatpush.bf16.msra.mxu0 %v1048
      %1412 = vmatpush.bf16.msra.mxu0 %v1044
      %1413 = vmatpush.bf16.msra.mxu0 %v1040
      %1414 = vmatpush.bf16.msra.mxu0 %v1036
      %1415 = vmatmul.bf16.gmra.mxu0 %v619
      %v1416 = vpop.f32.mrf.mxu0
      %v1417 = vadd.f32 0.0, %v1416
      %v1418 = vpop.f32.mrf.mxu0
      %v1419 = vadd.f32 0.0, %v1418
      %1420 = vmatmul.bf16.gmra.mxu0 %v623
      %v1421 = vpop.f32.mrf.mxu0
      %v1422 = vadd.f32 0.0, %v1421
      %v1423 = vpop.f32.mrf.mxu0
      %v1424 = vadd.f32 0.0, %v1423
      %1425 = vmatmul.bf16.gmra.mxu0 %v627
      %v1426 = vpop.f32.mrf.mxu0
      %v1427 = vadd.f32 0.0, %v1426
      %v1428 = vpop.f32.mrf.mxu0
      %v1429 = vadd.f32 0.0, %v1428
      %1430 = vmatmul.bf16.gmra.mxu0 %v631
      %v1431 = vpop.f32.mrf.mxu0
      %v1432 = vadd.f32 0.0, %v1431
      %v1433 = vpop.f32.mrf.mxu0
      %v1434 = vadd.f32 0.0, %v1433
      %1435 = vdwg.mxu0
      %1436 = vmatpush.bf16.msra.mxu0 %v1096
      %1437 = vmatpush.bf16.msra.mxu0 %v1092
      %1438 = vmatpush.bf16.msra.mxu0 %v1088
      %1439 = vmatpush.bf16.msra.mxu0 %v1084
      %1440 = vmatpush.bf16.msra.mxu0 %v1080
      %1441 = vmatpush.bf16.msra.mxu0 %v1076
      %1442 = vmatpush.bf16.msra.mxu0 %v1072
      %1443 = vmatpush.bf16.msra.mxu0 %v1068
      %1444 = vmatmul.bf16.gmra.mxu0 %v620
      %v1445 = vpop.f32.mrf.mxu0
      %v1446 = vadd.f32 %v1417, %v1445
      %v1447 = vpop.f32.mrf.mxu0
      %v1448 = vadd.f32 %v1419, %v1447
      %1449 = vmatmul.bf16.gmra.mxu0 %v624
      %v1450 = vpop.f32.mrf.mxu0
      %v1451 = vadd.f32 %v1422, %v1450
      %v1452 = vpop.f32.mrf.mxu0
      %v1453 = vadd.f32 %v1424, %v1452
      %1454 = vmatmul.bf16.gmra.mxu0 %v628
      %v1455 = vpop.f32.mrf.mxu0
      %v1456 = vadd.f32 %v1427, %v1455
      %v1457 = vpop.f32.mrf.mxu0
      %v1458 = vadd.f32 %v1429, %v1457
      %1459 = vmatmul.bf16.gmra.mxu0 %v632
      %v1460 = vpop.f32.mrf.mxu0
      %v1461 = vadd.f32 %v1432, %v1460
      %v1462 = vpop.f32.mrf.mxu0
      %v1463 = vadd.f32 %v1434, %v1462
      %1464 = vdwg.mxu0
      %1465 = vmatpush.bf16.msra.mxu0 %v1128
      %1466 = vmatpush.bf16.msra.mxu0 %v1124
      %1467 = vmatpush.bf16.msra.mxu0 %v1120
      %1468 = vmatpush.bf16.msra.mxu0 %v1116
      %1469 = vmatpush.bf16.msra.mxu0 %v1112
      %1470 = vmatpush.bf16.msra.mxu0 %v1108
      %1471 = vmatpush.bf16.msra.mxu0 %v1104
      %1472 = vmatpush.bf16.msra.mxu0 %v1100
      %1473 = vmatmul.bf16.gmra.mxu0 %v621
      %v1474 = vpop.f32.mrf.mxu0
      %v1475 = vadd.f32 %v1446, %v1474
      %v1476 = vpop.f32.mrf.mxu0
      %v1477 = vadd.f32 %v1448, %v1476
      %1478 = vmatmul.bf16.gmra.mxu0 %v625
      %v1479 = vpop.f32.mrf.mxu0
      %v1480 = vadd.f32 %v1451, %v1479
      %v1481 = vpop.f32.mrf.mxu0
      %v1482 = vadd.f32 %v1453, %v1481
      %1483 = vmatmul.bf16.gmra.mxu0 %v629
      %v1484 = vpop.f32.mrf.mxu0
      %v1485 = vadd.f32 %v1456, %v1484
      %v1486 = vpop.f32.mrf.mxu0
      %v1487 = vadd.f32 %v1458, %v1486
      %1488 = vmatmul.bf16.gmra.mxu0 %v633
      %v1489 = vpop.f32.mrf.mxu0
      %v1490 = vadd.f32 %v1461, %v1489
      %v1491 = vpop.f32.mrf.mxu0
      %v1492 = vadd.f32 %v1463, %v1491
      %1493 = vdwg.mxu0
      %1494 = vmatpush.bf16.msra.mxu0 %v1160
      %1495 = vmatpush.bf16.msra.mxu0 %v1156
      %1496 = vmatpush.bf16.msra.mxu0 %v1152
      %1497 = vmatpush.bf16.msra.mxu0 %v1148
      %1498 = vmatpush.bf16.msra.mxu0 %v1144
      %1499 = vmatpush.bf16.msra.mxu0 %v1140
      %1500 = vmatpush.bf16.msra.mxu0 %v1136
      %1501 = vmatpush.bf16.msra.mxu0 %v1132
      %1502 = vmatmul.bf16.gmra.mxu0 %v622
      %v1503 = vpop.f32.mrf.mxu0
      %v1504 = vadd.f32 %v1475, %v1503
      %v1505 = vpop.f32.mrf.mxu0
      %v1506 = vadd.f32 %v1477, %v1505
      %1507 = vmatmul.bf16.gmra.mxu0 %v626
      %v1508 = vpop.f32.mrf.mxu0
      %v1509 = vadd.f32 %v1480, %v1508
      %v1510 = vpop.f32.mrf.mxu0
      %v1511 = vadd.f32 %v1482, %v1510
      %1512 = vmatmul.bf16.gmra.mxu0 %v630
      %v1513 = vpop.f32.mrf.mxu0
      %v1514 = vadd.f32 %v1485, %v1513
      %v1515 = vpop.f32.mrf.mxu0
      %v1516 = vadd.f32 %v1487, %v1515
      %1517 = vmatmul.bf16.gmra.mxu0 %v634
      %v1518 = vpop.f32.mrf.mxu0
      %v1519 = vadd.f32 %v1490, %v1518
      %v1520 = vpop.f32.mrf.mxu0
      %v1521 = vadd.f32 %v1492, %v1520
      %1522 = vdwg.mxu0
      %1523 = vmatpush.bf16.msra.mxu0 %v1065
      %1524 = vmatpush.bf16.msra.mxu0 %v1061
      %1525 = vmatpush.bf16.msra.mxu0 %v1057
      %1526 = vmatpush.bf16.msra.mxu0 %v1053
      %1527 = vmatpush.bf16.msra.mxu0 %v1049
      %1528 = vmatpush.bf16.msra.mxu0 %v1045
      %1529 = vmatpush.bf16.msra.mxu0 %v1041
      %1530 = vmatpush.bf16.msra.mxu0 %v1037
      %1531 = vmatmul.bf16.gmra.mxu0 %v619
      %v1532 = vpop.f32.mrf.mxu0
      %v1533 = vadd.f32 0.0, %v1532
      %v1534 = vpop.f32.mrf.mxu0
      %v1535 = vadd.f32 0.0, %v1534
      %1536 = vmatmul.bf16.gmra.mxu0 %v623
      %v1537 = vpop.f32.mrf.mxu0
      %v1538 = vadd.f32 0.0, %v1537
      %v1539 = vpop.f32.mrf.mxu0
      %v1540 = vadd.f32 0.0, %v1539
      %1541 = vmatmul.bf16.gmra.mxu0 %v627
      %v1542 = vpop.f32.mrf.mxu0
      %v1543 = vadd.f32 0.0, %v1542
      %v1544 = vpop.f32.mrf.mxu0
      %v1545 = vadd.f32 0.0, %v1544
      %1546 = vmatmul.bf16.gmra.mxu0 %v631
      %v1547 = vpop.f32.mrf.mxu0
      %v1548 = vadd.f32 0.0, %v1547
      %v1549 = vpop.f32.mrf.mxu0
      %v1550 = vadd.f32 0.0, %v1549
      %1551 = vdwg.mxu0
      %1552 = vmatpush.bf16.msra.mxu0 %v1097
      %1553 = vmatpush.bf16.msra.mxu0 %v1093
      %1554 = vmatpush.bf16.msra.mxu0 %v1089
      %1555 = vmatpush.bf16.msra.mxu0 %v1085
      %1556 = vmatpush.bf16.msra.mxu0 %v1081
      %1557 = vmatpush.bf16.msra.mxu0 %v1077
      %1558 = vmatpush.bf16.msra.mxu0 %v1073
      %1559 = vmatpush.bf16.msra.mxu0 %v1069
      %1560 = vmatmul.bf16.gmra.mxu0 %v620
      %v1561 = vpop.f32.mrf.mxu0
      %v1562 = vadd.f32 %v1533, %v1561
      %v1563 = vpop.f32.mrf.mxu0
      %v1564 = vadd.f32 %v1535, %v1563
      %1565 = vmatmul.bf16.gmra.mxu0 %v624
      %v1566 = vpop.f32.mrf.mxu0
      %v1567 = vadd.f32 %v1538, %v1566
      %v1568 = vpop.f32.mrf.mxu0
      %v1569 = vadd.f32 %v1540, %v1568
      %1570 = vmatmul.bf16.gmra.mxu0 %v628
      %v1571 = vpop.f32.mrf.mxu0
      %v1572 = vadd.f32 %v1543, %v1571
      %v1573 = vpop.f32.mrf.mxu0
      %v1574 = vadd.f32 %v1545, %v1573
      %1575 = vmatmul.bf16.gmra.mxu0 %v632
      %v1576 = vpop.f32.mrf.mxu0
      %v1577 = vadd.f32 %v1548, %v1576
      %v1578 = vpop.f32.mrf.mxu0
      %v1579 = vadd.f32 %v1550, %v1578
      %1580 = vdwg.mxu0
      %1581 = vmatpush.bf16.msra.mxu0 %v1129
      %1582 = vmatpush.bf16.msra.mxu0 %v1125
      %1583 = vmatpush.bf16.msra.mxu0 %v1121
      %1584 = vmatpush.bf16.msra.mxu0 %v1117
      %1585 = vmatpush.bf16.msra.mxu0 %v1113
      %1586 = vmatpush.bf16.msra.mxu0 %v1109
      %1587 = vmatpush.bf16.msra.mxu0 %v1105
      %1588 = vmatpush.bf16.msra.mxu0 %v1101
      %1589 = vmatmul.bf16.gmra.mxu0 %v621
      %v1590 = vpop.f32.mrf.mxu0
      %v1591 = vadd.f32 %v1562, %v1590
      %v1592 = vpop.f32.mrf.mxu0
      %v1593 = vadd.f32 %v1564, %v1592
      %1594 = vmatmul.bf16.gmra.mxu0 %v625
      %v1595 = vpop.f32.mrf.mxu0
      %v1596 = vadd.f32 %v1567, %v1595
      %v1597 = vpop.f32.mrf.mxu0
      %v1598 = vadd.f32 %v1569, %v1597
      %1599 = vmatmul.bf16.gmra.mxu0 %v629
      %v1600 = vpop.f32.mrf.mxu0
      %v1601 = vadd.f32 %v1572, %v1600
      %v1602 = vpop.f32.mrf.mxu0
      %v1603 = vadd.f32 %v1574, %v1602
      %1604 = vmatmul.bf16.gmra.mxu0 %v633
      %v1605 = vpop.f32.mrf.mxu0
      %v1606 = vadd.f32 %v1577, %v1605
      %v1607 = vpop.f32.mrf.mxu0
      %v1608 = vadd.f32 %v1579, %v1607
      %1609 = vdwg.mxu0
      %1610 = vmatpush.bf16.msra.mxu0 %v1161
      %1611 = vmatpush.bf16.msra.mxu0 %v1157
      %1612 = vmatpush.bf16.msra.mxu0 %v1153
      %1613 = vmatpush.bf16.msra.mxu0 %v1149
      %1614 = vmatpush.bf16.msra.mxu0 %v1145
      %1615 = vmatpush.bf16.msra.mxu0 %v1141
      %1616 = vmatpush.bf16.msra.mxu0 %v1137
      %1617 = vmatpush.bf16.msra.mxu0 %v1133
      %1618 = vmatmul.bf16.gmra.mxu0 %v622
      %v1619 = vpop.f32.mrf.mxu0
      %v1620 = vadd.f32 %v1591, %v1619
      %v1621 = vpop.f32.mrf.mxu0
      %v1622 = vadd.f32 %v1593, %v1621
      %1623 = vmatmul.bf16.gmra.mxu0 %v626
      %v1624 = vpop.f32.mrf.mxu0
      %v1625 = vadd.f32 %v1596, %v1624
      %v1626 = vpop.f32.mrf.mxu0
      %v1627 = vadd.f32 %v1598, %v1626
      %1628 = vmatmul.bf16.gmra.mxu0 %v630
      %v1629 = vpop.f32.mrf.mxu0
      %v1630 = vadd.f32 %v1601, %v1629
      %v1631 = vpop.f32.mrf.mxu0
      %v1632 = vadd.f32 %v1603, %v1631
      %1633 = vmatmul.bf16.gmra.mxu0 %v634
      %v1634 = vpop.f32.mrf.mxu0
      %v1635 = vadd.f32 %v1606, %v1634
      %v1636 = vpop.f32.mrf.mxu0
      %v1637 = vadd.f32 %v1608, %v1636
      %1638 = vdwg.mxu0
      %1639 = vmatpush.bf16.msra.mxu0 %v1066
      %1640 = vmatpush.bf16.msra.mxu0 %v1062
      %1641 = vmatpush.bf16.msra.mxu0 %v1058
      %1642 = vmatpush.bf16.msra.mxu0 %v1054
      %1643 = vmatpush.bf16.msra.mxu0 %v1050
      %1644 = vmatpush.bf16.msra.mxu0 %v1046
      %1645 = vmatpush.bf16.msra.mxu0 %v1042
      %1646 = vmatpush.bf16.msra.mxu0 %v1038
      %1647 = vmatmul.bf16.gmra.mxu0 %v619
      %v1648 = vpop.f32.mrf.mxu0
      %v1649 = vadd.f32 0.0, %v1648
      %v1650 = vpop.f32.mrf.mxu0
      %v1651 = vadd.f32 0.0, %v1650
      %1652 = vmatmul.bf16.gmra.mxu0 %v623
      %v1653 = vpop.f32.mrf.mxu0
      %v1654 = vadd.f32 0.0, %v1653
      %v1655 = vpop.f32.mrf.mxu0
      %v1656 = vadd.f32 0.0, %v1655
      %1657 = vmatmul.bf16.gmra.mxu0 %v627
      %v1658 = vpop.f32.mrf.mxu0
      %v1659 = vadd.f32 0.0, %v1658
      %v1660 = vpop.f32.mrf.mxu0
      %v1661 = vadd.f32 0.0, %v1660
      %1662 = vmatmul.bf16.gmra.mxu0 %v631
      %v1663 = vpop.f32.mrf.mxu0
      %v1664 = vadd.f32 0.0, %v1663
      %v1665 = vpop.f32.mrf.mxu0
      %v1666 = vadd.f32 0.0, %v1665
      %1667 = vdwg.mxu0
      %1668 = vmatpush.bf16.msra.mxu0 %v1098
      %1669 = vmatpush.bf16.msra.mxu0 %v1094
      %1670 = vmatpush.bf16.msra.mxu0 %v1090
      %1671 = vmatpush.bf16.msra.mxu0 %v1086
      %1672 = vmatpush.bf16.msra.mxu0 %v1082
      %1673 = vmatpush.bf16.msra.mxu0 %v1078
      %1674 = vmatpush.bf16.msra.mxu0 %v1074
      %1675 = vmatpush.bf16.msra.mxu0 %v1070
      %1676 = vmatmul.bf16.gmra.mxu0 %v620
      %v1677 = vpop.f32.mrf.mxu0
      %v1678 = vadd.f32 %v1649, %v1677
      %v1679 = vpop.f32.mrf.mxu0
      %v1680 = vadd.f32 %v1651, %v1679
      %1681 = vmatmul.bf16.gmra.mxu0 %v624
      %v1682 = vpop.f32.mrf.mxu0
      %v1683 = vadd.f32 %v1654, %v1682
      %v1684 = vpop.f32.mrf.mxu0
      %v1685 = vadd.f32 %v1656, %v1684
      %1686 = vmatmul.bf16.gmra.mxu0 %v628
      %v1687 = vpop.f32.mrf.mxu0
      %v1688 = vadd.f32 %v1659, %v1687
      %v1689 = vpop.f32.mrf.mxu0
      %v1690 = vadd.f32 %v1661, %v1689
      %1691 = vmatmul.bf16.gmra.mxu0 %v632
      %v1692 = vpop.f32.mrf.mxu0
      %v1693 = vadd.f32 %v1664, %v1692
      %v1694 = vpop.f32.mrf.mxu0
      %v1695 = vadd.f32 %v1666, %v1694
      %1696 = vdwg.mxu0
      %1697 = vmatpush.bf16.msra.mxu0 %v1130
      %1698 = vmatpush.bf16.msra.mxu0 %v1126
      %1699 = vmatpush.bf16.msra.mxu0 %v1122
      %1700 = vmatpush.bf16.msra.mxu0 %v1118
      %1701 = vmatpush.bf16.msra.mxu0 %v1114
      %1702 = vmatpush.bf16.msra.mxu0 %v1110
      %1703 = vmatpush.bf16.msra.mxu0 %v1106
      %1704 = vmatpush.bf16.msra.mxu0 %v1102
      %1705 = vmatmul.bf16.gmra.mxu0 %v621
      %v1706 = vpop.f32.mrf.mxu0
      %v1707 = vadd.f32 %v1678, %v1706
      %v1708 = vpop.f32.mrf.mxu0
      %v1709 = vadd.f32 %v1680, %v1708
      %1710 = vmatmul.bf16.gmra.mxu0 %v625
      %v1711 = vpop.f32.mrf.mxu0
      %v1712 = vadd.f32 %v1683, %v1711
      %v1713 = vpop.f32.mrf.mxu0
      %v1714 = vadd.f32 %v1685, %v1713
      %1715 = vmatmul.bf16.gmra.mxu0 %v629
      %v1716 = vpop.f32.mrf.mxu0
      %v1717 = vadd.f32 %v1688, %v1716
      %v1718 = vpop.f32.mrf.mxu0
      %v1719 = vadd.f32 %v1690, %v1718
      %1720 = vmatmul.bf16.gmra.mxu0 %v633
      %v1721 = vpop.f32.mrf.mxu0
      %v1722 = vadd.f32 %v1693, %v1721
      %v1723 = vpop.f32.mrf.mxu0
      %v1724 = vadd.f32 %v1695, %v1723
      %1725 = vdwg.mxu0
      %1726 = vmatpush.bf16.msra.mxu0 %v1162
      %1727 = vmatpush.bf16.msra.mxu0 %v1158
      %1728 = vmatpush.bf16.msra.mxu0 %v1154
      %1729 = vmatpush.bf16.msra.mxu0 %v1150
      %1730 = vmatpush.bf16.msra.mxu0 %v1146
      %1731 = vmatpush.bf16.msra.mxu0 %v1142
      %1732 = vmatpush.bf16.msra.mxu0 %v1138
      %1733 = vmatpush.bf16.msra.mxu0 %v1134
      %1734 = vmatmul.bf16.gmra.mxu0 %v622
      %v1735 = vpop.f32.mrf.mxu0
      %v1736 = vadd.f32 %v1707, %v1735
      %v1737 = vpop.f32.mrf.mxu0
      %v1738 = vadd.f32 %v1709, %v1737
      %1739 = vmatmul.bf16.gmra.mxu0 %v626
      %v1740 = vpop.f32.mrf.mxu0
      %v1741 = vadd.f32 %v1712, %v1740
      %v1742 = vpop.f32.mrf.mxu0
      %v1743 = vadd.f32 %v1714, %v1742
      %1744 = vmatmul.bf16.gmra.mxu0 %v630
      %v1745 = vpop.f32.mrf.mxu0
      %v1746 = vadd.f32 %v1717, %v1745
      %v1747 = vpop.f32.mrf.mxu0
      %v1748 = vadd.f32 %v1719, %v1747
      %1749 = vmatmul.bf16.gmra.mxu0 %v634
      %v1750 = vpop.f32.mrf.mxu0
      %v1751 = vadd.f32 %v1722, %v1750
      %v1752 = vpop.f32.mrf.mxu0
      %v1753 = vadd.f32 %v1724, %v1752
      %1754 = vdwg.mxu0
      %v1771 = vunpack.c.l.b16 %v283
      %v1772 = vunpack.c.h.b16 %v283
      %v1773 = vunpack.c.l.b16 %v284
      %v1774 = vunpack.c.h.b16 %v284
      %v1775 = vunpack.c.l.b16 %v285
      %v1776 = vunpack.c.h.b16 %v285
      %v1777 = vunpack.c.l.b16 %v286
      %v1778 = vunpack.c.h.b16 %v286
      %v1779 = vunpack.c.l.b16 %v287
      %v1780 = vunpack.c.h.b16 %v287
      %v1781 = vunpack.c.l.b16 %v288
      %v1782 = vunpack.c.h.b16 %v288
      %v1783 = vunpack.c.l.b16 %v289
      %v1784 = vunpack.c.h.b16 %v289
      %v1785 = vunpack.c.l.b16 %v290
      %v1786 = vunpack.c.h.b16 %v290
      %v1787 = vunpack.c.l.b16 %v291
      %v1788 = vunpack.c.h.b16 %v291
      %v1789 = vunpack.c.l.b16 %v292
      %v1790 = vunpack.c.h.b16 %v292
      %v1791 = vunpack.c.l.b16 %v293
      %v1792 = vunpack.c.h.b16 %v293
      %v1793 = vunpack.c.l.b16 %v294
      %v1794 = vunpack.c.h.b16 %v294
      %v1795 = vunpack.c.l.b16 %v295
      %v1796 = vunpack.c.h.b16 %v295
      %v1797 = vunpack.c.l.b16 %v296
      %v1798 = vunpack.c.h.b16 %v296
      %v1799 = vunpack.c.l.b16 %v297
      %v1800 = vunpack.c.h.b16 %v297
      %v1801 = vunpack.c.l.b16 %v298
      %v1802 = vunpack.c.h.b16 %v298
      %v1803 = vpack.c.b16 %v1775, %v1771
      %v1804 = vpack.c.b16 %v1776, %v1772
      %v1805 = vpack.c.b16 %v1777, %v1773
      %v1806 = vpack.c.b16 %v1778, %v1774
      %v1807 = vpack.c.b16 %v1783, %v1779
      %v1808 = vpack.c.b16 %v1784, %v1780
      %v1809 = vpack.c.b16 %v1785, %v1781
      %v1810 = vpack.c.b16 %v1786, %v1782
      %v1811 = vpack.c.b16 %v1791, %v1787
      %v1812 = vpack.c.b16 %v1792, %v1788
      %v1813 = vpack.c.b16 %v1793, %v1789
      %v1814 = vpack.c.b16 %v1794, %v1790
      %v1815 = vpack.c.b16 %v1799, %v1795
      %v1816 = vpack.c.b16 %v1800, %v1796
      %v1817 = vpack.c.b16 %v1801, %v1797
      %v1818 = vpack.c.b16 %v1802, %v1798
      %v1963 = vunpack.c.l.b16 %v315
      %v1964 = vunpack.c.h.b16 %v315
      %v1965 = vunpack.c.l.b16 %v316
      %v1966 = vunpack.c.h.b16 %v316
      %v1967 = vunpack.c.l.b16 %v317
      %v1968 = vunpack.c.h.b16 %v317
      %v1969 = vunpack.c.l.b16 %v318
      %v1970 = vunpack.c.h.b16 %v318
      %v1971 = vunpack.c.l.b16 %v319
      %v1972 = vunpack.c.h.b16 %v319
      %v1973 = vunpack.c.l.b16 %v320
      %v1974 = vunpack.c.h.b16 %v320
      %v1975 = vunpack.c.l.b16 %v321
      %v1976 = vunpack.c.h.b16 %v321
      %v1977 = vunpack.c.l.b16 %v322
      %v1978 = vunpack.c.h.b16 %v322
      %v1979 = vunpack.c.l.b16 %v323
      %v1980 = vunpack.c.h.b16 %v323
      %v1981 = vunpack.c.l.b16 %v324
      %v1982 = vunpack.c.h.b16 %v324
      %v1983 = vunpack.c.l.b16 %v325
      %v1984 = vunpack.c.h.b16 %v325
      %v1985 = vunpack.c.l.b16 %v326
      %v1986 = vunpack.c.h.b16 %v326
      %v1987 = vunpack.c.l.b16 %v327
      %v1988 = vunpack.c.h.b16 %v327
      %v1989 = vunpack.c.l.b16 %v328
      %v1990 = vunpack.c.h.b16 %v328
      %v1991 = vunpack.c.l.b16 %v329
      %v1992 = vunpack.c.h.b16 %v329
      %v1993 = vunpack.c.l.b16 %v330
      %v1994 = vunpack.c.h.b16 %v330
      %v1995 = vunpack.c.l.b16 %v331
      %v1996 = vunpack.c.h.b16 %v331
      %v1997 = vunpack.c.l.b16 %v332
      %v1998 = vunpack.c.h.b16 %v332
      %v1999 = vunpack.c.l.b16 %v333
      %v2000 = vunpack.c.h.b16 %v333
      %v2001 = vunpack.c.l.b16 %v334
      %v2002 = vunpack.c.h.b16 %v334
      %v2003 = vunpack.c.l.b16 %v335
      %v2004 = vunpack.c.h.b16 %v335
      %v2005 = vunpack.c.l.b16 %v336
      %v2006 = vunpack.c.h.b16 %v336
      %v2007 = vunpack.c.l.b16 %v337
      %v2008 = vunpack.c.h.b16 %v337
      %v2009 = vunpack.c.l.b16 %v338
      %v2010 = vunpack.c.h.b16 %v338
      %v2011 = vunpack.c.l.b16 %v339
      %v2012 = vunpack.c.h.b16 %v339
      %v2013 = vunpack.c.l.b16 %v340
      %v2014 = vunpack.c.h.b16 %v340
      %v2015 = vunpack.c.l.b16 %v341
      %v2016 = vunpack.c.h.b16 %v341
      %v2017 = vunpack.c.l.b16 %v342
      %v2018 = vunpack.c.h.b16 %v342
      %v2019 = vunpack.c.l.b16 %v343
      %v2020 = vunpack.c.h.b16 %v343
      %v2021 = vunpack.c.l.b16 %v344
      %v2022 = vunpack.c.h.b16 %v344
      %v2023 = vunpack.c.l.b16 %v345
      %v2024 = vunpack.c.h.b16 %v345
      %v2025 = vunpack.c.l.b16 %v346
      %v2026 = vunpack.c.h.b16 %v346
      %v2027 = vunpack.c.l.b16 %v347
      %v2028 = vunpack.c.h.b16 %v347
      %v2029 = vunpack.c.l.b16 %v348
      %v2030 = vunpack.c.h.b16 %v348
      %v2031 = vunpack.c.l.b16 %v349
      %v2032 = vunpack.c.h.b16 %v349
      %v2033 = vunpack.c.l.b16 %v350
      %v2034 = vunpack.c.h.b16 %v350
      %v2035 = vunpack.c.l.b16 %v351
      %v2036 = vunpack.c.h.b16 %v351
      %v2037 = vunpack.c.l.b16 %v352
      %v2038 = vunpack.c.h.b16 %v352
      %v2039 = vunpack.c.l.b16 %v353
      %v2040 = vunpack.c.h.b16 %v353
      %v2041 = vunpack.c.l.b16 %v354
      %v2042 = vunpack.c.h.b16 %v354
      %v2043 = vunpack.c.l.b16 %v355
      %v2044 = vunpack.c.h.b16 %v355
      %v2045 = vunpack.c.l.b16 %v356
      %v2046 = vunpack.c.h.b16 %v356
      %v2047 = vunpack.c.l.b16 %v357
      %v2048 = vunpack.c.h.b16 %v357
      %v2049 = vunpack.c.l.b16 %v358
      %v2050 = vunpack.c.h.b16 %v358
      %v2051 = vunpack.c.l.b16 %v359
      %v2052 = vunpack.c.h.b16 %v359
      %v2053 = vunpack.c.l.b16 %v360
      %v2054 = vunpack.c.h.b16 %v360
      %v2055 = vunpack.c.l.b16 %v361
      %v2056 = vunpack.c.h.b16 %v361
      %v2057 = vunpack.c.l.b16 %v362
      %v2058 = vunpack.c.h.b16 %v362
      %v2059 = vunpack.c.l.b16 %v363
      %v2060 = vunpack.c.h.b16 %v363
      %v2061 = vunpack.c.l.b16 %v364
      %v2062 = vunpack.c.h.b16 %v364
      %v2063 = vunpack.c.l.b16 %v365
      %v2064 = vunpack.c.h.b16 %v365
      %v2065 = vunpack.c.l.b16 %v366
      %v2066 = vunpack.c.h.b16 %v366
      %v2067 = vunpack.c.l.b16 %v367
      %v2068 = vunpack.c.h.b16 %v367
      %v2069 = vunpack.c.l.b16 %v368
      %v2070 = vunpack.c.h.b16 %v368
      %v2071 = vunpack.c.l.b16 %v369
      %v2072 = vunpack.c.h.b16 %v369
      %v2073 = vunpack.c.l.b16 %v370
      %v2074 = vunpack.c.h.b16 %v370
      %v2075 = vunpack.c.l.b16 %v371
      %v2076 = vunpack.c.h.b16 %v371
      %v2077 = vunpack.c.l.b16 %v372
      %v2078 = vunpack.c.h.b16 %v372
      %v2079 = vunpack.c.l.b16 %v373
      %v2080 = vunpack.c.h.b16 %v373
      %v2081 = vunpack.c.l.b16 %v374
      %v2082 = vunpack.c.h.b16 %v374
      %v2083 = vunpack.c.l.b16 %v375
      %v2084 = vunpack.c.h.b16 %v375
      %v2085 = vunpack.c.l.b16 %v376
      %v2086 = vunpack.c.h.b16 %v376
      %v2087 = vunpack.c.l.b16 %v377
      %v2088 = vunpack.c.h.b16 %v377
      %v2089 = vunpack.c.l.b16 %v378
      %v2090 = vunpack.c.h.b16 %v378
      %v2091 = vunpack.c.l.b16 %v379
      %v2092 = vunpack.c.h.b16 %v379
      %v2093 = vunpack.c.l.b16 %v380
      %v2094 = vunpack.c.h.b16 %v380
      %v2095 = vunpack.c.l.b16 %v381
      %v2096 = vunpack.c.h.b16 %v381
      %v2097 = vunpack.c.l.b16 %v382
      %v2098 = vunpack.c.h.b16 %v382
      %v2099 = vunpack.c.l.b16 %v383
      %v2100 = vunpack.c.h.b16 %v383
      %v2101 = vunpack.c.l.b16 %v384
      %v2102 = vunpack.c.h.b16 %v384
      %v2103 = vunpack.c.l.b16 %v385
      %v2104 = vunpack.c.h.b16 %v385
      %v2105 = vunpack.c.l.b16 %v386
      %v2106 = vunpack.c.h.b16 %v386
      %v2107 = vunpack.c.l.b16 %v387
      %v2108 = vunpack.c.h.b16 %v387
      %v2109 = vunpack.c.l.b16 %v388
      %v2110 = vunpack.c.h.b16 %v388
      %v2111 = vunpack.c.l.b16 %v389
      %v2112 = vunpack.c.h.b16 %v389
      %v2113 = vunpack.c.l.b16 %v390
      %v2114 = vunpack.c.h.b16 %v390
      %v2115 = vunpack.c.l.b16 %v391
      %v2116 = vunpack.c.h.b16 %v391
      %v2117 = vunpack.c.l.b16 %v392
      %v2118 = vunpack.c.h.b16 %v392
      %v2119 = vunpack.c.l.b16 %v393
      %v2120 = vunpack.c.h.b16 %v393
      %v2121 = vunpack.c.l.b16 %v394
      %v2122 = vunpack.c.h.b16 %v394
      %v2123 = vunpack.c.l.b16 %v395
      %v2124 = vunpack.c.h.b16 %v395
      %v2125 = vunpack.c.l.b16 %v396
      %v2126 = vunpack.c.h.b16 %v396
      %v2127 = vunpack.c.l.b16 %v397
      %v2128 = vunpack.c.h.b16 %v397
      %v2129 = vunpack.c.l.b16 %v398
      %v2130 = vunpack.c.h.b16 %v398
      %v2131 = vunpack.c.l.b16 %v399
      %v2132 = vunpack.c.h.b16 %v399
      %v2133 = vunpack.c.l.b16 %v400
      %v2134 = vunpack.c.h.b16 %v400
      %v2135 = vunpack.c.l.b16 %v401
      %v2136 = vunpack.c.h.b16 %v401
      %v2137 = vunpack.c.l.b16 %v402
      %v2138 = vunpack.c.h.b16 %v402
      %v2139 = vunpack.c.l.b16 %v403
      %v2140 = vunpack.c.h.b16 %v403
      %v2141 = vunpack.c.l.b16 %v404
      %v2142 = vunpack.c.h.b16 %v404
      %v2143 = vunpack.c.l.b16 %v405
      %v2144 = vunpack.c.h.b16 %v405
      %v2145 = vunpack.c.l.b16 %v406
      %v2146 = vunpack.c.h.b16 %v406
      %v2147 = vunpack.c.l.b16 %v407
      %v2148 = vunpack.c.h.b16 %v407
      %v2149 = vunpack.c.l.b16 %v408
      %v2150 = vunpack.c.h.b16 %v408
      %v2151 = vunpack.c.l.b16 %v409
      %v2152 = vunpack.c.h.b16 %v409
      %v2153 = vunpack.c.l.b16 %v410
      %v2154 = vunpack.c.h.b16 %v410
      %v2155 = vunpack.c.l.b16 %v411
      %v2156 = vunpack.c.h.b16 %v411
      %v2157 = vunpack.c.l.b16 %v412
      %v2158 = vunpack.c.h.b16 %v412
      %v2159 = vunpack.c.l.b16 %v413
      %v2160 = vunpack.c.h.b16 %v413
      %v2161 = vunpack.c.l.b16 %v414
      %v2162 = vunpack.c.h.b16 %v414
      %v2163 = vunpack.c.l.b16 %v415
      %v2164 = vunpack.c.h.b16 %v415
      %v2165 = vunpack.c.l.b16 %v416
      %v2166 = vunpack.c.h.b16 %v416
      %v2167 = vunpack.c.l.b16 %v417
      %v2168 = vunpack.c.h.b16 %v417
      %v2169 = vunpack.c.l.b16 %v418
      %v2170 = vunpack.c.h.b16 %v418
      %v2171 = vunpack.c.l.b16 %v419
      %v2172 = vunpack.c.h.b16 %v419
      %v2173 = vunpack.c.l.b16 %v420
      %v2174 = vunpack.c.h.b16 %v420
      %v2175 = vunpack.c.l.b16 %v421
      %v2176 = vunpack.c.h.b16 %v421
      %v2177 = vunpack.c.l.b16 %v422
      %v2178 = vunpack.c.h.b16 %v422
      %v2179 = vunpack.c.l.b16 %v423
      %v2180 = vunpack.c.h.b16 %v423
      %v2181 = vunpack.c.l.b16 %v424
      %v2182 = vunpack.c.h.b16 %v424
      %v2183 = vunpack.c.l.b16 %v425
      %v2184 = vunpack.c.h.b16 %v425
      %v2185 = vunpack.c.l.b16 %v426
      %v2186 = vunpack.c.h.b16 %v426
      %v2187 = vunpack.c.l.b16 %v427
      %v2188 = vunpack.c.h.b16 %v427
      %v2189 = vunpack.c.l.b16 %v428
      %v2190 = vunpack.c.h.b16 %v428
      %v2191 = vunpack.c.l.b16 %v429
      %v2192 = vunpack.c.h.b16 %v429
      %v2193 = vunpack.c.l.b16 %v430
      %v2194 = vunpack.c.h.b16 %v430
      %v2195 = vunpack.c.l.b16 %v431
      %v2196 = vunpack.c.h.b16 %v431
      %v2197 = vunpack.c.l.b16 %v432
      %v2198 = vunpack.c.h.b16 %v432
      %v2199 = vunpack.c.l.b16 %v433
      %v2200 = vunpack.c.h.b16 %v433
      %v2201 = vunpack.c.l.b16 %v434
      %v2202 = vunpack.c.h.b16 %v434
      %v2203 = vunpack.c.l.b16 %v435
      %v2204 = vunpack.c.h.b16 %v435
      %v2205 = vunpack.c.l.b16 %v436
      %v2206 = vunpack.c.h.b16 %v436
      %v2207 = vunpack.c.l.b16 %v437
      %v2208 = vunpack.c.h.b16 %v437
      %v2209 = vunpack.c.l.b16 %v438
      %v2210 = vunpack.c.h.b16 %v438
      %v2211 = vunpack.c.l.b16 %v439
      %v2212 = vunpack.c.h.b16 %v439
      %v2213 = vunpack.c.l.b16 %v440
      %v2214 = vunpack.c.h.b16 %v440
      %v2215 = vunpack.c.l.b16 %v441
      %v2216 = vunpack.c.h.b16 %v441
      %v2217 = vunpack.c.l.b16 %v442
      %v2218 = vunpack.c.h.b16 %v442
      %v2219 = vpack.c.b16 %v1967, %v1963
      %v2220 = vpack.c.b16 %v1968, %v1964
      %v2221 = vpack.c.b16 %v1969, %v1965
      %v2222 = vpack.c.b16 %v1970, %v1966
      %v2223 = vpack.c.b16 %v1975, %v1971
      %v2224 = vpack.c.b16 %v1976, %v1972
      %v2225 = vpack.c.b16 %v1977, %v1973
      %v2226 = vpack.c.b16 %v1978, %v1974
      %v2227 = vpack.c.b16 %v1983, %v1979
      %v2228 = vpack.c.b16 %v1984, %v1980
      %v2229 = vpack.c.b16 %v1985, %v1981
      %v2230 = vpack.c.b16 %v1986, %v1982
      %v2231 = vpack.c.b16 %v1991, %v1987
      %v2232 = vpack.c.b16 %v1992, %v1988
      %v2233 = vpack.c.b16 %v1993, %v1989
      %v2234 = vpack.c.b16 %v1994, %v1990
      %v2235 = vpack.c.b16 %v1999, %v1995
      %v2236 = vpack.c.b16 %v2000, %v1996
      %v2237 = vpack.c.b16 %v2001, %v1997
      %v2238 = vpack.c.b16 %v2002, %v1998
      %v2239 = vpack.c.b16 %v2007, %v2003
      %v2240 = vpack.c.b16 %v2008, %v2004
      %v2241 = vpack.c.b16 %v2009, %v2005
      %v2242 = vpack.c.b16 %v2010, %v2006
      %v2243 = vpack.c.b16 %v2015, %v2011
      %v2244 = vpack.c.b16 %v2016, %v2012
      %v2245 = vpack.c.b16 %v2017, %v2013
      %v2246 = vpack.c.b16 %v2018, %v2014
      %v2247 = vpack.c.b16 %v2023, %v2019
      %v2248 = vpack.c.b16 %v2024, %v2020
      %v2249 = vpack.c.b16 %v2025, %v2021
      %v2250 = vpack.c.b16 %v2026, %v2022
      %v2251 = vpack.c.b16 %v2031, %v2027
      %v2252 = vpack.c.b16 %v2032, %v2028
      %v2253 = vpack.c.b16 %v2033, %v2029
      %v2254 = vpack.c.b16 %v2034, %v2030
      %v2255 = vpack.c.b16 %v2039, %v2035
      %v2256 = vpack.c.b16 %v2040, %v2036
      %v2257 = vpack.c.b16 %v2041, %v2037
      %v2258 = vpack.c.b16 %v2042, %v2038
      %v2259 = vpack.c.b16 %v2047, %v2043
      %v2260 = vpack.c.b16 %v2048, %v2044
      %v2261 = vpack.c.b16 %v2049, %v2045
      %v2262 = vpack.c.b16 %v2050, %v2046
      %v2263 = vpack.c.b16 %v2055, %v2051
      %v2264 = vpack.c.b16 %v2056, %v2052
      %v2265 = vpack.c.b16 %v2057, %v2053
      %v2266 = vpack.c.b16 %v2058, %v2054
      %v2267 = vpack.c.b16 %v2063, %v2059
      %v2268 = vpack.c.b16 %v2064, %v2060
      %v2269 = vpack.c.b16 %v2065, %v2061
      %v2270 = vpack.c.b16 %v2066, %v2062
      %v2271 = vpack.c.b16 %v2071, %v2067
      %v2272 = vpack.c.b16 %v2072, %v2068
      %v2273 = vpack.c.b16 %v2073, %v2069
      %v2274 = vpack.c.b16 %v2074, %v2070
      %v2275 = vpack.c.b16 %v2079, %v2075
      %v2276 = vpack.c.b16 %v2080, %v2076
      %v2277 = vpack.c.b16 %v2081, %v2077
      %v2278 = vpack.c.b16 %v2082, %v2078
      %v2279 = vpack.c.b16 %v2087, %v2083
      %v2280 = vpack.c.b16 %v2088, %v2084
      %v2281 = vpack.c.b16 %v2089, %v2085
      %v2282 = vpack.c.b16 %v2090, %v2086
      %v2283 = vpack.c.b16 %v2095, %v2091
      %v2284 = vpack.c.b16 %v2096, %v2092
      %v2285 = vpack.c.b16 %v2097, %v2093
      %v2286 = vpack.c.b16 %v2098, %v2094
      %v2287 = vpack.c.b16 %v2103, %v2099
      %v2288 = vpack.c.b16 %v2104, %v2100
      %v2289 = vpack.c.b16 %v2105, %v2101
      %v2290 = vpack.c.b16 %v2106, %v2102
      %v2291 = vpack.c.b16 %v2111, %v2107
      %v2292 = vpack.c.b16 %v2112, %v2108
      %v2293 = vpack.c.b16 %v2113, %v2109
      %v2294 = vpack.c.b16 %v2114, %v2110
      %v2295 = vpack.c.b16 %v2119, %v2115
      %v2296 = vpack.c.b16 %v2120, %v2116
      %v2297 = vpack.c.b16 %v2121, %v2117
      %v2298 = vpack.c.b16 %v2122, %v2118
      %v2299 = vpack.c.b16 %v2127, %v2123
      %v2300 = vpack.c.b16 %v2128, %v2124
      %v2301 = vpack.c.b16 %v2129, %v2125
      %v2302 = vpack.c.b16 %v2130, %v2126
      %v2303 = vpack.c.b16 %v2135, %v2131
      %v2304 = vpack.c.b16 %v2136, %v2132
      %v2305 = vpack.c.b16 %v2137, %v2133
      %v2306 = vpack.c.b16 %v2138, %v2134
      %v2307 = vpack.c.b16 %v2143, %v2139
      %v2308 = vpack.c.b16 %v2144, %v2140
      %v2309 = vpack.c.b16 %v2145, %v2141
      %v2310 = vpack.c.b16 %v2146, %v2142
      %v2311 = vpack.c.b16 %v2151, %v2147
      %v2312 = vpack.c.b16 %v2152, %v2148
      %v2313 = vpack.c.b16 %v2153, %v2149
      %v2314 = vpack.c.b16 %v2154, %v2150
      %v2315 = vpack.c.b16 %v2159, %v2155
      %v2316 = vpack.c.b16 %v2160, %v2156
      %v2317 = vpack.c.b16 %v2161, %v2157
      %v2318 = vpack.c.b16 %v2162, %v2158
      %v2319 = vpack.c.b16 %v2167, %v2163
      %v2320 = vpack.c.b16 %v2168, %v2164
      %v2321 = vpack.c.b16 %v2169, %v2165
      %v2322 = vpack.c.b16 %v2170, %v2166
      %v2323 = vpack.c.b16 %v2175, %v2171
      %v2324 = vpack.c.b16 %v2176, %v2172
      %v2325 = vpack.c.b16 %v2177, %v2173
      %v2326 = vpack.c.b16 %v2178, %v2174
      %v2327 = vpack.c.b16 %v2183, %v2179
      %v2328 = vpack.c.b16 %v2184, %v2180
      %v2329 = vpack.c.b16 %v2185, %v2181
      %v2330 = vpack.c.b16 %v2186, %v2182
      %v2331 = vpack.c.b16 %v2191, %v2187
      %v2332 = vpack.c.b16 %v2192, %v2188
      %v2333 = vpack.c.b16 %v2193, %v2189
      %v2334 = vpack.c.b16 %v2194, %v2190
      %v2335 = vpack.c.b16 %v2199, %v2195
      %v2336 = vpack.c.b16 %v2200, %v2196
      %v2337 = vpack.c.b16 %v2201, %v2197
      %v2338 = vpack.c.b16 %v2202, %v2198
      %v2339 = vpack.c.b16 %v2207, %v2203
      %v2340 = vpack.c.b16 %v2208, %v2204
      %v2341 = vpack.c.b16 %v2209, %v2205
      %v2342 = vpack.c.b16 %v2210, %v2206
      %v2343 = vpack.c.b16 %v2215, %v2211
      %v2344 = vpack.c.b16 %v2216, %v2212
      %v2345 = vpack.c.b16 %v2217, %v2213
      %v2346 = vpack.c.b16 %v2218, %v2214
      %2475 = vmatpush.bf16.msra.mxu0 %v2247
      %2476 = vmatpush.bf16.msra.mxu0 %v2243
      %2477 = vmatpush.bf16.msra.mxu0 %v2239
      %2478 = vmatpush.bf16.msra.mxu0 %v2235
      %2479 = vmatpush.bf16.msra.mxu0 %v2231
      %2480 = vmatpush.bf16.msra.mxu0 %v2227
      %2481 = vmatpush.bf16.msra.mxu0 %v2223
      %2482 = vmatpush.bf16.msra.mxu0 %v2219
      %2483 = vmatmul.bf16.gmra.mxu0 %v1803
      %v2484 = vpop.f32.mrf.mxu0
      %v2485 = vadd.f32 %v1388, %v2484
      %v2486 = vpop.f32.mrf.mxu0
      %v2487 = vadd.f32 %v1390, %v2486
      %2488 = vmatmul.bf16.gmra.mxu0 %v1807
      %v2489 = vpop.f32.mrf.mxu0
      %v2490 = vadd.f32 %v1393, %v2489
      %v2491 = vpop.f32.mrf.mxu0
      %v2492 = vadd.f32 %v1395, %v2491
      %2493 = vmatmul.bf16.gmra.mxu0 %v1811
      %v2494 = vpop.f32.mrf.mxu0
      %v2495 = vadd.f32 %v1398, %v2494
      %v2496 = vpop.f32.mrf.mxu0
      %v2497 = vadd.f32 %v1400, %v2496
      %2498 = vmatmul.bf16.gmra.mxu0 %v1815
      %v2499 = vpop.f32.mrf.mxu0
      %v2500 = vadd.f32 %v1403, %v2499
      %v2501 = vpop.f32.mrf.mxu0
      %v2502 = vadd.f32 %v1405, %v2501
      %2503 = vdwg.mxu0
      %2504 = vmatpush.bf16.msra.mxu0 %v2279
      %2505 = vmatpush.bf16.msra.mxu0 %v2275
      %2506 = vmatpush.bf16.msra.mxu0 %v2271
      %2507 = vmatpush.bf16.msra.mxu0 %v2267
      %2508 = vmatpush.bf16.msra.mxu0 %v2263
      %2509 = vmatpush.bf16.msra.mxu0 %v2259
      %2510 = vmatpush.bf16.msra.mxu0 %v2255
      %2511 = vmatpush.bf16.msra.mxu0 %v2251
      %2512 = vmatmul.bf16.gmra.mxu0 %v1804
      %v2513 = vpop.f32.mrf.mxu0
      %v2514 = vadd.f32 %v2485, %v2513
      %v2515 = vpop.f32.mrf.mxu0
      %v2516 = vadd.f32 %v2487, %v2515
      %2517 = vmatmul.bf16.gmra.mxu0 %v1808
      %v2518 = vpop.f32.mrf.mxu0
      %v2519 = vadd.f32 %v2490, %v2518
      %v2520 = vpop.f32.mrf.mxu0
      %v2521 = vadd.f32 %v2492, %v2520
      %2522 = vmatmul.bf16.gmra.mxu0 %v1812
      %v2523 = vpop.f32.mrf.mxu0
      %v2524 = vadd.f32 %v2495, %v2523
      %v2525 = vpop.f32.mrf.mxu0
      %v2526 = vadd.f32 %v2497, %v2525
      %2527 = vmatmul.bf16.gmra.mxu0 %v1816
      %v2528 = vpop.f32.mrf.mxu0
      %v2529 = vadd.f32 %v2500, %v2528
      %v2530 = vpop.f32.mrf.mxu0
      %v2531 = vadd.f32 %v2502, %v2530
      %2532 = vdwg.mxu0
      %2533 = vmatpush.bf16.msra.mxu0 %v2311
      %2534 = vmatpush.bf16.msra.mxu0 %v2307
      %2535 = vmatpush.bf16.msra.mxu0 %v2303
      %2536 = vmatpush.bf16.msra.mxu0 %v2299
      %2537 = vmatpush.bf16.msra.mxu0 %v2295
      %2538 = vmatpush.bf16.msra.mxu0 %v2291
      %2539 = vmatpush.bf16.msra.mxu0 %v2287
      %2540 = vmatpush.bf16.msra.mxu0 %v2283
      %2541 = vmatmul.bf16.gmra.mxu0 %v1805
      %v2542 = vpop.f32.mrf.mxu0
      %v2543 = vadd.f32 %v2514, %v2542
      %v2544 = vpop.f32.mrf.mxu0
      %v2545 = vadd.f32 %v2516, %v2544
      %2546 = vmatmul.bf16.gmra.mxu0 %v1809
      %v2547 = vpop.f32.mrf.mxu0
      %v2548 = vadd.f32 %v2519, %v2547
      %v2549 = vpop.f32.mrf.mxu0
      %v2550 = vadd.f32 %v2521, %v2549
      %2551 = vmatmul.bf16.gmra.mxu0 %v1813
      %v2552 = vpop.f32.mrf.mxu0
      %v2553 = vadd.f32 %v2524, %v2552
      %v2554 = vpop.f32.mrf.mxu0
      %v2555 = vadd.f32 %v2526, %v2554
      %2556 = vmatmul.bf16.gmra.mxu0 %v1817
      %v2557 = vpop.f32.mrf.mxu0
      %v2558 = vadd.f32 %v2529, %v2557
      %v2559 = vpop.f32.mrf.mxu0
      %v2560 = vadd.f32 %v2531, %v2559
      %2561 = vdwg.mxu0
      %2562 = vmatpush.bf16.msra.mxu0 %v2343
      %2563 = vmatpush.bf16.msra.mxu0 %v2339
      %2564 = vmatpush.bf16.msra.mxu0 %v2335
      %2565 = vmatpush.bf16.msra.mxu0 %v2331
      %2566 = vmatpush.bf16.msra.mxu0 %v2327
      %2567 = vmatpush.bf16.msra.mxu0 %v2323
      %2568 = vmatpush.bf16.msra.mxu0 %v2319
      %2569 = vmatpush.bf16.msra.mxu0 %v2315
      %2570 = vmatmul.bf16.gmra.mxu0 %v1806
      %v2571 = vpop.f32.mrf.mxu0
      %v2572 = vadd.f32 %v2543, %v2571
      %v2573 = vpop.f32.mrf.mxu0
      %v2574 = vadd.f32 %v2545, %v2573
      %2575 = vmatmul.bf16.gmra.mxu0 %v1810
      %v2576 = vpop.f32.mrf.mxu0
      %v2577 = vadd.f32 %v2548, %v2576
      %v2578 = vpop.f32.mrf.mxu0
      %v2579 = vadd.f32 %v2550, %v2578
      %2580 = vmatmul.bf16.gmra.mxu0 %v1814
      %v2581 = vpop.f32.mrf.mxu0
      %v2582 = vadd.f32 %v2553, %v2581
      %v2583 = vpop.f32.mrf.mxu0
      %v2584 = vadd.f32 %v2555, %v2583
      %2585 = vmatmul.bf16.gmra.mxu0 %v1818
      %v2586 = vpop.f32.mrf.mxu0
      %v2587 = vadd.f32 %v2558, %v2586
      %v2588 = vpop.f32.mrf.mxu0
      %v2589 = vadd.f32 %v2560, %v2588
      %2590 = vdwg.mxu0
      %2591 = vmatpush.bf16.msra.mxu0 %v2248
      %2592 = vmatpush.bf16.msra.mxu0 %v2244
      %2593 = vmatpush.bf16.msra.mxu0 %v2240
      %2594 = vmatpush.bf16.msra.mxu0 %v2236
      %2595 = vmatpush.bf16.msra.mxu0 %v2232
      %2596 = vmatpush.bf16.msra.mxu0 %v2228
      %2597 = vmatpush.bf16.msra.mxu0 %v2224
      %2598 = vmatpush.bf16.msra.mxu0 %v2220
      %2599 = vmatmul.bf16.gmra.mxu0 %v1803
      %v2600 = vpop.f32.mrf.mxu0
      %v2601 = vadd.f32 %v1504, %v2600
      %v2602 = vpop.f32.mrf.mxu0
      %v2603 = vadd.f32 %v1506, %v2602
      %2604 = vmatmul.bf16.gmra.mxu0 %v1807
      %v2605 = vpop.f32.mrf.mxu0
      %v2606 = vadd.f32 %v1509, %v2605
      %v2607 = vpop.f32.mrf.mxu0
      %v2608 = vadd.f32 %v1511, %v2607
      %2609 = vmatmul.bf16.gmra.mxu0 %v1811
      %v2610 = vpop.f32.mrf.mxu0
      %v2611 = vadd.f32 %v1514, %v2610
      %v2612 = vpop.f32.mrf.mxu0
      %v2613 = vadd.f32 %v1516, %v2612
      %2614 = vmatmul.bf16.gmra.mxu0 %v1815
      %v2615 = vpop.f32.mrf.mxu0
      %v2616 = vadd.f32 %v1519, %v2615
      %v2617 = vpop.f32.mrf.mxu0
      %v2618 = vadd.f32 %v1521, %v2617
      %2619 = vdwg.mxu0
      %2620 = vmatpush.bf16.msra.mxu0 %v2280
      %2621 = vmatpush.bf16.msra.mxu0 %v2276
      %2622 = vmatpush.bf16.msra.mxu0 %v2272
      %2623 = vmatpush.bf16.msra.mxu0 %v2268
      %2624 = vmatpush.bf16.msra.mxu0 %v2264
      %2625 = vmatpush.bf16.msra.mxu0 %v2260
      %2626 = vmatpush.bf16.msra.mxu0 %v2256
      %2627 = vmatpush.bf16.msra.mxu0 %v2252
      %2628 = vmatmul.bf16.gmra.mxu0 %v1804
      %v2629 = vpop.f32.mrf.mxu0
      %v2630 = vadd.f32 %v2601, %v2629
      %v2631 = vpop.f32.mrf.mxu0
      %v2632 = vadd.f32 %v2603, %v2631
      %2633 = vmatmul.bf16.gmra.mxu0 %v1808
      %v2634 = vpop.f32.mrf.mxu0
      %v2635 = vadd.f32 %v2606, %v2634
      %v2636 = vpop.f32.mrf.mxu0
      %v2637 = vadd.f32 %v2608, %v2636
      %2638 = vmatmul.bf16.gmra.mxu0 %v1812
      %v2639 = vpop.f32.mrf.mxu0
      %v2640 = vadd.f32 %v2611, %v2639
      %v2641 = vpop.f32.mrf.mxu0
      %v2642 = vadd.f32 %v2613, %v2641
      %2643 = vmatmul.bf16.gmra.mxu0 %v1816
      %v2644 = vpop.f32.mrf.mxu0
      %v2645 = vadd.f32 %v2616, %v2644
      %v2646 = vpop.f32.mrf.mxu0
      %v2647 = vadd.f32 %v2618, %v2646
      %2648 = vdwg.mxu0
      %2649 = vmatpush.bf16.msra.mxu0 %v2312
      %2650 = vmatpush.bf16.msra.mxu0 %v2308
      %2651 = vmatpush.bf16.msra.mxu0 %v2304
      %2652 = vmatpush.bf16.msra.mxu0 %v2300
      %2653 = vmatpush.bf16.msra.mxu0 %v2296
      %2654 = vmatpush.bf16.msra.mxu0 %v2292
      %2655 = vmatpush.bf16.msra.mxu0 %v2288
      %2656 = vmatpush.bf16.msra.mxu0 %v2284
      %2657 = vmatmul.bf16.gmra.mxu0 %v1805
      %v2658 = vpop.f32.mrf.mxu0
      %v2659 = vadd.f32 %v2630, %v2658
      %v2660 = vpop.f32.mrf.mxu0
      %v2661 = vadd.f32 %v2632, %v2660
      %2662 = vmatmul.bf16.gmra.mxu0 %v1809
      %v2663 = vpop.f32.mrf.mxu0
      %v2664 = vadd.f32 %v2635, %v2663
      %v2665 = vpop.f32.mrf.mxu0
      %v2666 = vadd.f32 %v2637, %v2665
      %2667 = vmatmul.bf16.gmra.mxu0 %v1813
      %v2668 = vpop.f32.mrf.mxu0
      %v2669 = vadd.f32 %v2640, %v2668
      %v2670 = vpop.f32.mrf.mxu0
      %v2671 = vadd.f32 %v2642, %v2670
      %2672 = vmatmul.bf16.gmra.mxu0 %v1817
      %v2673 = vpop.f32.mrf.mxu0
      %v2674 = vadd.f32 %v2645, %v2673
      %v2675 = vpop.f32.mrf.mxu0
      %v2676 = vadd.f32 %v2647, %v2675
      %2677 = vdwg.mxu0
      %2678 = vmatpush.bf16.msra.mxu0 %v2344
      %2679 = vmatpush.bf16.msra.mxu0 %v2340
      %2680 = vmatpush.bf16.msra.mxu0 %v2336
      %2681 = vmatpush.bf16.msra.mxu0 %v2332
      %2682 = vmatpush.bf16.msra.mxu0 %v2328
      %2683 = vmatpush.bf16.msra.mxu0 %v2324
      %2684 = vmatpush.bf16.msra.mxu0 %v2320
      %2685 = vmatpush.bf16.msra.mxu0 %v2316
      %2686 = vmatmul.bf16.gmra.mxu0 %v1806
      %v2687 = vpop.f32.mrf.mxu0
      %v2688 = vadd.f32 %v2659, %v2687
      %v2689 = vpop.f32.mrf.mxu0
      %v2690 = vadd.f32 %v2661, %v2689
      %2691 = vmatmul.bf16.gmra.mxu0 %v1810
      %v2692 = vpop.f32.mrf.mxu0
      %v2693 = vadd.f32 %v2664, %v2692
      %v2694 = vpop.f32.mrf.mxu0
      %v2695 = vadd.f32 %v2666, %v2694
      %2696 = vmatmul.bf16.gmra.mxu0 %v1814
      %v2697 = vpop.f32.mrf.mxu0
      %v2698 = vadd.f32 %v2669, %v2697
      %v2699 = vpop.f32.mrf.mxu0
      %v2700 = vadd.f32 %v2671, %v2699
      %2701 = vmatmul.bf16.gmra.mxu0 %v1818
      %v2702 = vpop.f32.mrf.mxu0
      %v2703 = vadd.f32 %v2674, %v2702
      %v2704 = vpop.f32.mrf.mxu0
      %v2705 = vadd.f32 %v2676, %v2704
      %2706 = vdwg.mxu0
      %2707 = vmatpush.bf16.msra.mxu0 %v2249
      %2708 = vmatpush.bf16.msra.mxu0 %v2245
      %2709 = vmatpush.bf16.msra.mxu0 %v2241
      %2710 = vmatpush.bf16.msra.mxu0 %v2237
      %2711 = vmatpush.bf16.msra.mxu0 %v2233
      %2712 = vmatpush.bf16.msra.mxu0 %v2229
      %2713 = vmatpush.bf16.msra.mxu0 %v2225
      %2714 = vmatpush.bf16.msra.mxu0 %v2221
      %2715 = vmatmul.bf16.gmra.mxu0 %v1803
      %v2716 = vpop.f32.mrf.mxu0
      %v2717 = vadd.f32 %v1620, %v2716
      %v2718 = vpop.f32.mrf.mxu0
      %v2719 = vadd.f32 %v1622, %v2718
      %2720 = vmatmul.bf16.gmra.mxu0 %v1807
      %v2721 = vpop.f32.mrf.mxu0
      %v2722 = vadd.f32 %v1625, %v2721
      %v2723 = vpop.f32.mrf.mxu0
      %v2724 = vadd.f32 %v1627, %v2723
      %2725 = vmatmul.bf16.gmra.mxu0 %v1811
      %v2726 = vpop.f32.mrf.mxu0
      %v2727 = vadd.f32 %v1630, %v2726
      %v2728 = vpop.f32.mrf.mxu0
      %v2729 = vadd.f32 %v1632, %v2728
      %2730 = vmatmul.bf16.gmra.mxu0 %v1815
      %v2731 = vpop.f32.mrf.mxu0
      %v2732 = vadd.f32 %v1635, %v2731
      %v2733 = vpop.f32.mrf.mxu0
      %v2734 = vadd.f32 %v1637, %v2733
      %2735 = vdwg.mxu0
      %2736 = vmatpush.bf16.msra.mxu0 %v2281
      %2737 = vmatpush.bf16.msra.mxu0 %v2277
      %2738 = vmatpush.bf16.msra.mxu0 %v2273
      %2739 = vmatpush.bf16.msra.mxu0 %v2269
      %2740 = vmatpush.bf16.msra.mxu0 %v2265
      %2741 = vmatpush.bf16.msra.mxu0 %v2261
      %2742 = vmatpush.bf16.msra.mxu0 %v2257
      %2743 = vmatpush.bf16.msra.mxu0 %v2253
      %2744 = vmatmul.bf16.gmra.mxu0 %v1804
      %v2745 = vpop.f32.mrf.mxu0
      %v2746 = vadd.f32 %v2717, %v2745
      %v2747 = vpop.f32.mrf.mxu0
      %v2748 = vadd.f32 %v2719, %v2747
      %2749 = vmatmul.bf16.gmra.mxu0 %v1808
      %v2750 = vpop.f32.mrf.mxu0
      %v2751 = vadd.f32 %v2722, %v2750
      %v2752 = vpop.f32.mrf.mxu0
      %v2753 = vadd.f32 %v2724, %v2752
      %2754 = vmatmul.bf16.gmra.mxu0 %v1812
      %v2755 = vpop.f32.mrf.mxu0
      %v2756 = vadd.f32 %v2727, %v2755
      %v2757 = vpop.f32.mrf.mxu0
      %v2758 = vadd.f32 %v2729, %v2757
      %2759 = vmatmul.bf16.gmra.mxu0 %v1816
      %v2760 = vpop.f32.mrf.mxu0
      %v2761 = vadd.f32 %v2732, %v2760
      %v2762 = vpop.f32.mrf.mxu0
      %v2763 = vadd.f32 %v2734, %v2762
      %2764 = vdwg.mxu0
      %2765 = vmatpush.bf16.msra.mxu0 %v2313
      %2766 = vmatpush.bf16.msra.mxu0 %v2309
      %2767 = vmatpush.bf16.msra.mxu0 %v2305
      %2768 = vmatpush.bf16.msra.mxu0 %v2301
      %2769 = vmatpush.bf16.msra.mxu0 %v2297
      %2770 = vmatpush.bf16.msra.mxu0 %v2293
      %2771 = vmatpush.bf16.msra.mxu0 %v2289
      %2772 = vmatpush.bf16.msra.mxu0 %v2285
      %2773 = vmatmul.bf16.gmra.mxu0 %v1805
      %v2774 = vpop.f32.mrf.mxu0
      %v2775 = vadd.f32 %v2746, %v2774
      %v2776 = vpop.f32.mrf.mxu0
      %v2777 = vadd.f32 %v2748, %v2776
      %2778 = vmatmul.bf16.gmra.mxu0 %v1809
      %v2779 = vpop.f32.mrf.mxu0
      %v2780 = vadd.f32 %v2751, %v2779
      %v2781 = vpop.f32.mrf.mxu0
      %v2782 = vadd.f32 %v2753, %v2781
      %2783 = vmatmul.bf16.gmra.mxu0 %v1813
      %v2784 = vpop.f32.mrf.mxu0
      %v2785 = vadd.f32 %v2756, %v2784
      %v2786 = vpop.f32.mrf.mxu0
      %v2787 = vadd.f32 %v2758, %v2786
      %2788 = vmatmul.bf16.gmra.mxu0 %v1817
      %v2789 = vpop.f32.mrf.mxu0
      %v2790 = vadd.f32 %v2761, %v2789
      %v2791 = vpop.f32.mrf.mxu0
      %v2792 = vadd.f32 %v2763, %v2791
      %2793 = vdwg.mxu0
      %2794 = vmatpush.bf16.msra.mxu0 %v2345
      %2795 = vmatpush.bf16.msra.mxu0 %v2341
      %2796 = vmatpush.bf16.msra.mxu0 %v2337
      %2797 = vmatpush.bf16.msra.mxu0 %v2333
      %2798 = vmatpush.bf16.msra.mxu0 %v2329
      %2799 = vmatpush.bf16.msra.mxu0 %v2325
      %2800 = vmatpush.bf16.msra.mxu0 %v2321
      %2801 = vmatpush.bf16.msra.mxu0 %v2317
      %2802 = vmatmul.bf16.gmra.mxu0 %v1806
      %v2803 = vpop.f32.mrf.mxu0
      %v2804 = vadd.f32 %v2775, %v2803
      %v2805 = vpop.f32.mrf.mxu0
      %v2806 = vadd.f32 %v2777, %v2805
      %2807 = vmatmul.bf16.gmra.mxu0 %v1810
      %v2808 = vpop.f32.mrf.mxu0
      %v2809 = vadd.f32 %v2780, %v2808
      %v2810 = vpop.f32.mrf.mxu0
      %v2811 = vadd.f32 %v2782, %v2810
      %2812 = vmatmul.bf16.gmra.mxu0 %v1814
      %v2813 = vpop.f32.mrf.mxu0
      %v2814 = vadd.f32 %v2785, %v2813
      %v2815 = vpop.f32.mrf.mxu0
      %v2816 = vadd.f32 %v2787, %v2815
      %2817 = vmatmul.bf16.gmra.mxu0 %v1818
      %v2818 = vpop.f32.mrf.mxu0
      %v2819 = vadd.f32 %v2790, %v2818
      %v2820 = vpop.f32.mrf.mxu0
      %v2821 = vadd.f32 %v2792, %v2820
      %2822 = vdwg.mxu0
      %2823 = vmatpush.bf16.msra.mxu0 %v2250
      %2824 = vmatpush.bf16.msra.mxu0 %v2246
      %2825 = vmatpush.bf16.msra.mxu0 %v2242
      %2826 = vmatpush.bf16.msra.mxu0 %v2238
      %2827 = vmatpush.bf16.msra.mxu0 %v2234
      %2828 = vmatpush.bf16.msra.mxu0 %v2230
      %2829 = vmatpush.bf16.msra.mxu0 %v2226
      %2830 = vmatpush.bf16.msra.mxu0 %v2222
      %2831 = vmatmul.bf16.gmra.mxu0 %v1803
      %v2832 = vpop.f32.mrf.mxu0
      %v2833 = vadd.f32 %v1736, %v2832
      %v2834 = vpop.f32.mrf.mxu0
      %v2835 = vadd.f32 %v1738, %v2834
      %2836 = vmatmul.bf16.gmra.mxu0 %v1807
      %v2837 = vpop.f32.mrf.mxu0
      %v2838 = vadd.f32 %v1741, %v2837
      %v2839 = vpop.f32.mrf.mxu0
      %v2840 = vadd.f32 %v1743, %v2839
      %2841 = vmatmul.bf16.gmra.mxu0 %v1811
      %v2842 = vpop.f32.mrf.mxu0
      %v2843 = vadd.f32 %v1746, %v2842
      %v2844 = vpop.f32.mrf.mxu0
      %v2845 = vadd.f32 %v1748, %v2844
      %2846 = vmatmul.bf16.gmra.mxu0 %v1815
      %v2847 = vpop.f32.mrf.mxu0
      %v2848 = vadd.f32 %v1751, %v2847
      %v2849 = vpop.f32.mrf.mxu0
      %v2850 = vadd.f32 %v1753, %v2849
      %2851 = vdwg.mxu0
      %2852 = vmatpush.bf16.msra.mxu0 %v2282
      %2853 = vmatpush.bf16.msra.mxu0 %v2278
      %2854 = vmatpush.bf16.msra.mxu0 %v2274
      %2855 = vmatpush.bf16.msra.mxu0 %v2270
      %2856 = vmatpush.bf16.msra.mxu0 %v2266
      %2857 = vmatpush.bf16.msra.mxu0 %v2262
      %2858 = vmatpush.bf16.msra.mxu0 %v2258
      %2859 = vmatpush.bf16.msra.mxu0 %v2254
      %2860 = vmatmul.bf16.gmra.mxu0 %v1804
      %v2861 = vpop.f32.mrf.mxu0
      %v2862 = vadd.f32 %v2833, %v2861
      %v2863 = vpop.f32.mrf.mxu0
      %v2864 = vadd.f32 %v2835, %v2863
      %2865 = vmatmul.bf16.gmra.mxu0 %v1808
      %v2866 = vpop.f32.mrf.mxu0
      %v2867 = vadd.f32 %v2838, %v2866
      %v2868 = vpop.f32.mrf.mxu0
      %v2869 = vadd.f32 %v2840, %v2868
      %2870 = vmatmul.bf16.gmra.mxu0 %v1812
      %v2871 = vpop.f32.mrf.mxu0
      %v2872 = vadd.f32 %v2843, %v2871
      %v2873 = vpop.f32.mrf.mxu0
      %v2874 = vadd.f32 %v2845, %v2873
      %2875 = vmatmul.bf16.gmra.mxu0 %v1816
      %v2876 = vpop.f32.mrf.mxu0
      %v2877 = vadd.f32 %v2848, %v2876
      %v2878 = vpop.f32.mrf.mxu0
      %v2879 = vadd.f32 %v2850, %v2878
      %2880 = vdwg.mxu0
      %2881 = vmatpush.bf16.msra.mxu0 %v2314
      %2882 = vmatpush.bf16.msra.mxu0 %v2310
      %2883 = vmatpush.bf16.msra.mxu0 %v2306
      %2884 = vmatpush.bf16.msra.mxu0 %v2302
      %2885 = vmatpush.bf16.msra.mxu0 %v2298
      %2886 = vmatpush.bf16.msra.mxu0 %v2294
      %2887 = vmatpush.bf16.msra.mxu0 %v2290
      %2888 = vmatpush.bf16.msra.mxu0 %v2286
      %2889 = vmatmul.bf16.gmra.mxu0 %v1805
      %v2890 = vpop.f32.mrf.mxu0
      %v2891 = vadd.f32 %v2862, %v2890
      %v2892 = vpop.f32.mrf.mxu0
      %v2893 = vadd.f32 %v2864, %v2892
      %2894 = vmatmul.bf16.gmra.mxu0 %v1809
      %v2895 = vpop.f32.mrf.mxu0
      %v2896 = vadd.f32 %v2867, %v2895
      %v2897 = vpop.f32.mrf.mxu0
      %v2898 = vadd.f32 %v2869, %v2897
      %2899 = vmatmul.bf16.gmra.mxu0 %v1813
      %v2900 = vpop.f32.mrf.mxu0
      %v2901 = vadd.f32 %v2872, %v2900
      %v2902 = vpop.f32.mrf.mxu0
      %v2903 = vadd.f32 %v2874, %v2902
      %2904 = vmatmul.bf16.gmra.mxu0 %v1817
      %v2905 = vpop.f32.mrf.mxu0
      %v2906 = vadd.f32 %v2877, %v2905
      %v2907 = vpop.f32.mrf.mxu0
      %v2908 = vadd.f32 %v2879, %v2907
      %2909 = vdwg.mxu0
      %2910 = vmatpush.bf16.msra.mxu0 %v2346
      %2911 = vmatpush.bf16.msra.mxu0 %v2342
      %2912 = vmatpush.bf16.msra.mxu0 %v2338
      %2913 = vmatpush.bf16.msra.mxu0 %v2334
      %2914 = vmatpush.bf16.msra.mxu0 %v2330
      %2915 = vmatpush.bf16.msra.mxu0 %v2326
      %2916 = vmatpush.bf16.msra.mxu0 %v2322
      %2917 = vmatpush.bf16.msra.mxu0 %v2318
      %2918 = vmatmul.bf16.gmra.mxu0 %v1806
      %v2919 = vpop.f32.mrf.mxu0
      %v2920 = vadd.f32 %v2891, %v2919
      %v2921 = vpop.f32.mrf.mxu0
      %v2922 = vadd.f32 %v2893, %v2921
      %2923 = vmatmul.bf16.gmra.mxu0 %v1810
      %v2924 = vpop.f32.mrf.mxu0
      %v2925 = vadd.f32 %v2896, %v2924
      %v2926 = vpop.f32.mrf.mxu0
      %v2927 = vadd.f32 %v2898, %v2926
      %2928 = vmatmul.bf16.gmra.mxu0 %v1814
      %v2929 = vpop.f32.mrf.mxu0
      %v2930 = vadd.f32 %v2901, %v2929
      %v2931 = vpop.f32.mrf.mxu0
      %v2932 = vadd.f32 %v2903, %v2931
      %2933 = vmatmul.bf16.gmra.mxu0 %v1818
      %v2934 = vpop.f32.mrf.mxu0
      %v2935 = vadd.f32 %v2906, %v2934
      %v2936 = vpop.f32.mrf.mxu0
      %v2937 = vadd.f32 %v2908, %v2936
      %2938 = vdwg.mxu0
      %v2939 = vld [vmem:[%s2 + $0x400] sm:$0xff]
      %v2940 = vld [vmem:[%s2 + $0x408] sm:$0xff]
      %v2941 = vld [vmem:[%s2 + $0x410] sm:$0xff]
      %v2942 = vld [vmem:[%s2 + $0x418] sm:$0xff]
      %v2943 = vld [vmem:[%s2 + $0x420] sm:$0xff]
      %v2944 = vld [vmem:[%s2 + $0x428] sm:$0xff]
      %v2945 = vld [vmem:[%s2 + $0x430] sm:$0xff]
      %v2946 = vld [vmem:[%s2 + $0x438] sm:$0xff]
      %v2947 = vld [vmem:[%s2 + $0x440] sm:$0xff]
      %v2948 = vld [vmem:[%s2 + $0x448] sm:$0xff]
      %v2949 = vld [vmem:[%s2 + $0x450] sm:$0xff]
      %v2950 = vld [vmem:[%s2 + $0x458] sm:$0xff]
      %v2951 = vld [vmem:[%s2 + $0x460] sm:$0xff]
      %v2952 = vld [vmem:[%s2 + $0x468] sm:$0xff]
      %v2953 = vld [vmem:[%s2 + $0x470] sm:$0xff]
      %v2954 = vld [vmem:[%s2 + $0x478] sm:$0xff]
      %v2955 = vld [vmem:[%s2 + $0x480] sm:$0xff]
      %v2956 = vld [vmem:[%s2 + $0x488] sm:$0xff]
      %v2957 = vld [vmem:[%s2 + $0x490] sm:$0xff]
      %v2958 = vld [vmem:[%s2 + $0x498] sm:$0xff]
      %v2959 = vld [vmem:[%s2 + $0x4a0] sm:$0xff]
      %v2960 = vld [vmem:[%s2 + $0x4a8] sm:$0xff]
      %v2961 = vld [vmem:[%s2 + $0x4b0] sm:$0xff]
      %v2962 = vld [vmem:[%s2 + $0x4b8] sm:$0xff]
      %v2963 = vld [vmem:[%s2 + $0x4c0] sm:$0xff]
      %v2964 = vld [vmem:[%s2 + $0x4c8] sm:$0xff]
      %v2965 = vld [vmem:[%s2 + $0x4d0] sm:$0xff]
      %v2966 = vld [vmem:[%s2 + $0x4d8] sm:$0xff]
      %v2967 = vld [vmem:[%s2 + $0x4e0] sm:$0xff]
      %v2968 = vld [vmem:[%s2 + $0x4e8] sm:$0xff]
      %v2969 = vld [vmem:[%s2 + $0x4f0] sm:$0xff]
      %v2970 = vld [vmem:[%s2 + $0x4f8] sm:$0xff]
      %v2971 = vld [vmem:[%s2 + $0x500] sm:$0xff]
      %v2972 = vld [vmem:[%s2 + $0x508] sm:$0xff]
      %v2973 = vld [vmem:[%s2 + $0x510] sm:$0xff]
      %v2974 = vld [vmem:[%s2 + $0x518] sm:$0xff]
      %v2975 = vld [vmem:[%s2 + $0x520] sm:$0xff]
      %v2976 = vld [vmem:[%s2 + $0x528] sm:$0xff]
      %v2977 = vld [vmem:[%s2 + $0x530] sm:$0xff]
      %v2978 = vld [vmem:[%s2 + $0x538] sm:$0xff]
      %v2979 = vld [vmem:[%s2 + $0x540] sm:$0xff]
      %v2980 = vld [vmem:[%s2 + $0x548] sm:$0xff]
      %v2981 = vld [vmem:[%s2 + $0x550] sm:$0xff]
      %v2982 = vld [vmem:[%s2 + $0x558] sm:$0xff]
      %v2983 = vld [vmem:[%s2 + $0x560] sm:$0xff]
      %v2984 = vld [vmem:[%s2 + $0x568] sm:$0xff]
      %v2985 = vld [vmem:[%s2 + $0x570] sm:$0xff]
      %v2986 = vld [vmem:[%s2 + $0x578] sm:$0xff]
      %v2987 = vld [vmem:[%s2 + $0x580] sm:$0xff]
      %v2988 = vld [vmem:[%s2 + $0x588] sm:$0xff]
      %v2989 = vld [vmem:[%s2 + $0x590] sm:$0xff]
      %v2990 = vld [vmem:[%s2 + $0x598] sm:$0xff]
      %v2991 = vld [vmem:[%s2 + $0x5a0] sm:$0xff]
      %v2992 = vld [vmem:[%s2 + $0x5a8] sm:$0xff]
      %v2993 = vld [vmem:[%s2 + $0x5b0] sm:$0xff]
      %v2994 = vld [vmem:[%s2 + $0x5b8] sm:$0xff]
      %v2995 = vld [vmem:[%s2 + $0x5c0] sm:$0xff]
      %v2996 = vld [vmem:[%s2 + $0x5c8] sm:$0xff]
      %v2997 = vld [vmem:[%s2 + $0x5d0] sm:$0xff]
      %v2998 = vld [vmem:[%s2 + $0x5d8] sm:$0xff]
      %v2999 = vld [vmem:[%s2 + $0x5e0] sm:$0xff]
      %v3000 = vld [vmem:[%s2 + $0x5e8] sm:$0xff]
      %v3001 = vld [vmem:[%s2 + $0x5f0] sm:$0xff]
      %v3002 = vld [vmem:[%s2 + $0x5f8] sm:$0xff]
      %v3003 = vld [vmem:[%s2 + $0x600] sm:$0xff]
      %v3004 = vld [vmem:[%s2 + $0x608] sm:$0xff]
      %v3005 = vld [vmem:[%s2 + $0x610] sm:$0xff]
      %v3006 = vld [vmem:[%s2 + $0x618] sm:$0xff]
      %v3007 = vld [vmem:[%s2 + $0x620] sm:$0xff]
      %v3008 = vld [vmem:[%s2 + $0x628] sm:$0xff]
      %v3009 = vld [vmem:[%s2 + $0x630] sm:$0xff]
      %v3010 = vld [vmem:[%s2 + $0x638] sm:$0xff]
      %v3011 = vld [vmem:[%s2 + $0x640] sm:$0xff]
      %v3012 = vld [vmem:[%s2 + $0x648] sm:$0xff]
      %v3013 = vld [vmem:[%s2 + $0x650] sm:$0xff]
      %v3014 = vld [vmem:[%s2 + $0x658] sm:$0xff]
      %v3015 = vld [vmem:[%s2 + $0x660] sm:$0xff]
      %v3016 = vld [vmem:[%s2 + $0x668] sm:$0xff]
      %v3017 = vld [vmem:[%s2 + $0x670] sm:$0xff]
      %v3018 = vld [vmem:[%s2 + $0x678] sm:$0xff]
      %v3019 = vld [vmem:[%s2 + $0x680] sm:$0xff]
      %v3020 = vld [vmem:[%s2 + $0x688] sm:$0xff]
      %v3021 = vld [vmem:[%s2 + $0x690] sm:$0xff]
      %v3022 = vld [vmem:[%s2 + $0x698] sm:$0xff]
      %v3023 = vld [vmem:[%s2 + $0x6a0] sm:$0xff]
      %v3024 = vld [vmem:[%s2 + $0x6a8] sm:$0xff]
      %v3025 = vld [vmem:[%s2 + $0x6b0] sm:$0xff]
      %v3026 = vld [vmem:[%s2 + $0x6b8] sm:$0xff]
      %v3027 = vld [vmem:[%s2 + $0x6c0] sm:$0xff]
      %v3028 = vld [vmem:[%s2 + $0x6c8] sm:$0xff]
      %v3029 = vld [vmem:[%s2 + $0x6d0] sm:$0xff]
      %v3030 = vld [vmem:[%s2 + $0x6d8] sm:$0xff]
      %v3031 = vld [vmem:[%s2 + $0x6e0] sm:$0xff]
      %v3032 = vld [vmem:[%s2 + $0x6e8] sm:$0xff]
      %v3033 = vld [vmem:[%s2 + $0x6f0] sm:$0xff]
      %v3034 = vld [vmem:[%s2 + $0x6f8] sm:$0xff]
      %v3035 = vld [vmem:[%s2 + $0x700] sm:$0xff]
      %v3036 = vld [vmem:[%s2 + $0x708] sm:$0xff]
      %v3037 = vld [vmem:[%s2 + $0x710] sm:$0xff]
      %v3038 = vld [vmem:[%s2 + $0x718] sm:$0xff]
      %v3039 = vld [vmem:[%s2 + $0x720] sm:$0xff]
      %v3040 = vld [vmem:[%s2 + $0x728] sm:$0xff]
      %v3041 = vld [vmem:[%s2 + $0x730] sm:$0xff]
      %v3042 = vld [vmem:[%s2 + $0x738] sm:$0xff]
      %v3043 = vld [vmem:[%s2 + $0x740] sm:$0xff]
      %v3044 = vld [vmem:[%s2 + $0x748] sm:$0xff]
      %v3045 = vld [vmem:[%s2 + $0x750] sm:$0xff]
      %v3046 = vld [vmem:[%s2 + $0x758] sm:$0xff]
      %v3047 = vld [vmem:[%s2 + $0x760] sm:$0xff]
      %v3048 = vld [vmem:[%s2 + $0x768] sm:$0xff]
      %v3049 = vld [vmem:[%s2 + $0x770] sm:$0xff]
      %v3050 = vld [vmem:[%s2 + $0x778] sm:$0xff]
      %v3051 = vld [vmem:[%s2 + $0x780] sm:$0xff]
      %v3052 = vld [vmem:[%s2 + $0x788] sm:$0xff]
      %v3053 = vld [vmem:[%s2 + $0x790] sm:$0xff]
      %v3054 = vld [vmem:[%s2 + $0x798] sm:$0xff]
      %v3055 = vld [vmem:[%s2 + $0x7a0] sm:$0xff]
      %v3056 = vld [vmem:[%s2 + $0x7a8] sm:$0xff]
      %v3057 = vld [vmem:[%s2 + $0x7b0] sm:$0xff]
      %v3058 = vld [vmem:[%s2 + $0x7b8] sm:$0xff]
      %v3059 = vld [vmem:[%s2 + $0x7c0] sm:$0xff]
      %v3060 = vld [vmem:[%s2 + $0x7c8] sm:$0xff]
      %v3061 = vld [vmem:[%s2 + $0x7d0] sm:$0xff]
      %v3062 = vld [vmem:[%s2 + $0x7d8] sm:$0xff]
      %v3063 = vld [vmem:[%s2 + $0x7e0] sm:$0xff]
      %v3064 = vld [vmem:[%s2 + $0x7e8] sm:$0xff]
      %v3065 = vld [vmem:[%s2 + $0x7f0] sm:$0xff]
      %v3066 = vld [vmem:[%s2 + $0x7f8] sm:$0xff]
      %v3067 = vld [vmem:[%s2 + $0xc00] sm:$0xff]
      %v3068 = vld [vmem:[%s2 + $0xc08] sm:$0xff]
      %v3069 = vld [vmem:[%s2 + $0xc10] sm:$0xff]
      %v3070 = vld [vmem:[%s2 + $0xc18] sm:$0xff]
      %v3071 = vld [vmem:[%s2 + $0xc20] sm:$0xff]
      %v3072 = vld [vmem:[%s2 + $0xc28] sm:$0xff]
      %v3073 = vld [vmem:[%s2 + $0xc30] sm:$0xff]
      %v3074 = vld [vmem:[%s2 + $0xc38] sm:$0xff]
      %v3075 = vld [vmem:[%s2 + $0xc40] sm:$0xff]
      %v3076 = vld [vmem:[%s2 + $0xc48] sm:$0xff]
      %v3077 = vld [vmem:[%s2 + $0xc50] sm:$0xff]
      %v3078 = vld [vmem:[%s2 + $0xc58] sm:$0xff]
      %v3079 = vld [vmem:[%s2 + $0xc60] sm:$0xff]
      %v3080 = vld [vmem:[%s2 + $0xc68] sm:$0xff]
      %v3081 = vld [vmem:[%s2 + $0xc70] sm:$0xff]
      %v3082 = vld [vmem:[%s2 + $0xc78] sm:$0xff]
      %v3083 = vld [vmem:[%s2 + $0xc80] sm:$0xff]
      %v3084 = vld [vmem:[%s2 + $0xc88] sm:$0xff]
      %v3085 = vld [vmem:[%s2 + $0xc90] sm:$0xff]
      %v3086 = vld [vmem:[%s2 + $0xc98] sm:$0xff]
      %v3087 = vld [vmem:[%s2 + $0xca0] sm:$0xff]
      %v3088 = vld [vmem:[%s2 + $0xca8] sm:$0xff]
      %v3089 = vld [vmem:[%s2 + $0xcb0] sm:$0xff]
      %v3090 = vld [vmem:[%s2 + $0xcb8] sm:$0xff]
      %v3091 = vld [vmem:[%s2 + $0xcc0] sm:$0xff]
      %v3092 = vld [vmem:[%s2 + $0xcc8] sm:$0xff]
      %v3093 = vld [vmem:[%s2 + $0xcd0] sm:$0xff]
      %v3094 = vld [vmem:[%s2 + $0xcd8] sm:$0xff]
      %v3095 = vld [vmem:[%s2 + $0xce0] sm:$0xff]
      %v3096 = vld [vmem:[%s2 + $0xce8] sm:$0xff]
      %v3097 = vld [vmem:[%s2 + $0xcf0] sm:$0xff]
      %v3098 = vld [vmem:[%s2 + $0xcf8] sm:$0xff]
      %v3099 = vld [vmem:[%s2 + $0xd00] sm:$0xff]
      %v3100 = vld [vmem:[%s2 + $0xd08] sm:$0xff]
      %v3101 = vld [vmem:[%s2 + $0xd10] sm:$0xff]
      %v3102 = vld [vmem:[%s2 + $0xd18] sm:$0xff]
      %v3103 = vld [vmem:[%s2 + $0xd20] sm:$0xff]
      %v3104 = vld [vmem:[%s2 + $0xd28] sm:$0xff]
      %v3105 = vld [vmem:[%s2 + $0xd30] sm:$0xff]
      %v3106 = vld [vmem:[%s2 + $0xd38] sm:$0xff]
      %v3107 = vld [vmem:[%s2 + $0xd40] sm:$0xff]
      %v3108 = vld [vmem:[%s2 + $0xd48] sm:$0xff]
      %v3109 = vld [vmem:[%s2 + $0xd50] sm:$0xff]
      %v3110 = vld [vmem:[%s2 + $0xd58] sm:$0xff]
      %v3111 = vld [vmem:[%s2 + $0xd60] sm:$0xff]
      %v3112 = vld [vmem:[%s2 + $0xd68] sm:$0xff]
      %v3113 = vld [vmem:[%s2 + $0xd70] sm:$0xff]
      %v3114 = vld [vmem:[%s2 + $0xd78] sm:$0xff]
      %v3115 = vld [vmem:[%s2 + $0xd80] sm:$0xff]
      %v3116 = vld [vmem:[%s2 + $0xd88] sm:$0xff]
      %v3117 = vld [vmem:[%s2 + $0xd90] sm:$0xff]
      %v3118 = vld [vmem:[%s2 + $0xd98] sm:$0xff]
      %v3119 = vld [vmem:[%s2 + $0xda0] sm:$0xff]
      %v3120 = vld [vmem:[%s2 + $0xda8] sm:$0xff]
      %v3121 = vld [vmem:[%s2 + $0xdb0] sm:$0xff]
      %v3122 = vld [vmem:[%s2 + $0xdb8] sm:$0xff]
      %v3123 = vld [vmem:[%s2 + $0xdc0] sm:$0xff]
      %v3124 = vld [vmem:[%s2 + $0xdc8] sm:$0xff]
      %v3125 = vld [vmem:[%s2 + $0xdd0] sm:$0xff]
      %v3126 = vld [vmem:[%s2 + $0xdd8] sm:$0xff]
      %v3127 = vld [vmem:[%s2 + $0xde0] sm:$0xff]
      %v3128 = vld [vmem:[%s2 + $0xde8] sm:$0xff]
      %v3129 = vld [vmem:[%s2 + $0xdf0] sm:$0xff]
      %v3130 = vld [vmem:[%s2 + $0xdf8] sm:$0xff]
      %v3131 = vld [vmem:[%s2 + $0xe00] sm:$0xff]
      %v3132 = vld [vmem:[%s2 + $0xe08] sm:$0xff]
      %v3133 = vld [vmem:[%s2 + $0xe10] sm:$0xff]
      %v3134 = vld [vmem:[%s2 + $0xe18] sm:$0xff]
      %v3135 = vld [vmem:[%s2 + $0xe20] sm:$0xff]
      %v3136 = vld [vmem:[%s2 + $0xe28] sm:$0xff]
      %v3137 = vld [vmem:[%s2 + $0xe30] sm:$0xff]
      %v3138 = vld [vmem:[%s2 + $0xe38] sm:$0xff]
      %v3139 = vld [vmem:[%s2 + $0xe40] sm:$0xff]
      %v3140 = vld [vmem:[%s2 + $0xe48] sm:$0xff]
      %v3141 = vld [vmem:[%s2 + $0xe50] sm:$0xff]
      %v3142 = vld [vmem:[%s2 + $0xe58] sm:$0xff]
      %v3143 = vld [vmem:[%s2 + $0xe60] sm:$0xff]
      %v3144 = vld [vmem:[%s2 + $0xe68] sm:$0xff]
      %v3145 = vld [vmem:[%s2 + $0xe70] sm:$0xff]
      %v3146 = vld [vmem:[%s2 + $0xe78] sm:$0xff]
      %v3147 = vld [vmem:[%s2 + $0xe80] sm:$0xff]
      %v3148 = vld [vmem:[%s2 + $0xe88] sm:$0xff]
      %v3149 = vld [vmem:[%s2 + $0xe90] sm:$0xff]
      %v3150 = vld [vmem:[%s2 + $0xe98] sm:$0xff]
      %v3151 = vld [vmem:[%s2 + $0xea0] sm:$0xff]
      %v3152 = vld [vmem:[%s2 + $0xea8] sm:$0xff]
      %v3153 = vld [vmem:[%s2 + $0xeb0] sm:$0xff]
      %v3154 = vld [vmem:[%s2 + $0xeb8] sm:$0xff]
      %v3155 = vld [vmem:[%s2 + $0xec0] sm:$0xff]
      %v3156 = vld [vmem:[%s2 + $0xec8] sm:$0xff]
      %v3157 = vld [vmem:[%s2 + $0xed0] sm:$0xff]
      %v3158 = vld [vmem:[%s2 + $0xed8] sm:$0xff]
      %v3159 = vld [vmem:[%s2 + $0xee0] sm:$0xff]
      %v3160 = vld [vmem:[%s2 + $0xee8] sm:$0xff]
      %v3161 = vld [vmem:[%s2 + $0xef0] sm:$0xff]
      %v3162 = vld [vmem:[%s2 + $0xef8] sm:$0xff]
      %v3163 = vld [vmem:[%s2 + $0xf00] sm:$0xff]
      %v3164 = vld [vmem:[%s2 + $0xf08] sm:$0xff]
      %v3165 = vld [vmem:[%s2 + $0xf10] sm:$0xff]
      %v3166 = vld [vmem:[%s2 + $0xf18] sm:$0xff]
      %v3167 = vld [vmem:[%s2 + $0xf20] sm:$0xff]
      %v3168 = vld [vmem:[%s2 + $0xf28] sm:$0xff]
      %v3169 = vld [vmem:[%s2 + $0xf30] sm:$0xff]
      %v3170 = vld [vmem:[%s2 + $0xf38] sm:$0xff]
      %v3171 = vld [vmem:[%s2 + $0xf40] sm:$0xff]
      %v3172 = vld [vmem:[%s2 + $0xf48] sm:$0xff]
      %v3173 = vld [vmem:[%s2 + $0xf50] sm:$0xff]
      %v3174 = vld [vmem:[%s2 + $0xf58] sm:$0xff]
      %v3175 = vld [vmem:[%s2 + $0xf60] sm:$0xff]
      %v3176 = vld [vmem:[%s2 + $0xf68] sm:$0xff]
      %v3177 = vld [vmem:[%s2 + $0xf70] sm:$0xff]
      %v3178 = vld [vmem:[%s2 + $0xf78] sm:$0xff]
      %v3179 = vld [vmem:[%s2 + $0xf80] sm:$0xff]
      %v3180 = vld [vmem:[%s2 + $0xf88] sm:$0xff]
      %v3181 = vld [vmem:[%s2 + $0xf90] sm:$0xff]
      %v3182 = vld [vmem:[%s2 + $0xf98] sm:$0xff]
      %v3183 = vld [vmem:[%s2 + $0xfa0] sm:$0xff]
      %v3184 = vld [vmem:[%s2 + $0xfa8] sm:$0xff]
      %v3185 = vld [vmem:[%s2 + $0xfb0] sm:$0xff]
      %v3186 = vld [vmem:[%s2 + $0xfb8] sm:$0xff]
      %v3187 = vld [vmem:[%s2 + $0xfc0] sm:$0xff]
      %v3188 = vld [vmem:[%s2 + $0xfc8] sm:$0xff]
      %v3189 = vld [vmem:[%s2 + $0xfd0] sm:$0xff]
      %v3190 = vld [vmem:[%s2 + $0xfd8] sm:$0xff]
      %v3191 = vld [vmem:[%s2 + $0xfe0] sm:$0xff]
      %v3192 = vld [vmem:[%s2 + $0xfe8] sm:$0xff]
      %v3193 = vld [vmem:[%s2 + $0xff0] sm:$0xff]
      %v3194 = vld [vmem:[%s2 + $0xff8] sm:$0xff]
      %v3323 = vunpack.c.l.b16 %v3067
      %v3324 = vunpack.c.h.b16 %v3067
      %v3325 = vunpack.c.l.b16 %v3068
      %v3326 = vunpack.c.h.b16 %v3068
      %v3327 = vunpack.c.l.b16 %v3069
      %v3328 = vunpack.c.h.b16 %v3069
      %v3329 = vunpack.c.l.b16 %v3070
      %v3330 = vunpack.c.h.b16 %v3070
      %v3331 = vunpack.c.l.b16 %v3071
      %v3332 = vunpack.c.h.b16 %v3071
      %v3333 = vunpack.c.l.b16 %v3072
      %v3334 = vunpack.c.h.b16 %v3072
      %v3335 = vunpack.c.l.b16 %v3073
      %v3336 = vunpack.c.h.b16 %v3073
      %v3337 = vunpack.c.l.b16 %v3074
      %v3338 = vunpack.c.h.b16 %v3074
      %v3339 = vunpack.c.l.b16 %v3075
      %v3340 = vunpack.c.h.b16 %v3075
      %v3341 = vunpack.c.l.b16 %v3076
      %v3342 = vunpack.c.h.b16 %v3076
      %v3343 = vunpack.c.l.b16 %v3077
      %v3344 = vunpack.c.h.b16 %v3077
      %v3345 = vunpack.c.l.b16 %v3078
      %v3346 = vunpack.c.h.b16 %v3078
      %v3347 = vunpack.c.l.b16 %v3079
      %v3348 = vunpack.c.h.b16 %v3079
      %v3349 = vunpack.c.l.b16 %v3080
      %v3350 = vunpack.c.h.b16 %v3080
      %v3351 = vunpack.c.l.b16 %v3081
      %v3352 = vunpack.c.h.b16 %v3081
      %v3353 = vunpack.c.l.b16 %v3082
      %v3354 = vunpack.c.h.b16 %v3082
      %v3355 = vunpack.c.l.b16 %v3083
      %v3356 = vunpack.c.h.b16 %v3083
      %v3357 = vunpack.c.l.b16 %v3084
      %v3358 = vunpack.c.h.b16 %v3084
      %v3359 = vunpack.c.l.b16 %v3085
      %v3360 = vunpack.c.h.b16 %v3085
      %v3361 = vunpack.c.l.b16 %v3086
      %v3362 = vunpack.c.h.b16 %v3086
      %v3363 = vunpack.c.l.b16 %v3087
      %v3364 = vunpack.c.h.b16 %v3087
      %v3365 = vunpack.c.l.b16 %v3088
      %v3366 = vunpack.c.h.b16 %v3088
      %v3367 = vunpack.c.l.b16 %v3089
      %v3368 = vunpack.c.h.b16 %v3089
      %v3369 = vunpack.c.l.b16 %v3090
      %v3370 = vunpack.c.h.b16 %v3090
      %v3371 = vunpack.c.l.b16 %v3091
      %v3372 = vunpack.c.h.b16 %v3091
      %v3373 = vunpack.c.l.b16 %v3092
      %v3374 = vunpack.c.h.b16 %v3092
      %v3375 = vunpack.c.l.b16 %v3093
      %v3376 = vunpack.c.h.b16 %v3093
      %v3377 = vunpack.c.l.b16 %v3094
      %v3378 = vunpack.c.h.b16 %v3094
      %v3379 = vunpack.c.l.b16 %v3095
      %v3380 = vunpack.c.h.b16 %v3095
      %v3381 = vunpack.c.l.b16 %v3096
      %v3382 = vunpack.c.h.b16 %v3096
      %v3383 = vunpack.c.l.b16 %v3097
      %v3384 = vunpack.c.h.b16 %v3097
      %v3385 = vunpack.c.l.b16 %v3098
      %v3386 = vunpack.c.h.b16 %v3098
      %v3387 = vunpack.c.l.b16 %v3099
      %v3388 = vunpack.c.h.b16 %v3099
      %v3389 = vunpack.c.l.b16 %v3100
      %v3390 = vunpack.c.h.b16 %v3100
      %v3391 = vunpack.c.l.b16 %v3101
      %v3392 = vunpack.c.h.b16 %v3101
      %v3393 = vunpack.c.l.b16 %v3102
      %v3394 = vunpack.c.h.b16 %v3102
      %v3395 = vunpack.c.l.b16 %v3103
      %v3396 = vunpack.c.h.b16 %v3103
      %v3397 = vunpack.c.l.b16 %v3104
      %v3398 = vunpack.c.h.b16 %v3104
      %v3399 = vunpack.c.l.b16 %v3105
      %v3400 = vunpack.c.h.b16 %v3105
      %v3401 = vunpack.c.l.b16 %v3106
      %v3402 = vunpack.c.h.b16 %v3106
      %v3403 = vunpack.c.l.b16 %v3107
      %v3404 = vunpack.c.h.b16 %v3107
      %v3405 = vunpack.c.l.b16 %v3108
      %v3406 = vunpack.c.h.b16 %v3108
      %v3407 = vunpack.c.l.b16 %v3109
      %v3408 = vunpack.c.h.b16 %v3109
      %v3409 = vunpack.c.l.b16 %v3110
      %v3410 = vunpack.c.h.b16 %v3110
      %v3411 = vunpack.c.l.b16 %v3111
      %v3412 = vunpack.c.h.b16 %v3111
      %v3413 = vunpack.c.l.b16 %v3112
      %v3414 = vunpack.c.h.b16 %v3112
      %v3415 = vunpack.c.l.b16 %v3113
      %v3416 = vunpack.c.h.b16 %v3113
      %v3417 = vunpack.c.l.b16 %v3114
      %v3418 = vunpack.c.h.b16 %v3114
      %v3419 = vunpack.c.l.b16 %v3115
      %v3420 = vunpack.c.h.b16 %v3115
      %v3421 = vunpack.c.l.b16 %v3116
      %v3422 = vunpack.c.h.b16 %v3116
      %v3423 = vunpack.c.l.b16 %v3117
      %v3424 = vunpack.c.h.b16 %v3117
      %v3425 = vunpack.c.l.b16 %v3118
      %v3426 = vunpack.c.h.b16 %v3118
      %v3427 = vunpack.c.l.b16 %v3119
      %v3428 = vunpack.c.h.b16 %v3119
      %v3429 = vunpack.c.l.b16 %v3120
      %v3430 = vunpack.c.h.b16 %v3120
      %v3431 = vunpack.c.l.b16 %v3121
      %v3432 = vunpack.c.h.b16 %v3121
      %v3433 = vunpack.c.l.b16 %v3122
      %v3434 = vunpack.c.h.b16 %v3122
      %v3435 = vunpack.c.l.b16 %v3123
      %v3436 = vunpack.c.h.b16 %v3123
      %v3437 = vunpack.c.l.b16 %v3124
      %v3438 = vunpack.c.h.b16 %v3124
      %v3439 = vunpack.c.l.b16 %v3125
      %v3440 = vunpack.c.h.b16 %v3125
      %v3441 = vunpack.c.l.b16 %v3126
      %v3442 = vunpack.c.h.b16 %v3126
      %v3443 = vunpack.c.l.b16 %v3127
      %v3444 = vunpack.c.h.b16 %v3127
      %v3445 = vunpack.c.l.b16 %v3128
      %v3446 = vunpack.c.h.b16 %v3128
      %v3447 = vunpack.c.l.b16 %v3129
      %v3448 = vunpack.c.h.b16 %v3129
      %v3449 = vunpack.c.l.b16 %v3130
      %v3450 = vunpack.c.h.b16 %v3130
      %v3451 = vunpack.c.l.b16 %v3131
      %v3452 = vunpack.c.h.b16 %v3131
      %v3453 = vunpack.c.l.b16 %v3132
      %v3454 = vunpack.c.h.b16 %v3132
      %v3455 = vunpack.c.l.b16 %v3133
      %v3456 = vunpack.c.h.b16 %v3133
      %v3457 = vunpack.c.l.b16 %v3134
      %v3458 = vunpack.c.h.b16 %v3134
      %v3459 = vunpack.c.l.b16 %v3135
      %v3460 = vunpack.c.h.b16 %v3135
      %v3461 = vunpack.c.l.b16 %v3136
      %v3462 = vunpack.c.h.b16 %v3136
      %v3463 = vunpack.c.l.b16 %v3137
      %v3464 = vunpack.c.h.b16 %v3137
      %v3465 = vunpack.c.l.b16 %v3138
      %v3466 = vunpack.c.h.b16 %v3138
      %v3467 = vunpack.c.l.b16 %v3139
      %v3468 = vunpack.c.h.b16 %v3139
      %v3469 = vunpack.c.l.b16 %v3140
      %v3470 = vunpack.c.h.b16 %v3140
      %v3471 = vunpack.c.l.b16 %v3141
      %v3472 = vunpack.c.h.b16 %v3141
      %v3473 = vunpack.c.l.b16 %v3142
      %v3474 = vunpack.c.h.b16 %v3142
      %v3475 = vunpack.c.l.b16 %v3143
      %v3476 = vunpack.c.h.b16 %v3143
      %v3477 = vunpack.c.l.b16 %v3144
      %v3478 = vunpack.c.h.b16 %v3144
      %v3479 = vunpack.c.l.b16 %v3145
      %v3480 = vunpack.c.h.b16 %v3145
      %v3481 = vunpack.c.l.b16 %v3146
      %v3482 = vunpack.c.h.b16 %v3146
      %v3483 = vunpack.c.l.b16 %v3147
      %v3484 = vunpack.c.h.b16 %v3147
      %v3485 = vunpack.c.l.b16 %v3148
      %v3486 = vunpack.c.h.b16 %v3148
      %v3487 = vunpack.c.l.b16 %v3149
      %v3488 = vunpack.c.h.b16 %v3149
      %v3489 = vunpack.c.l.b16 %v3150
      %v3490 = vunpack.c.h.b16 %v3150
      %v3491 = vunpack.c.l.b16 %v3151
      %v3492 = vunpack.c.h.b16 %v3151
      %v3493 = vunpack.c.l.b16 %v3152
      %v3494 = vunpack.c.h.b16 %v3152
      %v3495 = vunpack.c.l.b16 %v3153
      %v3496 = vunpack.c.h.b16 %v3153
      %v3497 = vunpack.c.l.b16 %v3154
      %v3498 = vunpack.c.h.b16 %v3154
      %v3499 = vunpack.c.l.b16 %v3155
      %v3500 = vunpack.c.h.b16 %v3155
      %v3501 = vunpack.c.l.b16 %v3156
      %v3502 = vunpack.c.h.b16 %v3156
      %v3503 = vunpack.c.l.b16 %v3157
      %v3504 = vunpack.c.h.b16 %v3157
      %v3505 = vunpack.c.l.b16 %v3158
      %v3506 = vunpack.c.h.b16 %v3158
      %v3507 = vunpack.c.l.b16 %v3159
      %v3508 = vunpack.c.h.b16 %v3159
      %v3509 = vunpack.c.l.b16 %v3160
      %v3510 = vunpack.c.h.b16 %v3160
      %v3511 = vunpack.c.l.b16 %v3161
      %v3512 = vunpack.c.h.b16 %v3161
      %v3513 = vunpack.c.l.b16 %v3162
      %v3514 = vunpack.c.h.b16 %v3162
      %v3515 = vunpack.c.l.b16 %v3163
      %v3516 = vunpack.c.h.b16 %v3163
      %v3517 = vunpack.c.l.b16 %v3164
      %v3518 = vunpack.c.h.b16 %v3164
      %v3519 = vunpack.c.l.b16 %v3165
      %v3520 = vunpack.c.h.b16 %v3165
      %v3521 = vunpack.c.l.b16 %v3166
      %v3522 = vunpack.c.h.b16 %v3166
      %v3523 = vunpack.c.l.b16 %v3167
      %v3524 = vunpack.c.h.b16 %v3167
      %v3525 = vunpack.c.l.b16 %v3168
      %v3526 = vunpack.c.h.b16 %v3168
      %v3527 = vunpack.c.l.b16 %v3169
      %v3528 = vunpack.c.h.b16 %v3169
      %v3529 = vunpack.c.l.b16 %v3170
      %v3530 = vunpack.c.h.b16 %v3170
      %v3531 = vunpack.c.l.b16 %v3171
      %v3532 = vunpack.c.h.b16 %v3171
      %v3533 = vunpack.c.l.b16 %v3172
      %v3534 = vunpack.c.h.b16 %v3172
      %v3535 = vunpack.c.l.b16 %v3173
      %v3536 = vunpack.c.h.b16 %v3173
      %v3537 = vunpack.c.l.b16 %v3174
      %v3538 = vunpack.c.h.b16 %v3174
      %v3539 = vunpack.c.l.b16 %v3175
      %v3540 = vunpack.c.h.b16 %v3175
      %v3541 = vunpack.c.l.b16 %v3176
      %v3542 = vunpack.c.h.b16 %v3176
      %v3543 = vunpack.c.l.b16 %v3177
      %v3544 = vunpack.c.h.b16 %v3177
      %v3545 = vunpack.c.l.b16 %v3178
      %v3546 = vunpack.c.h.b16 %v3178
      %v3547 = vunpack.c.l.b16 %v3179
      %v3548 = vunpack.c.h.b16 %v3179
      %v3549 = vunpack.c.l.b16 %v3180
      %v3550 = vunpack.c.h.b16 %v3180
      %v3551 = vunpack.c.l.b16 %v3181
      %v3552 = vunpack.c.h.b16 %v3181
      %v3553 = vunpack.c.l.b16 %v3182
      %v3554 = vunpack.c.h.b16 %v3182
      %v3555 = vunpack.c.l.b16 %v3183
      %v3556 = vunpack.c.h.b16 %v3183
      %v3557 = vunpack.c.l.b16 %v3184
      %v3558 = vunpack.c.h.b16 %v3184
      %v3559 = vunpack.c.l.b16 %v3185
      %v3560 = vunpack.c.h.b16 %v3185
      %v3561 = vunpack.c.l.b16 %v3186
      %v3562 = vunpack.c.h.b16 %v3186
      %v3563 = vunpack.c.l.b16 %v3187
      %v3564 = vunpack.c.h.b16 %v3187
      %v3565 = vunpack.c.l.b16 %v3188
      %v3566 = vunpack.c.h.b16 %v3188
      %v3567 = vunpack.c.l.b16 %v3189
      %v3568 = vunpack.c.h.b16 %v3189
      %v3569 = vunpack.c.l.b16 %v3190
      %v3570 = vunpack.c.h.b16 %v3190
      %v3571 = vunpack.c.l.b16 %v3191
      %v3572 = vunpack.c.h.b16 %v3191
      %v3573 = vunpack.c.l.b16 %v3192
      %v3574 = vunpack.c.h.b16 %v3192
      %v3575 = vunpack.c.l.b16 %v3193
      %v3576 = vunpack.c.h.b16 %v3193
      %v3577 = vunpack.c.l.b16 %v3194
      %v3578 = vunpack.c.h.b16 %v3194
      %v3579 = vpack.c.b16 %v3327, %v3323
      %v3580 = vpack.c.b16 %v3328, %v3324
      %v3581 = vpack.c.b16 %v3329, %v3325
      %v3582 = vpack.c.b16 %v3330, %v3326
      %v3583 = vpack.c.b16 %v3335, %v3331
      %v3584 = vpack.c.b16 %v3336, %v3332
      %v3585 = vpack.c.b16 %v3337, %v3333
      %v3586 = vpack.c.b16 %v3338, %v3334
      %v3587 = vpack.c.b16 %v3343, %v3339
      %v3588 = vpack.c.b16 %v3344, %v3340
      %v3589 = vpack.c.b16 %v3345, %v3341
      %v3590 = vpack.c.b16 %v3346, %v3342
      %v3591 = vpack.c.b16 %v3351, %v3347
      %v3592 = vpack.c.b16 %v3352, %v3348
      %v3593 = vpack.c.b16 %v3353, %v3349
      %v3594 = vpack.c.b16 %v3354, %v3350
      %v3595 = vpack.c.b16 %v3359, %v3355
      %v3596 = vpack.c.b16 %v3360, %v3356
      %v3597 = vpack.c.b16 %v3361, %v3357
      %v3598 = vpack.c.b16 %v3362, %v3358
      %v3599 = vpack.c.b16 %v3367, %v3363
      %v3600 = vpack.c.b16 %v3368, %v3364
      %v3601 = vpack.c.b16 %v3369, %v3365
      %v3602 = vpack.c.b16 %v3370, %v3366
      %v3603 = vpack.c.b16 %v3375, %v3371
      %v3604 = vpack.c.b16 %v3376, %v3372
      %v3605 = vpack.c.b16 %v3377, %v3373
      %v3606 = vpack.c.b16 %v3378, %v3374
      %v3607 = vpack.c.b16 %v3383, %v3379
      %v3608 = vpack.c.b16 %v3384, %v3380
      %v3609 = vpack.c.b16 %v3385, %v3381
      %v3610 = vpack.c.b16 %v3386, %v3382
      %v3611 = vpack.c.b16 %v3391, %v3387
      %v3612 = vpack.c.b16 %v3392, %v3388
      %v3613 = vpack.c.b16 %v3393, %v3389
      %v3614 = vpack.c.b16 %v3394, %v3390
      %v3615 = vpack.c.b16 %v3399, %v3395
      %v3616 = vpack.c.b16 %v3400, %v3396
      %v3617 = vpack.c.b16 %v3401, %v3397
      %v3618 = vpack.c.b16 %v3402, %v3398
      %v3619 = vpack.c.b16 %v3407, %v3403
      %v3620 = vpack.c.b16 %v3408, %v3404
      %v3621 = vpack.c.b16 %v3409, %v3405
      %v3622 = vpack.c.b16 %v3410, %v3406
      %v3623 = vpack.c.b16 %v3415, %v3411
      %v3624 = vpack.c.b16 %v3416, %v3412
      %v3625 = vpack.c.b16 %v3417, %v3413
      %v3626 = vpack.c.b16 %v3418, %v3414
      %v3627 = vpack.c.b16 %v3423, %v3419
      %v3628 = vpack.c.b16 %v3424, %v3420
      %v3629 = vpack.c.b16 %v3425, %v3421
      %v3630 = vpack.c.b16 %v3426, %v3422
      %v3631 = vpack.c.b16 %v3431, %v3427
      %v3632 = vpack.c.b16 %v3432, %v3428
      %v3633 = vpack.c.b16 %v3433, %v3429
      %v3634 = vpack.c.b16 %v3434, %v3430
      %v3635 = vpack.c.b16 %v3439, %v3435
      %v3636 = vpack.c.b16 %v3440, %v3436
      %v3637 = vpack.c.b16 %v3441, %v3437
      %v3638 = vpack.c.b16 %v3442, %v3438
      %v3639 = vpack.c.b16 %v3447, %v3443
      %v3640 = vpack.c.b16 %v3448, %v3444
      %v3641 = vpack.c.b16 %v3449, %v3445
      %v3642 = vpack.c.b16 %v3450, %v3446
      %v3643 = vpack.c.b16 %v3455, %v3451
      %v3644 = vpack.c.b16 %v3456, %v3452
      %v3645 = vpack.c.b16 %v3457, %v3453
      %v3646 = vpack.c.b16 %v3458, %v3454
      %v3647 = vpack.c.b16 %v3463, %v3459
      %v3648 = vpack.c.b16 %v3464, %v3460
      %v3649 = vpack.c.b16 %v3465, %v3461
      %v3650 = vpack.c.b16 %v3466, %v3462
      %v3651 = vpack.c.b16 %v3471, %v3467
      %v3652 = vpack.c.b16 %v3472, %v3468
      %v3653 = vpack.c.b16 %v3473, %v3469
      %v3654 = vpack.c.b16 %v3474, %v3470
      %v3655 = vpack.c.b16 %v3479, %v3475
      %v3656 = vpack.c.b16 %v3480, %v3476
      %v3657 = vpack.c.b16 %v3481, %v3477
      %v3658 = vpack.c.b16 %v3482, %v3478
      %v3659 = vpack.c.b16 %v3487, %v3483
      %v3660 = vpack.c.b16 %v3488, %v3484
      %v3661 = vpack.c.b16 %v3489, %v3485
      %v3662 = vpack.c.b16 %v3490, %v3486
      %v3663 = vpack.c.b16 %v3495, %v3491
      %v3664 = vpack.c.b16 %v3496, %v3492
      %v3665 = vpack.c.b16 %v3497, %v3493
      %v3666 = vpack.c.b16 %v3498, %v3494
      %v3667 = vpack.c.b16 %v3503, %v3499
      %v3668 = vpack.c.b16 %v3504, %v3500
      %v3669 = vpack.c.b16 %v3505, %v3501
      %v3670 = vpack.c.b16 %v3506, %v3502
      %v3671 = vpack.c.b16 %v3511, %v3507
      %v3672 = vpack.c.b16 %v3512, %v3508
      %v3673 = vpack.c.b16 %v3513, %v3509
      %v3674 = vpack.c.b16 %v3514, %v3510
      %v3675 = vpack.c.b16 %v3519, %v3515
      %v3676 = vpack.c.b16 %v3520, %v3516
      %v3677 = vpack.c.b16 %v3521, %v3517
      %v3678 = vpack.c.b16 %v3522, %v3518
      %v3679 = vpack.c.b16 %v3527, %v3523
      %v3680 = vpack.c.b16 %v3528, %v3524
      %v3681 = vpack.c.b16 %v3529, %v3525
      %v3682 = vpack.c.b16 %v3530, %v3526
      %v3683 = vpack.c.b16 %v3535, %v3531
      %v3684 = vpack.c.b16 %v3536, %v3532
      %v3685 = vpack.c.b16 %v3537, %v3533
      %v3686 = vpack.c.b16 %v3538, %v3534
      %v3687 = vpack.c.b16 %v3543, %v3539
      %v3688 = vpack.c.b16 %v3544, %v3540
      %v3689 = vpack.c.b16 %v3545, %v3541
      %v3690 = vpack.c.b16 %v3546, %v3542
      %v3691 = vpack.c.b16 %v3551, %v3547
      %v3692 = vpack.c.b16 %v3552, %v3548
      %v3693 = vpack.c.b16 %v3553, %v3549
      %v3694 = vpack.c.b16 %v3554, %v3550
      %v3695 = vpack.c.b16 %v3559, %v3555
      %v3696 = vpack.c.b16 %v3560, %v3556
      %v3697 = vpack.c.b16 %v3561, %v3557
      %v3698 = vpack.c.b16 %v3562, %v3558
      %v3699 = vpack.c.b16 %v3567, %v3563
      %v3700 = vpack.c.b16 %v3568, %v3564
      %v3701 = vpack.c.b16 %v3569, %v3565
      %v3702 = vpack.c.b16 %v3570, %v3566
      %v3703 = vpack.c.b16 %v3575, %v3571
      %v3704 = vpack.c.b16 %v3576, %v3572
      %v3705 = vpack.c.b16 %v3577, %v3573
      %v3706 = vpack.c.b16 %v3578, %v3574
      %3835 = vmatpush.bf16.msra.mxu0 %v3607
      %3836 = vmatpush.bf16.msra.mxu0 %v3603
      %3837 = vmatpush.bf16.msra.mxu0 %v3599
      %3838 = vmatpush.bf16.msra.mxu0 %v3595
      %3839 = vmatpush.bf16.msra.mxu0 %v3591
      %3840 = vmatpush.bf16.msra.mxu0 %v3587
      %3841 = vmatpush.bf16.msra.mxu0 %v3583
      %3842 = vmatpush.bf16.msra.mxu0 %v3579
      %3843 = vmatmul.bf16.gmra.mxu0 %v619
      %v3844 = vpop.f32.mrf.mxu0
      %v3845 = vadd.f32 0.0, %v3844
      %v3846 = vpop.f32.mrf.mxu0
      %v3847 = vadd.f32 0.0, %v3846
      %3848 = vmatmul.bf16.gmra.mxu0 %v623
      %v3849 = vpop.f32.mrf.mxu0
      %v3850 = vadd.f32 0.0, %v3849
      %v3851 = vpop.f32.mrf.mxu0
      %v3852 = vadd.f32 0.0, %v3851
      %3853 = vmatmul.bf16.gmra.mxu0 %v627
      %v3854 = vpop.f32.mrf.mxu0
      %v3855 = vadd.f32 0.0, %v3854
      %v3856 = vpop.f32.mrf.mxu0
      %v3857 = vadd.f32 0.0, %v3856
      %3858 = vmatmul.bf16.gmra.mxu0 %v631
      %v3859 = vpop.f32.mrf.mxu0
      %v3860 = vadd.f32 0.0, %v3859
      %v3861 = vpop.f32.mrf.mxu0
      %v3862 = vadd.f32 0.0, %v3861
      %3863 = vdwg.mxu0
      %3864 = vmatpush.bf16.msra.mxu0 %v3639
      %3865 = vmatpush.bf16.msra.mxu0 %v3635
      %3866 = vmatpush.bf16.msra.mxu0 %v3631
      %3867 = vmatpush.bf16.msra.mxu0 %v3627
      %3868 = vmatpush.bf16.msra.mxu0 %v3623
      %3869 = vmatpush.bf16.msra.mxu0 %v3619
      %3870 = vmatpush.bf16.msra.mxu0 %v3615
      %3871 = vmatpush.bf16.msra.mxu0 %v3611
      %3872 = vmatmul.bf16.gmra.mxu0 %v620
      %v3873 = vpop.f32.mrf.mxu0
      %v3874 = vadd.f32 %v3845, %v3873
      %v3875 = vpop.f32.mrf.mxu0
      %v3876 = vadd.f32 %v3847, %v3875
      %3877 = vmatmul.bf16.gmra.mxu0 %v624
      %v3878 = vpop.f32.mrf.mxu0
      %v3879 = vadd.f32 %v3850, %v3878
      %v3880 = vpop.f32.mrf.mxu0
      %v3881 = vadd.f32 %v3852, %v3880
      %3882 = vmatmul.bf16.gmra.mxu0 %v628
      %v3883 = vpop.f32.mrf.mxu0
      %v3884 = vadd.f32 %v3855, %v3883
      %v3885 = vpop.f32.mrf.mxu0
      %v3886 = vadd.f32 %v3857, %v3885
      %3887 = vmatmul.bf16.gmra.mxu0 %v632
      %v3888 = vpop.f32.mrf.mxu0
      %v3889 = vadd.f32 %v3860, %v3888
      %v3890 = vpop.f32.mrf.mxu0
      %v3891 = vadd.f32 %v3862, %v3890
      %3892 = vdwg.mxu0
      %3893 = vmatpush.bf16.msra.mxu0 %v3671
      %3894 = vmatpush.bf16.msra.mxu0 %v3667
      %3895 = vmatpush.bf16.msra.mxu0 %v3663
      %3896 = vmatpush.bf16.msra.mxu0 %v3659
      %3897 = vmatpush.bf16.msra.mxu0 %v3655
      %3898 = vmatpush.bf16.msra.mxu0 %v3651
      %3899 = vmatpush.bf16.msra.mxu0 %v3647
      %3900 = vmatpush.bf16.msra.mxu0 %v3643
      %3901 = vmatmul.bf16.gmra.mxu0 %v621
      %v3902 = vpop.f32.mrf.mxu0
      %v3903 = vadd.f32 %v3874, %v3902
      %v3904 = vpop.f32.mrf.mxu0
      %v3905 = vadd.f32 %v3876, %v3904
      %3906 = vmatmul.bf16.gmra.mxu0 %v625
      %v3907 = vpop.f32.mrf.mxu0
      %v3908 = vadd.f32 %v3879, %v3907
      %v3909 = vpop.f32.mrf.mxu0
      %v3910 = vadd.f32 %v3881, %v3909
      %3911 = vmatmul.bf16.gmra.mxu0 %v629
      %v3912 = vpop.f32.mrf.mxu0
      %v3913 = vadd.f32 %v3884, %v3912
      %v3914 = vpop.f32.mrf.mxu0
      %v3915 = vadd.f32 %v3886, %v3914
      %3916 = vmatmul.bf16.gmra.mxu0 %v633
      %v3917 = vpop.f32.mrf.mxu0
      %v3918 = vadd.f32 %v3889, %v3917
      %v3919 = vpop.f32.mrf.mxu0
      %v3920 = vadd.f32 %v3891, %v3919
      %3921 = vdwg.mxu0
      %3922 = vmatpush.bf16.msra.mxu0 %v3703
      %3923 = vmatpush.bf16.msra.mxu0 %v3699
      %3924 = vmatpush.bf16.msra.mxu0 %v3695
      %3925 = vmatpush.bf16.msra.mxu0 %v3691
      %3926 = vmatpush.bf16.msra.mxu0 %v3687
      %3927 = vmatpush.bf16.msra.mxu0 %v3683
      %3928 = vmatpush.bf16.msra.mxu0 %v3679
      %3929 = vmatpush.bf16.msra.mxu0 %v3675
      %3930 = vmatmul.bf16.gmra.mxu0 %v622
      %v3931 = vpop.f32.mrf.mxu0
      %v3932 = vadd.f32 %v3903, %v3931
      %v3933 = vpop.f32.mrf.mxu0
      %v3934 = vadd.f32 %v3905, %v3933
      %3935 = vmatmul.bf16.gmra.mxu0 %v626
      %v3936 = vpop.f32.mrf.mxu0
      %v3937 = vadd.f32 %v3908, %v3936
      %v3938 = vpop.f32.mrf.mxu0
      %v3939 = vadd.f32 %v3910, %v3938
      %3940 = vmatmul.bf16.gmra.mxu0 %v630
      %v3941 = vpop.f32.mrf.mxu0
      %v3942 = vadd.f32 %v3913, %v3941
      %v3943 = vpop.f32.mrf.mxu0
      %v3944 = vadd.f32 %v3915, %v3943
      %3945 = vmatmul.bf16.gmra.mxu0 %v634
      %v3946 = vpop.f32.mrf.mxu0
      %v3947 = vadd.f32 %v3918, %v3946
      %v3948 = vpop.f32.mrf.mxu0
      %v3949 = vadd.f32 %v3920, %v3948
      %3950 = vdwg.mxu0
      %3951 = vmatpush.bf16.msra.mxu0 %v3608
      %3952 = vmatpush.bf16.msra.mxu0 %v3604
      %3953 = vmatpush.bf16.msra.mxu0 %v3600
      %3954 = vmatpush.bf16.msra.mxu0 %v3596
      %3955 = vmatpush.bf16.msra.mxu0 %v3592
      %3956 = vmatpush.bf16.msra.mxu0 %v3588
      %3957 = vmatpush.bf16.msra.mxu0 %v3584
      %3958 = vmatpush.bf16.msra.mxu0 %v3580
      %3959 = vmatmul.bf16.gmra.mxu0 %v619
      %v3960 = vpop.f32.mrf.mxu0
      %v3961 = vadd.f32 0.0, %v3960
      %v3962 = vpop.f32.mrf.mxu0
      %v3963 = vadd.f32 0.0, %v3962
      %3964 = vmatmul.bf16.gmra.mxu0 %v623
      %v3965 = vpop.f32.mrf.mxu0
      %v3966 = vadd.f32 0.0, %v3965
      %v3967 = vpop.f32.mrf.mxu0
      %v3968 = vadd.f32 0.0, %v3967
      %3969 = vmatmul.bf16.gmra.mxu0 %v627
      %v3970 = vpop.f32.mrf.mxu0
      %v3971 = vadd.f32 0.0, %v3970
      %v3972 = vpop.f32.mrf.mxu0
      %v3973 = vadd.f32 0.0, %v3972
      %3974 = vmatmul.bf16.gmra.mxu0 %v631
      %v3975 = vpop.f32.mrf.mxu0
      %v3976 = vadd.f32 0.0, %v3975
      %v3977 = vpop.f32.mrf.mxu0
      %v3978 = vadd.f32 0.0, %v3977
      %3979 = vdwg.mxu0
      %3980 = vmatpush.bf16.msra.mxu0 %v3640
      %3981 = vmatpush.bf16.msra.mxu0 %v3636
      %3982 = vmatpush.bf16.msra.mxu0 %v3632
      %3983 = vmatpush.bf16.msra.mxu0 %v3628
      %3984 = vmatpush.bf16.msra.mxu0 %v3624
      %3985 = vmatpush.bf16.msra.mxu0 %v3620
      %3986 = vmatpush.bf16.msra.mxu0 %v3616
      %3987 = vmatpush.bf16.msra.mxu0 %v3612
      %3988 = vmatmul.bf16.gmra.mxu0 %v620
      %v3989 = vpop.f32.mrf.mxu0
      %v3990 = vadd.f32 %v3961, %v3989
      %v3991 = vpop.f32.mrf.mxu0
      %v3992 = vadd.f32 %v3963, %v3991
      %3993 = vmatmul.bf16.gmra.mxu0 %v624
      %v3994 = vpop.f32.mrf.mxu0
      %v3995 = vadd.f32 %v3966, %v3994
      %v3996 = vpop.f32.mrf.mxu0
      %v3997 = vadd.f32 %v3968, %v3996
      %3998 = vmatmul.bf16.gmra.mxu0 %v628
      %v3999 = vpop.f32.mrf.mxu0
      %v4000 = vadd.f32 %v3971, %v3999
      %v4001 = vpop.f32.mrf.mxu0
      %v4002 = vadd.f32 %v3973, %v4001
      %4003 = vmatmul.bf16.gmra.mxu0 %v632
      %v4004 = vpop.f32.mrf.mxu0
      %v4005 = vadd.f32 %v3976, %v4004
      %v4006 = vpop.f32.mrf.mxu0
      %v4007 = vadd.f32 %v3978, %v4006
      %4008 = vdwg.mxu0
      %4009 = vmatpush.bf16.msra.mxu0 %v3672
      %4010 = vmatpush.bf16.msra.mxu0 %v3668
      %4011 = vmatpush.bf16.msra.mxu0 %v3664
      %4012 = vmatpush.bf16.msra.mxu0 %v3660
      %4013 = vmatpush.bf16.msra.mxu0 %v3656
      %4014 = vmatpush.bf16.msra.mxu0 %v3652
      %4015 = vmatpush.bf16.msra.mxu0 %v3648
      %4016 = vmatpush.bf16.msra.mxu0 %v3644
      %4017 = vmatmul.bf16.gmra.mxu0 %v621
      %v4018 = vpop.f32.mrf.mxu0
      %v4019 = vadd.f32 %v3990, %v4018
      %v4020 = vpop.f32.mrf.mxu0
      %v4021 = vadd.f32 %v3992, %v4020
      %4022 = vmatmul.bf16.gmra.mxu0 %v625
      %v4023 = vpop.f32.mrf.mxu0
      %v4024 = vadd.f32 %v3995, %v4023
      %v4025 = vpop.f32.mrf.mxu0
      %v4026 = vadd.f32 %v3997, %v4025
      %4027 = vmatmul.bf16.gmra.mxu0 %v629
      %v4028 = vpop.f32.mrf.mxu0
      %v4029 = vadd.f32 %v4000, %v4028
      %v4030 = vpop.f32.mrf.mxu0
      %v4031 = vadd.f32 %v4002, %v4030
      %4032 = vmatmul.bf16.gmra.mxu0 %v633
      %v4033 = vpop.f32.mrf.mxu0
      %v4034 = vadd.f32 %v4005, %v4033
      %v4035 = vpop.f32.mrf.mxu0
      %v4036 = vadd.f32 %v4007, %v4035
      %4037 = vdwg.mxu0
      %4038 = vmatpush.bf16.msra.mxu0 %v3704
      %4039 = vmatpush.bf16.msra.mxu0 %v3700
      %4040 = vmatpush.bf16.msra.mxu0 %v3696
      %4041 = vmatpush.bf16.msra.mxu0 %v3692
      %4042 = vmatpush.bf16.msra.mxu0 %v3688
      %4043 = vmatpush.bf16.msra.mxu0 %v3684
      %4044 = vmatpush.bf16.msra.mxu0 %v3680
      %4045 = vmatpush.bf16.msra.mxu0 %v3676
      %4046 = vmatmul.bf16.gmra.mxu0 %v622
      %v4047 = vpop.f32.mrf.mxu0
      %v4048 = vadd.f32 %v4019, %v4047
      %v4049 = vpop.f32.mrf.mxu0
      %v4050 = vadd.f32 %v4021, %v4049
      %4051 = vmatmul.bf16.gmra.mxu0 %v626
      %v4052 = vpop.f32.mrf.mxu0
      %v4053 = vadd.f32 %v4024, %v4052
      %v4054 = vpop.f32.mrf.mxu0
      %v4055 = vadd.f32 %v4026, %v4054
      %4056 = vmatmul.bf16.gmra.mxu0 %v630
      %v4057 = vpop.f32.mrf.mxu0
      %v4058 = vadd.f32 %v4029, %v4057
      %v4059 = vpop.f32.mrf.mxu0
      %v4060 = vadd.f32 %v4031, %v4059
      %4061 = vmatmul.bf16.gmra.mxu0 %v634
      %v4062 = vpop.f32.mrf.mxu0
      %v4063 = vadd.f32 %v4034, %v4062
      %v4064 = vpop.f32.mrf.mxu0
      %v4065 = vadd.f32 %v4036, %v4064
      %4066 = vdwg.mxu0
      %4067 = vmatpush.bf16.msra.mxu0 %v3609
      %4068 = vmatpush.bf16.msra.mxu0 %v3605
      %4069 = vmatpush.bf16.msra.mxu0 %v3601
      %4070 = vmatpush.bf16.msra.mxu0 %v3597
      %4071 = vmatpush.bf16.msra.mxu0 %v3593
      %4072 = vmatpush.bf16.msra.mxu0 %v3589
      %4073 = vmatpush.bf16.msra.mxu0 %v3585
      %4074 = vmatpush.bf16.msra.mxu0 %v3581
      %4075 = vmatmul.bf16.gmra.mxu0 %v619
      %v4076 = vpop.f32.mrf.mxu0
      %v4077 = vadd.f32 0.0, %v4076
      %v4078 = vpop.f32.mrf.mxu0
      %v4079 = vadd.f32 0.0, %v4078
      %4080 = vmatmul.bf16.gmra.mxu0 %v623
      %v4081 = vpop.f32.mrf.mxu0
      %v4082 = vadd.f32 0.0, %v4081
      %v4083 = vpop.f32.mrf.mxu0
      %v4084 = vadd.f32 0.0, %v4083
      %4085 = vmatmul.bf16.gmra.mxu0 %v627
      %v4086 = vpop.f32.mrf.mxu0
      %v4087 = vadd.f32 0.0, %v4086
      %v4088 = vpop.f32.mrf.mxu0
      %v4089 = vadd.f32 0.0, %v4088
      %4090 = vmatmul.bf16.gmra.mxu0 %v631
      %v4091 = vpop.f32.mrf.mxu0
      %v4092 = vadd.f32 0.0, %v4091
      %v4093 = vpop.f32.mrf.mxu0
      %v4094 = vadd.f32 0.0, %v4093
      %4095 = vdwg.mxu0
      %4096 = vmatpush.bf16.msra.mxu0 %v3641
      %4097 = vmatpush.bf16.msra.mxu0 %v3637
      %4098 = vmatpush.bf16.msra.mxu0 %v3633
      %4099 = vmatpush.bf16.msra.mxu0 %v3629
      %4100 = vmatpush.bf16.msra.mxu0 %v3625
      %4101 = vmatpush.bf16.msra.mxu0 %v3621
      %4102 = vmatpush.bf16.msra.mxu0 %v3617
      %4103 = vmatpush.bf16.msra.mxu0 %v3613
      %4104 = vmatmul.bf16.gmra.mxu0 %v620
      %v4105 = vpop.f32.mrf.mxu0
      %v4106 = vadd.f32 %v4077, %v4105
      %v4107 = vpop.f32.mrf.mxu0
      %v4108 = vadd.f32 %v4079, %v4107
      %4109 = vmatmul.bf16.gmra.mxu0 %v624
      %v4110 = vpop.f32.mrf.mxu0
      %v4111 = vadd.f32 %v4082, %v4110
      %v4112 = vpop.f32.mrf.mxu0
      %v4113 = vadd.f32 %v4084, %v4112
      %4114 = vmatmul.bf16.gmra.mxu0 %v628
      %v4115 = vpop.f32.mrf.mxu0
      %v4116 = vadd.f32 %v4087, %v4115
      %v4117 = vpop.f32.mrf.mxu0
      %v4118 = vadd.f32 %v4089, %v4117
      %4119 = vmatmul.bf16.gmra.mxu0 %v632
      %v4120 = vpop.f32.mrf.mxu0
      %v4121 = vadd.f32 %v4092, %v4120
      %v4122 = vpop.f32.mrf.mxu0
      %v4123 = vadd.f32 %v4094, %v4122
      %4124 = vdwg.mxu0
      %4125 = vmatpush.bf16.msra.mxu0 %v3673
      %4126 = vmatpush.bf16.msra.mxu0 %v3669
      %4127 = vmatpush.bf16.msra.mxu0 %v3665
      %4128 = vmatpush.bf16.msra.mxu0 %v3661
      %4129 = vmatpush.bf16.msra.mxu0 %v3657
      %4130 = vmatpush.bf16.msra.mxu0 %v3653
      %4131 = vmatpush.bf16.msra.mxu0 %v3649
      %4132 = vmatpush.bf16.msra.mxu0 %v3645
      %4133 = vmatmul.bf16.gmra.mxu0 %v621
      %v4134 = vpop.f32.mrf.mxu0
      %v4135 = vadd.f32 %v4106, %v4134
      %v4136 = vpop.f32.mrf.mxu0
      %v4137 = vadd.f32 %v4108, %v4136
      %4138 = vmatmul.bf16.gmra.mxu0 %v625
      %v4139 = vpop.f32.mrf.mxu0
      %v4140 = vadd.f32 %v4111, %v4139
      %v4141 = vpop.f32.mrf.mxu0
      %v4142 = vadd.f32 %v4113, %v4141
      %4143 = vmatmul.bf16.gmra.mxu0 %v629
      %v4144 = vpop.f32.mrf.mxu0
      %v4145 = vadd.f32 %v4116, %v4144
      %v4146 = vpop.f32.mrf.mxu0
      %v4147 = vadd.f32 %v4118, %v4146
      %4148 = vmatmul.bf16.gmra.mxu0 %v633
      %v4149 = vpop.f32.mrf.mxu0
      %v4150 = vadd.f32 %v4121, %v4149
      %v4151 = vpop.f32.mrf.mxu0
      %v4152 = vadd.f32 %v4123, %v4151
      %4153 = vdwg.mxu0
      %4154 = vmatpush.bf16.msra.mxu0 %v3705
      %4155 = vmatpush.bf16.msra.mxu0 %v3701
      %4156 = vmatpush.bf16.msra.mxu0 %v3697
      %4157 = vmatpush.bf16.msra.mxu0 %v3693
      %4158 = vmatpush.bf16.msra.mxu0 %v3689
      %4159 = vmatpush.bf16.msra.mxu0 %v3685
      %4160 = vmatpush.bf16.msra.mxu0 %v3681
      %4161 = vmatpush.bf16.msra.mxu0 %v3677
      %4162 = vmatmul.bf16.gmra.mxu0 %v622
      %v4163 = vpop.f32.mrf.mxu0
      %v4164 = vadd.f32 %v4135, %v4163
      %v4165 = vpop.f32.mrf.mxu0
      %v4166 = vadd.f32 %v4137, %v4165
      %4167 = vmatmul.bf16.gmra.mxu0 %v626
      %v4168 = vpop.f32.mrf.mxu0
      %v4169 = vadd.f32 %v4140, %v4168
      %v4170 = vpop.f32.mrf.mxu0
      %v4171 = vadd.f32 %v4142, %v4170
      %4172 = vmatmul.bf16.gmra.mxu0 %v630
      %v4173 = vpop.f32.mrf.mxu0
      %v4174 = vadd.f32 %v4145, %v4173
      %v4175 = vpop.f32.mrf.mxu0
      %v4176 = vadd.f32 %v4147, %v4175
      %4177 = vmatmul.bf16.gmra.mxu0 %v634
      %v4178 = vpop.f32.mrf.mxu0
      %v4179 = vadd.f32 %v4150, %v4178
      %v4180 = vpop.f32.mrf.mxu0
      %v4181 = vadd.f32 %v4152, %v4180
      %4182 = vdwg.mxu0
      %4183 = vmatpush.bf16.msra.mxu0 %v3610
      %4184 = vmatpush.bf16.msra.mxu0 %v3606
      %4185 = vmatpush.bf16.msra.mxu0 %v3602
      %4186 = vmatpush.bf16.msra.mxu0 %v3598
      %4187 = vmatpush.bf16.msra.mxu0 %v3594
      %4188 = vmatpush.bf16.msra.mxu0 %v3590
      %4189 = vmatpush.bf16.msra.mxu0 %v3586
      %4190 = vmatpush.bf16.msra.mxu0 %v3582
      %4191 = vmatmul.bf16.gmra.mxu0 %v619
      %v4192 = vpop.f32.mrf.mxu0
      %v4193 = vadd.f32 0.0, %v4192
      %v4194 = vpop.f32.mrf.mxu0
      %v4195 = vadd.f32 0.0, %v4194
      %4196 = vmatmul.bf16.gmra.mxu0 %v623
      %v4197 = vpop.f32.mrf.mxu0
      %v4198 = vadd.f32 0.0, %v4197
      %v4199 = vpop.f32.mrf.mxu0
      %v4200 = vadd.f32 0.0, %v4199
      %4201 = vmatmul.bf16.gmra.mxu0 %v627
      %v4202 = vpop.f32.mrf.mxu0
      %v4203 = vadd.f32 0.0, %v4202
      %v4204 = vpop.f32.mrf.mxu0
      %v4205 = vadd.f32 0.0, %v4204
      %4206 = vmatmul.bf16.gmra.mxu0 %v631
      %v4207 = vpop.f32.mrf.mxu0
      %v4208 = vadd.f32 0.0, %v4207
      %v4209 = vpop.f32.mrf.mxu0
      %v4210 = vadd.f32 0.0, %v4209
      %4211 = vdwg.mxu0
      %4212 = vmatpush.bf16.msra.mxu0 %v3642
      %4213 = vmatpush.bf16.msra.mxu0 %v3638
      %4214 = vmatpush.bf16.msra.mxu0 %v3634
      %4215 = vmatpush.bf16.msra.mxu0 %v3630
      %4216 = vmatpush.bf16.msra.mxu0 %v3626
      %4217 = vmatpush.bf16.msra.mxu0 %v3622
      %4218 = vmatpush.bf16.msra.mxu0 %v3618
      %4219 = vmatpush.bf16.msra.mxu0 %v3614
      %4220 = vmatmul.bf16.gmra.mxu0 %v620
      %v4221 = vpop.f32.mrf.mxu0
      %v4222 = vadd.f32 %v4193, %v4221
      %v4223 = vpop.f32.mrf.mxu0
      %v4224 = vadd.f32 %v4195, %v4223
      %4225 = vmatmul.bf16.gmra.mxu0 %v624
      %v4226 = vpop.f32.mrf.mxu0
      %v4227 = vadd.f32 %v4198, %v4226
      %v4228 = vpop.f32.mrf.mxu0
      %v4229 = vadd.f32 %v4200, %v4228
      %4230 = vmatmul.bf16.gmra.mxu0 %v628
      %v4231 = vpop.f32.mrf.mxu0
      %v4232 = vadd.f32 %v4203, %v4231
      %v4233 = vpop.f32.mrf.mxu0
      %v4234 = vadd.f32 %v4205, %v4233
      %4235 = vmatmul.bf16.gmra.mxu0 %v632
      %v4236 = vpop.f32.mrf.mxu0
      %v4237 = vadd.f32 %v4208, %v4236
      %v4238 = vpop.f32.mrf.mxu0
      %v4239 = vadd.f32 %v4210, %v4238
      %4240 = vdwg.mxu0
      %4241 = vmatpush.bf16.msra.mxu0 %v3674
      %4242 = vmatpush.bf16.msra.mxu0 %v3670
      %4243 = vmatpush.bf16.msra.mxu0 %v3666
      %4244 = vmatpush.bf16.msra.mxu0 %v3662
      %4245 = vmatpush.bf16.msra.mxu0 %v3658
      %4246 = vmatpush.bf16.msra.mxu0 %v3654
      %4247 = vmatpush.bf16.msra.mxu0 %v3650
      %4248 = vmatpush.bf16.msra.mxu0 %v3646
      %4249 = vmatmul.bf16.gmra.mxu0 %v621
      %v4250 = vpop.f32.mrf.mxu0
      %v4251 = vadd.f32 %v4222, %v4250
      %v4252 = vpop.f32.mrf.mxu0
      %v4253 = vadd.f32 %v4224, %v4252
      %4254 = vmatmul.bf16.gmra.mxu0 %v625
      %v4255 = vpop.f32.mrf.mxu0
      %v4256 = vadd.f32 %v4227, %v4255
      %v4257 = vpop.f32.mrf.mxu0
      %v4258 = vadd.f32 %v4229, %v4257
      %4259 = vmatmul.bf16.gmra.mxu0 %v629
      %v4260 = vpop.f32.mrf.mxu0
      %v4261 = vadd.f32 %v4232, %v4260
      %v4262 = vpop.f32.mrf.mxu0
      %v4263 = vadd.f32 %v4234, %v4262
      %4264 = vmatmul.bf16.gmra.mxu0 %v633
      %v4265 = vpop.f32.mrf.mxu0
      %v4266 = vadd.f32 %v4237, %v4265
      %v4267 = vpop.f32.mrf.mxu0
      %v4268 = vadd.f32 %v4239, %v4267
      %4269 = vdwg.mxu0
      %4270 = vmatpush.bf16.msra.mxu0 %v3706
      %4271 = vmatpush.bf16.msra.mxu0 %v3702
      %4272 = vmatpush.bf16.msra.mxu0 %v3698
      %4273 = vmatpush.bf16.msra.mxu0 %v3694
      %4274 = vmatpush.bf16.msra.mxu0 %v3690
      %4275 = vmatpush.bf16.msra.mxu0 %v3686
      %4276 = vmatpush.bf16.msra.mxu0 %v3682
      %4277 = vmatpush.bf16.msra.mxu0 %v3678
      %4278 = vmatmul.bf16.gmra.mxu0 %v622
      %v4279 = vpop.f32.mrf.mxu0
      %v4280 = vadd.f32 %v4251, %v4279
      %v4281 = vpop.f32.mrf.mxu0
      %v4282 = vadd.f32 %v4253, %v4281
      %4283 = vmatmul.bf16.gmra.mxu0 %v626
      %v4284 = vpop.f32.mrf.mxu0
      %v4285 = vadd.f32 %v4256, %v4284
      %v4286 = vpop.f32.mrf.mxu0
      %v4287 = vadd.f32 %v4258, %v4286
      %4288 = vmatmul.bf16.gmra.mxu0 %v630
      %v4289 = vpop.f32.mrf.mxu0
      %v4290 = vadd.f32 %v4261, %v4289
      %v4291 = vpop.f32.mrf.mxu0
      %v4292 = vadd.f32 %v4263, %v4291
      %4293 = vmatmul.bf16.gmra.mxu0 %v634
      %v4294 = vpop.f32.mrf.mxu0
      %v4295 = vadd.f32 %v4266, %v4294
      %v4296 = vpop.f32.mrf.mxu0
      %v4297 = vadd.f32 %v4268, %v4296
      %4298 = vdwg.mxu0
      %v4427 = vunpack.c.l.b16 %v2939
      %v4428 = vunpack.c.h.b16 %v2939
      %v4429 = vunpack.c.l.b16 %v2940
      %v4430 = vunpack.c.h.b16 %v2940
      %v4431 = vunpack.c.l.b16 %v2941
      %v4432 = vunpack.c.h.b16 %v2941
      %v4433 = vunpack.c.l.b16 %v2942
      %v4434 = vunpack.c.h.b16 %v2942
      %v4435 = vunpack.c.l.b16 %v2943
      %v4436 = vunpack.c.h.b16 %v2943
      %v4437 = vunpack.c.l.b16 %v2944
      %v4438 = vunpack.c.h.b16 %v2944
      %v4439 = vunpack.c.l.b16 %v2945
      %v4440 = vunpack.c.h.b16 %v2945
      %v4441 = vunpack.c.l.b16 %v2946
      %v4442 = vunpack.c.h.b16 %v2946
      %v4443 = vunpack.c.l.b16 %v2947
      %v4444 = vunpack.c.h.b16 %v2947
      %v4445 = vunpack.c.l.b16 %v2948
      %v4446 = vunpack.c.h.b16 %v2948
      %v4447 = vunpack.c.l.b16 %v2949
      %v4448 = vunpack.c.h.b16 %v2949
      %v4449 = vunpack.c.l.b16 %v2950
      %v4450 = vunpack.c.h.b16 %v2950
      %v4451 = vunpack.c.l.b16 %v2951
      %v4452 = vunpack.c.h.b16 %v2951
      %v4453 = vunpack.c.l.b16 %v2952
      %v4454 = vunpack.c.h.b16 %v2952
      %v4455 = vunpack.c.l.b16 %v2953
      %v4456 = vunpack.c.h.b16 %v2953
      %v4457 = vunpack.c.l.b16 %v2954
      %v4458 = vunpack.c.h.b16 %v2954
      %v4459 = vunpack.c.l.b16 %v2955
      %v4460 = vunpack.c.h.b16 %v2955
      %v4461 = vunpack.c.l.b16 %v2956
      %v4462 = vunpack.c.h.b16 %v2956
      %v4463 = vunpack.c.l.b16 %v2957
      %v4464 = vunpack.c.h.b16 %v2957
      %v4465 = vunpack.c.l.b16 %v2958
      %v4466 = vunpack.c.h.b16 %v2958
      %v4467 = vunpack.c.l.b16 %v2959
      %v4468 = vunpack.c.h.b16 %v2959
      %v4469 = vunpack.c.l.b16 %v2960
      %v4470 = vunpack.c.h.b16 %v2960
      %v4471 = vunpack.c.l.b16 %v2961
      %v4472 = vunpack.c.h.b16 %v2961
      %v4473 = vunpack.c.l.b16 %v2962
      %v4474 = vunpack.c.h.b16 %v2962
      %v4475 = vunpack.c.l.b16 %v2963
      %v4476 = vunpack.c.h.b16 %v2963
      %v4477 = vunpack.c.l.b16 %v2964
      %v4478 = vunpack.c.h.b16 %v2964
      %v4479 = vunpack.c.l.b16 %v2965
      %v4480 = vunpack.c.h.b16 %v2965
      %v4481 = vunpack.c.l.b16 %v2966
      %v4482 = vunpack.c.h.b16 %v2966
      %v4483 = vunpack.c.l.b16 %v2967
      %v4484 = vunpack.c.h.b16 %v2967
      %v4485 = vunpack.c.l.b16 %v2968
      %v4486 = vunpack.c.h.b16 %v2968
      %v4487 = vunpack.c.l.b16 %v2969
      %v4488 = vunpack.c.h.b16 %v2969
      %v4489 = vunpack.c.l.b16 %v2970
      %v4490 = vunpack.c.h.b16 %v2970
      %v4491 = vunpack.c.l.b16 %v2971
      %v4492 = vunpack.c.h.b16 %v2971
      %v4493 = vunpack.c.l.b16 %v2972
      %v4494 = vunpack.c.h.b16 %v2972
      %v4495 = vunpack.c.l.b16 %v2973
      %v4496 = vunpack.c.h.b16 %v2973
      %v4497 = vunpack.c.l.b16 %v2974
      %v4498 = vunpack.c.h.b16 %v2974
      %v4499 = vunpack.c.l.b16 %v2975
      %v4500 = vunpack.c.h.b16 %v2975
      %v4501 = vunpack.c.l.b16 %v2976
      %v4502 = vunpack.c.h.b16 %v2976
      %v4503 = vunpack.c.l.b16 %v2977
      %v4504 = vunpack.c.h.b16 %v2977
      %v4505 = vunpack.c.l.b16 %v2978
      %v4506 = vunpack.c.h.b16 %v2978
      %v4507 = vunpack.c.l.b16 %v2979
      %v4508 = vunpack.c.h.b16 %v2979
      %v4509 = vunpack.c.l.b16 %v2980
      %v4510 = vunpack.c.h.b16 %v2980
      %v4511 = vunpack.c.l.b16 %v2981
      %v4512 = vunpack.c.h.b16 %v2981
      %v4513 = vunpack.c.l.b16 %v2982
      %v4514 = vunpack.c.h.b16 %v2982
      %v4515 = vunpack.c.l.b16 %v2983
      %v4516 = vunpack.c.h.b16 %v2983
      %v4517 = vunpack.c.l.b16 %v2984
      %v4518 = vunpack.c.h.b16 %v2984
      %v4519 = vunpack.c.l.b16 %v2985
      %v4520 = vunpack.c.h.b16 %v2985
      %v4521 = vunpack.c.l.b16 %v2986
      %v4522 = vunpack.c.h.b16 %v2986
      %v4523 = vunpack.c.l.b16 %v2987
      %v4524 = vunpack.c.h.b16 %v2987
      %v4525 = vunpack.c.l.b16 %v2988
      %v4526 = vunpack.c.h.b16 %v2988
      %v4527 = vunpack.c.l.b16 %v2989
      %v4528 = vunpack.c.h.b16 %v2989
      %v4529 = vunpack.c.l.b16 %v2990
      %v4530 = vunpack.c.h.b16 %v2990
      %v4531 = vunpack.c.l.b16 %v2991
      %v4532 = vunpack.c.h.b16 %v2991
      %v4533 = vunpack.c.l.b16 %v2992
      %v4534 = vunpack.c.h.b16 %v2992
      %v4535 = vunpack.c.l.b16 %v2993
      %v4536 = vunpack.c.h.b16 %v2993
      %v4537 = vunpack.c.l.b16 %v2994
      %v4538 = vunpack.c.h.b16 %v2994
      %v4539 = vunpack.c.l.b16 %v2995
      %v4540 = vunpack.c.h.b16 %v2995
      %v4541 = vunpack.c.l.b16 %v2996
      %v4542 = vunpack.c.h.b16 %v2996
      %v4543 = vunpack.c.l.b16 %v2997
      %v4544 = vunpack.c.h.b16 %v2997
      %v4545 = vunpack.c.l.b16 %v2998
      %v4546 = vunpack.c.h.b16 %v2998
      %v4547 = vunpack.c.l.b16 %v2999
      %v4548 = vunpack.c.h.b16 %v2999
      %v4549 = vunpack.c.l.b16 %v3000
      %v4550 = vunpack.c.h.b16 %v3000
      %v4551 = vunpack.c.l.b16 %v3001
      %v4552 = vunpack.c.h.b16 %v3001
      %v4553 = vunpack.c.l.b16 %v3002
      %v4554 = vunpack.c.h.b16 %v3002
      %v4555 = vunpack.c.l.b16 %v3003
      %v4556 = vunpack.c.h.b16 %v3003
      %v4557 = vunpack.c.l.b16 %v3004
      %v4558 = vunpack.c.h.b16 %v3004
      %v4559 = vunpack.c.l.b16 %v3005
      %v4560 = vunpack.c.h.b16 %v3005
      %v4561 = vunpack.c.l.b16 %v3006
      %v4562 = vunpack.c.h.b16 %v3006
      %v4563 = vunpack.c.l.b16 %v3007
      %v4564 = vunpack.c.h.b16 %v3007
      %v4565 = vunpack.c.l.b16 %v3008
      %v4566 = vunpack.c.h.b16 %v3008
      %v4567 = vunpack.c.l.b16 %v3009
      %v4568 = vunpack.c.h.b16 %v3009
      %v4569 = vunpack.c.l.b16 %v3010
      %v4570 = vunpack.c.h.b16 %v3010
      %v4571 = vunpack.c.l.b16 %v3011
      %v4572 = vunpack.c.h.b16 %v3011
      %v4573 = vunpack.c.l.b16 %v3012
      %v4574 = vunpack.c.h.b16 %v3012
      %v4575 = vunpack.c.l.b16 %v3013
      %v4576 = vunpack.c.h.b16 %v3013
      %v4577 = vunpack.c.l.b16 %v3014
      %v4578 = vunpack.c.h.b16 %v3014
      %v4579 = vunpack.c.l.b16 %v3015
      %v4580 = vunpack.c.h.b16 %v3015
      %v4581 = vunpack.c.l.b16 %v3016
      %v4582 = vunpack.c.h.b16 %v3016
      %v4583 = vunpack.c.l.b16 %v3017
      %v4584 = vunpack.c.h.b16 %v3017
      %v4585 = vunpack.c.l.b16 %v3018
      %v4586 = vunpack.c.h.b16 %v3018
      %v4587 = vunpack.c.l.b16 %v3019
      %v4588 = vunpack.c.h.b16 %v3019
      %v4589 = vunpack.c.l.b16 %v3020
      %v4590 = vunpack.c.h.b16 %v3020
      %v4591 = vunpack.c.l.b16 %v3021
      %v4592 = vunpack.c.h.b16 %v3021
      %v4593 = vunpack.c.l.b16 %v3022
      %v4594 = vunpack.c.h.b16 %v3022
      %v4595 = vunpack.c.l.b16 %v3023
      %v4596 = vunpack.c.h.b16 %v3023
      %v4597 = vunpack.c.l.b16 %v3024
      %v4598 = vunpack.c.h.b16 %v3024
      %v4599 = vunpack.c.l.b16 %v3025
      %v4600 = vunpack.c.h.b16 %v3025
      %v4601 = vunpack.c.l.b16 %v3026
      %v4602 = vunpack.c.h.b16 %v3026
      %v4603 = vunpack.c.l.b16 %v3027
      %v4604 = vunpack.c.h.b16 %v3027
      %v4605 = vunpack.c.l.b16 %v3028
      %v4606 = vunpack.c.h.b16 %v3028
      %v4607 = vunpack.c.l.b16 %v3029
      %v4608 = vunpack.c.h.b16 %v3029
      %v4609 = vunpack.c.l.b16 %v3030
      %v4610 = vunpack.c.h.b16 %v3030
      %v4611 = vunpack.c.l.b16 %v3031
      %v4612 = vunpack.c.h.b16 %v3031
      %v4613 = vunpack.c.l.b16 %v3032
      %v4614 = vunpack.c.h.b16 %v3032
      %v4615 = vunpack.c.l.b16 %v3033
      %v4616 = vunpack.c.h.b16 %v3033
      %v4617 = vunpack.c.l.b16 %v3034
      %v4618 = vunpack.c.h.b16 %v3034
      %v4619 = vunpack.c.l.b16 %v3035
      %v4620 = vunpack.c.h.b16 %v3035
      %v4621 = vunpack.c.l.b16 %v3036
      %v4622 = vunpack.c.h.b16 %v3036
      %v4623 = vunpack.c.l.b16 %v3037
      %v4624 = vunpack.c.h.b16 %v3037
      %v4625 = vunpack.c.l.b16 %v3038
      %v4626 = vunpack.c.h.b16 %v3038
      %v4627 = vunpack.c.l.b16 %v3039
      %v4628 = vunpack.c.h.b16 %v3039
      %v4629 = vunpack.c.l.b16 %v3040
      %v4630 = vunpack.c.h.b16 %v3040
      %v4631 = vunpack.c.l.b16 %v3041
      %v4632 = vunpack.c.h.b16 %v3041
      %v4633 = vunpack.c.l.b16 %v3042
      %v4634 = vunpack.c.h.b16 %v3042
      %v4635 = vunpack.c.l.b16 %v3043
      %v4636 = vunpack.c.h.b16 %v3043
      %v4637 = vunpack.c.l.b16 %v3044
      %v4638 = vunpack.c.h.b16 %v3044
      %v4639 = vunpack.c.l.b16 %v3045
      %v4640 = vunpack.c.h.b16 %v3045
      %v4641 = vunpack.c.l.b16 %v3046
      %v4642 = vunpack.c.h.b16 %v3046
      %v4643 = vunpack.c.l.b16 %v3047
      %v4644 = vunpack.c.h.b16 %v3047
      %v4645 = vunpack.c.l.b16 %v3048
      %v4646 = vunpack.c.h.b16 %v3048
      %v4647 = vunpack.c.l.b16 %v3049
      %v4648 = vunpack.c.h.b16 %v3049
      %v4649 = vunpack.c.l.b16 %v3050
      %v4650 = vunpack.c.h.b16 %v3050
      %v4651 = vunpack.c.l.b16 %v3051
      %v4652 = vunpack.c.h.b16 %v3051
      %v4653 = vunpack.c.l.b16 %v3052
      %v4654 = vunpack.c.h.b16 %v3052
      %v4655 = vunpack.c.l.b16 %v3053
      %v4656 = vunpack.c.h.b16 %v3053
      %v4657 = vunpack.c.l.b16 %v3054
      %v4658 = vunpack.c.h.b16 %v3054
      %v4659 = vunpack.c.l.b16 %v3055
      %v4660 = vunpack.c.h.b16 %v3055
      %v4661 = vunpack.c.l.b16 %v3056
      %v4662 = vunpack.c.h.b16 %v3056
      %v4663 = vunpack.c.l.b16 %v3057
      %v4664 = vunpack.c.h.b16 %v3057
      %v4665 = vunpack.c.l.b16 %v3058
      %v4666 = vunpack.c.h.b16 %v3058
      %v4667 = vunpack.c.l.b16 %v3059
      %v4668 = vunpack.c.h.b16 %v3059
      %v4669 = vunpack.c.l.b16 %v3060
      %v4670 = vunpack.c.h.b16 %v3060
      %v4671 = vunpack.c.l.b16 %v3061
      %v4672 = vunpack.c.h.b16 %v3061
      %v4673 = vunpack.c.l.b16 %v3062
      %v4674 = vunpack.c.h.b16 %v3062
      %v4675 = vunpack.c.l.b16 %v3063
      %v4676 = vunpack.c.h.b16 %v3063
      %v4677 = vunpack.c.l.b16 %v3064
      %v4678 = vunpack.c.h.b16 %v3064
      %v4679 = vunpack.c.l.b16 %v3065
      %v4680 = vunpack.c.h.b16 %v3065
      %v4681 = vunpack.c.l.b16 %v3066
      %v4682 = vunpack.c.h.b16 %v3066
      %v4683 = vpack.c.b16 %v4431, %v4427
      %v4684 = vpack.c.b16 %v4432, %v4428
      %v4685 = vpack.c.b16 %v4433, %v4429
      %v4686 = vpack.c.b16 %v4434, %v4430
      %v4687 = vpack.c.b16 %v4439, %v4435
      %v4688 = vpack.c.b16 %v4440, %v4436
      %v4689 = vpack.c.b16 %v4441, %v4437
      %v4690 = vpack.c.b16 %v4442, %v4438
      %v4691 = vpack.c.b16 %v4447, %v4443
      %v4692 = vpack.c.b16 %v4448, %v4444
      %v4693 = vpack.c.b16 %v4449, %v4445
      %v4694 = vpack.c.b16 %v4450, %v4446
      %v4695 = vpack.c.b16 %v4455, %v4451
      %v4696 = vpack.c.b16 %v4456, %v4452
      %v4697 = vpack.c.b16 %v4457, %v4453
      %v4698 = vpack.c.b16 %v4458, %v4454
      %v4699 = vpack.c.b16 %v4463, %v4459
      %v4700 = vpack.c.b16 %v4464, %v4460
      %v4701 = vpack.c.b16 %v4465, %v4461
      %v4702 = vpack.c.b16 %v4466, %v4462
      %v4703 = vpack.c.b16 %v4471, %v4467
      %v4704 = vpack.c.b16 %v4472, %v4468
      %v4705 = vpack.c.b16 %v4473, %v4469
      %v4706 = vpack.c.b16 %v4474, %v4470
      %v4707 = vpack.c.b16 %v4479, %v4475
      %v4708 = vpack.c.b16 %v4480, %v4476
      %v4709 = vpack.c.b16 %v4481, %v4477
      %v4710 = vpack.c.b16 %v4482, %v4478
      %v4711 = vpack.c.b16 %v4487, %v4483
      %v4712 = vpack.c.b16 %v4488, %v4484
      %v4713 = vpack.c.b16 %v4489, %v4485
      %v4714 = vpack.c.b16 %v4490, %v4486
      %v4715 = vpack.c.b16 %v4495, %v4491
      %v4716 = vpack.c.b16 %v4496, %v4492
      %v4717 = vpack.c.b16 %v4497, %v4493
      %v4718 = vpack.c.b16 %v4498, %v4494
      %v4719 = vpack.c.b16 %v4503, %v4499
      %v4720 = vpack.c.b16 %v4504, %v4500
      %v4721 = vpack.c.b16 %v4505, %v4501
      %v4722 = vpack.c.b16 %v4506, %v4502
      %v4723 = vpack.c.b16 %v4511, %v4507
      %v4724 = vpack.c.b16 %v4512, %v4508
      %v4725 = vpack.c.b16 %v4513, %v4509
      %v4726 = vpack.c.b16 %v4514, %v4510
      %v4727 = vpack.c.b16 %v4519, %v4515
      %v4728 = vpack.c.b16 %v4520, %v4516
      %v4729 = vpack.c.b16 %v4521, %v4517
      %v4730 = vpack.c.b16 %v4522, %v4518
      %v4731 = vpack.c.b16 %v4527, %v4523
      %v4732 = vpack.c.b16 %v4528, %v4524
      %v4733 = vpack.c.b16 %v4529, %v4525
      %v4734 = vpack.c.b16 %v4530, %v4526
      %v4735 = vpack.c.b16 %v4535, %v4531
      %v4736 = vpack.c.b16 %v4536, %v4532
      %v4737 = vpack.c.b16 %v4537, %v4533
      %v4738 = vpack.c.b16 %v4538, %v4534
      %v4739 = vpack.c.b16 %v4543, %v4539
      %v4740 = vpack.c.b16 %v4544, %v4540
      %v4741 = vpack.c.b16 %v4545, %v4541
      %v4742 = vpack.c.b16 %v4546, %v4542
      %v4743 = vpack.c.b16 %v4551, %v4547
      %v4744 = vpack.c.b16 %v4552, %v4548
      %v4745 = vpack.c.b16 %v4553, %v4549
      %v4746 = vpack.c.b16 %v4554, %v4550
      %v4747 = vpack.c.b16 %v4559, %v4555
      %v4748 = vpack.c.b16 %v4560, %v4556
      %v4749 = vpack.c.b16 %v4561, %v4557
      %v4750 = vpack.c.b16 %v4562, %v4558
      %v4751 = vpack.c.b16 %v4567, %v4563
      %v4752 = vpack.c.b16 %v4568, %v4564
      %v4753 = vpack.c.b16 %v4569, %v4565
      %v4754 = vpack.c.b16 %v4570, %v4566
      %v4755 = vpack.c.b16 %v4575, %v4571
      %v4756 = vpack.c.b16 %v4576, %v4572
      %v4757 = vpack.c.b16 %v4577, %v4573
      %v4758 = vpack.c.b16 %v4578, %v4574
      %v4759 = vpack.c.b16 %v4583, %v4579
      %v4760 = vpack.c.b16 %v4584, %v4580
      %v4761 = vpack.c.b16 %v4585, %v4581
      %v4762 = vpack.c.b16 %v4586, %v4582
      %v4763 = vpack.c.b16 %v4591, %v4587
      %v4764 = vpack.c.b16 %v4592, %v4588
      %v4765 = vpack.c.b16 %v4593, %v4589
      %v4766 = vpack.c.b16 %v4594, %v4590
      %v4767 = vpack.c.b16 %v4599, %v4595
      %v4768 = vpack.c.b16 %v4600, %v4596
      %v4769 = vpack.c.b16 %v4601, %v4597
      %v4770 = vpack.c.b16 %v4602, %v4598
      %v4771 = vpack.c.b16 %v4607, %v4603
      %v4772 = vpack.c.b16 %v4608, %v4604
      %v4773 = vpack.c.b16 %v4609, %v4605
      %v4774 = vpack.c.b16 %v4610, %v4606
      %v4775 = vpack.c.b16 %v4615, %v4611
      %v4776 = vpack.c.b16 %v4616, %v4612
      %v4777 = vpack.c.b16 %v4617, %v4613
      %v4778 = vpack.c.b16 %v4618, %v4614
      %v4779 = vpack.c.b16 %v4623, %v4619
      %v4780 = vpack.c.b16 %v4624, %v4620
      %v4781 = vpack.c.b16 %v4625, %v4621
      %v4782 = vpack.c.b16 %v4626, %v4622
      %v4783 = vpack.c.b16 %v4631, %v4627
      %v4784 = vpack.c.b16 %v4632, %v4628
      %v4785 = vpack.c.b16 %v4633, %v4629
      %v4786 = vpack.c.b16 %v4634, %v4630
      %v4787 = vpack.c.b16 %v4639, %v4635
      %v4788 = vpack.c.b16 %v4640, %v4636
      %v4789 = vpack.c.b16 %v4641, %v4637
      %v4790 = vpack.c.b16 %v4642, %v4638
      %v4791 = vpack.c.b16 %v4647, %v4643
      %v4792 = vpack.c.b16 %v4648, %v4644
      %v4793 = vpack.c.b16 %v4649, %v4645
      %v4794 = vpack.c.b16 %v4650, %v4646
      %v4795 = vpack.c.b16 %v4655, %v4651
      %v4796 = vpack.c.b16 %v4656, %v4652
      %v4797 = vpack.c.b16 %v4657, %v4653
      %v4798 = vpack.c.b16 %v4658, %v4654
      %v4799 = vpack.c.b16 %v4663, %v4659
      %v4800 = vpack.c.b16 %v4664, %v4660
      %v4801 = vpack.c.b16 %v4665, %v4661
      %v4802 = vpack.c.b16 %v4666, %v4662
      %v4803 = vpack.c.b16 %v4671, %v4667
      %v4804 = vpack.c.b16 %v4672, %v4668
      %v4805 = vpack.c.b16 %v4673, %v4669
      %v4806 = vpack.c.b16 %v4674, %v4670
      %v4807 = vpack.c.b16 %v4679, %v4675
      %v4808 = vpack.c.b16 %v4680, %v4676
      %v4809 = vpack.c.b16 %v4681, %v4677
      %v4810 = vpack.c.b16 %v4682, %v4678
      %4939 = vmatpush.bf16.msra.mxu0 %v4711
      %4940 = vmatpush.bf16.msra.mxu0 %v4707
      %4941 = vmatpush.bf16.msra.mxu0 %v4703
      %4942 = vmatpush.bf16.msra.mxu0 %v4699
      %4943 = vmatpush.bf16.msra.mxu0 %v4695
      %4944 = vmatpush.bf16.msra.mxu0 %v4691
      %4945 = vmatpush.bf16.msra.mxu0 %v4687
      %4946 = vmatpush.bf16.msra.mxu0 %v4683
      %4947 = vmatmul.bf16.gmra.mxu0 %v1803
      %v4948 = vpop.f32.mrf.mxu0
      %v4949 = vadd.f32 %v3932, %v4948
      %v4950 = vpop.f32.mrf.mxu0
      %v4951 = vadd.f32 %v3934, %v4950
      %4952 = vmatmul.bf16.gmra.mxu0 %v1807
      %v4953 = vpop.f32.mrf.mxu0
      %v4954 = vadd.f32 %v3937, %v4953
      %v4955 = vpop.f32.mrf.mxu0
      %v4956 = vadd.f32 %v3939, %v4955
      %4957 = vmatmul.bf16.gmra.mxu0 %v1811
      %v4958 = vpop.f32.mrf.mxu0
      %v4959 = vadd.f32 %v3942, %v4958
      %v4960 = vpop.f32.mrf.mxu0
      %v4961 = vadd.f32 %v3944, %v4960
      %4962 = vmatmul.bf16.gmra.mxu0 %v1815
      %v4963 = vpop.f32.mrf.mxu0
      %v4964 = vadd.f32 %v3947, %v4963
      %v4965 = vpop.f32.mrf.mxu0
      %v4966 = vadd.f32 %v3949, %v4965
      %4967 = vdwg.mxu0
      %4968 = vmatpush.bf16.msra.mxu0 %v4743
      %4969 = vmatpush.bf16.msra.mxu0 %v4739
      %4970 = vmatpush.bf16.msra.mxu0 %v4735
      %4971 = vmatpush.bf16.msra.mxu0 %v4731
      %4972 = vmatpush.bf16.msra.mxu0 %v4727
      %4973 = vmatpush.bf16.msra.mxu0 %v4723
      %4974 = vmatpush.bf16.msra.mxu0 %v4719
      %4975 = vmatpush.bf16.msra.mxu0 %v4715
      %4976 = vmatmul.bf16.gmra.mxu0 %v1804
      %v4977 = vpop.f32.mrf.mxu0
      %v4978 = vadd.f32 %v4949, %v4977
      %v4979 = vpop.f32.mrf.mxu0
      %v4980 = vadd.f32 %v4951, %v4979
      %4981 = vmatmul.bf16.gmra.mxu0 %v1808
      %v4982 = vpop.f32.mrf.mxu0
      %v4983 = vadd.f32 %v4954, %v4982
      %v4984 = vpop.f32.mrf.mxu0
      %v4985 = vadd.f32 %v4956, %v4984
      %4986 = vmatmul.bf16.gmra.mxu0 %v1812
      %v4987 = vpop.f32.mrf.mxu0
      %v4988 = vadd.f32 %v4959, %v4987
      %v4989 = vpop.f32.mrf.mxu0
      %v4990 = vadd.f32 %v4961, %v4989
      %4991 = vmatmul.bf16.gmra.mxu0 %v1816
      %v4992 = vpop.f32.mrf.mxu0
      %v4993 = vadd.f32 %v4964, %v4992
      %v4994 = vpop.f32.mrf.mxu0
      %v4995 = vadd.f32 %v4966, %v4994
      %4996 = vdwg.mxu0
      %4997 = vmatpush.bf16.msra.mxu0 %v4775
      %4998 = vmatpush.bf16.msra.mxu0 %v4771
      %4999 = vmatpush.bf16.msra.mxu0 %v4767
      %5000 = vmatpush.bf16.msra.mxu0 %v4763
      %5001 = vmatpush.bf16.msra.mxu0 %v4759
      %5002 = vmatpush.bf16.msra.mxu0 %v4755
      %5003 = vmatpush.bf16.msra.mxu0 %v4751
      %5004 = vmatpush.bf16.msra.mxu0 %v4747
      %5005 = vmatmul.bf16.gmra.mxu0 %v1805
      %v5006 = vpop.f32.mrf.mxu0
      %v5007 = vadd.f32 %v4978, %v5006
      %v5008 = vpop.f32.mrf.mxu0
      %v5009 = vadd.f32 %v4980, %v5008
      %5010 = vmatmul.bf16.gmra.mxu0 %v1809
      %v5011 = vpop.f32.mrf.mxu0
      %v5012 = vadd.f32 %v4983, %v5011
      %v5013 = vpop.f32.mrf.mxu0
      %v5014 = vadd.f32 %v4985, %v5013
      %5015 = vmatmul.bf16.gmra.mxu0 %v1813
      %v5016 = vpop.f32.mrf.mxu0
      %v5017 = vadd.f32 %v4988, %v5016
      %v5018 = vpop.f32.mrf.mxu0
      %v5019 = vadd.f32 %v4990, %v5018
      %5020 = vmatmul.bf16.gmra.mxu0 %v1817
      %v5021 = vpop.f32.mrf.mxu0
      %v5022 = vadd.f32 %v4993, %v5021
      %v5023 = vpop.f32.mrf.mxu0
      %v5024 = vadd.f32 %v4995, %v5023
      %5025 = vdwg.mxu0
      %5026 = vmatpush.bf16.msra.mxu0 %v4807
      %5027 = vmatpush.bf16.msra.mxu0 %v4803
      %5028 = vmatpush.bf16.msra.mxu0 %v4799
      %5029 = vmatpush.bf16.msra.mxu0 %v4795
      %5030 = vmatpush.bf16.msra.mxu0 %v4791
      %5031 = vmatpush.bf16.msra.mxu0 %v4787
      %5032 = vmatpush.bf16.msra.mxu0 %v4783
      %5033 = vmatpush.bf16.msra.mxu0 %v4779
      %5034 = vmatmul.bf16.gmra.mxu0 %v1806
      %v5035 = vpop.f32.mrf.mxu0
      %v5036 = vadd.f32 %v5007, %v5035
      %v5037 = vpop.f32.mrf.mxu0
      %v5038 = vadd.f32 %v5009, %v5037
      %5039 = vmatmul.bf16.gmra.mxu0 %v1810
      %v5040 = vpop.f32.mrf.mxu0
      %v5041 = vadd.f32 %v5012, %v5040
      %v5042 = vpop.f32.mrf.mxu0
      %v5043 = vadd.f32 %v5014, %v5042
      %5044 = vmatmul.bf16.gmra.mxu0 %v1814
      %v5045 = vpop.f32.mrf.mxu0
      %v5046 = vadd.f32 %v5017, %v5045
      %v5047 = vpop.f32.mrf.mxu0
      %v5048 = vadd.f32 %v5019, %v5047
      %5049 = vmatmul.bf16.gmra.mxu0 %v1818
      %v5050 = vpop.f32.mrf.mxu0
      %v5051 = vadd.f32 %v5022, %v5050
      %v5052 = vpop.f32.mrf.mxu0
      %v5053 = vadd.f32 %v5024, %v5052
      %5054 = vdwg.mxu0
      %5055 = vmatpush.bf16.msra.mxu0 %v4712
      %5056 = vmatpush.bf16.msra.mxu0 %v4708
      %5057 = vmatpush.bf16.msra.mxu0 %v4704
      %5058 = vmatpush.bf16.msra.mxu0 %v4700
      %5059 = vmatpush.bf16.msra.mxu0 %v4696
      %5060 = vmatpush.bf16.msra.mxu0 %v4692
      %5061 = vmatpush.bf16.msra.mxu0 %v4688
      %5062 = vmatpush.bf16.msra.mxu0 %v4684
      %5063 = vmatmul.bf16.gmra.mxu0 %v1803
      %v5064 = vpop.f32.mrf.mxu0
      %v5065 = vadd.f32 %v4048, %v5064
      %v5066 = vpop.f32.mrf.mxu0
      %v5067 = vadd.f32 %v4050, %v5066
      %5068 = vmatmul.bf16.gmra.mxu0 %v1807
      %v5069 = vpop.f32.mrf.mxu0
      %v5070 = vadd.f32 %v4053, %v5069
      %v5071 = vpop.f32.mrf.mxu0
      %v5072 = vadd.f32 %v4055, %v5071
      %5073 = vmatmul.bf16.gmra.mxu0 %v1811
      %v5074 = vpop.f32.mrf.mxu0
      %v5075 = vadd.f32 %v4058, %v5074
      %v5076 = vpop.f32.mrf.mxu0
      %v5077 = vadd.f32 %v4060, %v5076
      %5078 = vmatmul.bf16.gmra.mxu0 %v1815
      %v5079 = vpop.f32.mrf.mxu0
      %v5080 = vadd.f32 %v4063, %v5079
      %v5081 = vpop.f32.mrf.mxu0
      %v5082 = vadd.f32 %v4065, %v5081
      %5083 = vdwg.mxu0
      %5084 = vmatpush.bf16.msra.mxu0 %v4744
      %5085 = vmatpush.bf16.msra.mxu0 %v4740
      %5086 = vmatpush.bf16.msra.mxu0 %v4736
      %5087 = vmatpush.bf16.msra.mxu0 %v4732
      %5088 = vmatpush.bf16.msra.mxu0 %v4728
      %5089 = vmatpush.bf16.msra.mxu0 %v4724
      %5090 = vmatpush.bf16.msra.mxu0 %v4720
      %5091 = vmatpush.bf16.msra.mxu0 %v4716
      %5092 = vmatmul.bf16.gmra.mxu0 %v1804
      %v5093 = vpop.f32.mrf.mxu0
      %v5094 = vadd.f32 %v5065, %v5093
      %v5095 = vpop.f32.mrf.mxu0
      %v5096 = vadd.f32 %v5067, %v5095
      %5097 = vmatmul.bf16.gmra.mxu0 %v1808
      %v5098 = vpop.f32.mrf.mxu0
      %v5099 = vadd.f32 %v5070, %v5098
      %v5100 = vpop.f32.mrf.mxu0
      %v5101 = vadd.f32 %v5072, %v5100
      %5102 = vmatmul.bf16.gmra.mxu0 %v1812
      %v5103 = vpop.f32.mrf.mxu0
      %v5104 = vadd.f32 %v5075, %v5103
      %v5105 = vpop.f32.mrf.mxu0
      %v5106 = vadd.f32 %v5077, %v5105
      %5107 = vmatmul.bf16.gmra.mxu0 %v1816
      %v5108 = vpop.f32.mrf.mxu0
      %v5109 = vadd.f32 %v5080, %v5108
      %v5110 = vpop.f32.mrf.mxu0
      %v5111 = vadd.f32 %v5082, %v5110
      %5112 = vdwg.mxu0
      %5113 = vmatpush.bf16.msra.mxu0 %v4776
      %5114 = vmatpush.bf16.msra.mxu0 %v4772
      %5115 = vmatpush.bf16.msra.mxu0 %v4768
      %5116 = vmatpush.bf16.msra.mxu0 %v4764
      %5117 = vmatpush.bf16.msra.mxu0 %v4760
      %5118 = vmatpush.bf16.msra.mxu0 %v4756
      %5119 = vmatpush.bf16.msra.mxu0 %v4752
      %5120 = vmatpush.bf16.msra.mxu0 %v4748
      %5121 = vmatmul.bf16.gmra.mxu0 %v1805
      %v5122 = vpop.f32.mrf.mxu0
      %v5123 = vadd.f32 %v5094, %v5122
      %v5124 = vpop.f32.mrf.mxu0
      %v5125 = vadd.f32 %v5096, %v5124
      %5126 = vmatmul.bf16.gmra.mxu0 %v1809
      %v5127 = vpop.f32.mrf.mxu0
      %v5128 = vadd.f32 %v5099, %v5127
      %v5129 = vpop.f32.mrf.mxu0
      %v5130 = vadd.f32 %v5101, %v5129
      %5131 = vmatmul.bf16.gmra.mxu0 %v1813
      %v5132 = vpop.f32.mrf.mxu0
      %v5133 = vadd.f32 %v5104, %v5132
      %v5134 = vpop.f32.mrf.mxu0
      %v5135 = vadd.f32 %v5106, %v5134
      %5136 = vmatmul.bf16.gmra.mxu0 %v1817
      %v5137 = vpop.f32.mrf.mxu0
      %v5138 = vadd.f32 %v5109, %v5137
      %v5139 = vpop.f32.mrf.mxu0
      %v5140 = vadd.f32 %v5111, %v5139
      %5141 = vdwg.mxu0
      %5142 = vmatpush.bf16.msra.mxu0 %v4808
      %5143 = vmatpush.bf16.msra.mxu0 %v4804
      %5144 = vmatpush.bf16.msra.mxu0 %v4800
      %5145 = vmatpush.bf16.msra.mxu0 %v4796
      %5146 = vmatpush.bf16.msra.mxu0 %v4792
      %5147 = vmatpush.bf16.msra.mxu0 %v4788
      %5148 = vmatpush.bf16.msra.mxu0 %v4784
      %5149 = vmatpush.bf16.msra.mxu0 %v4780
      %5150 = vmatmul.bf16.gmra.mxu0 %v1806
      %v5151 = vpop.f32.mrf.mxu0
      %v5152 = vadd.f32 %v5123, %v5151
      %v5153 = vpop.f32.mrf.mxu0
      %v5154 = vadd.f32 %v5125, %v5153
      %5155 = vmatmul.bf16.gmra.mxu0 %v1810
      %v5156 = vpop.f32.mrf.mxu0
      %v5157 = vadd.f32 %v5128, %v5156
      %v5158 = vpop.f32.mrf.mxu0
      %v5159 = vadd.f32 %v5130, %v5158
      %5160 = vmatmul.bf16.gmra.mxu0 %v1814
      %v5161 = vpop.f32.mrf.mxu0
      %v5162 = vadd.f32 %v5133, %v5161
      %v5163 = vpop.f32.mrf.mxu0
      %v5164 = vadd.f32 %v5135, %v5163
      %5165 = vmatmul.bf16.gmra.mxu0 %v1818
      %v5166 = vpop.f32.mrf.mxu0
      %v5167 = vadd.f32 %v5138, %v5166
      %v5168 = vpop.f32.mrf.mxu0
      %v5169 = vadd.f32 %v5140, %v5168
      %5170 = vdwg.mxu0
      %5171 = vmatpush.bf16.msra.mxu0 %v4713
      %5172 = vmatpush.bf16.msra.mxu0 %v4709
      %5173 = vmatpush.bf16.msra.mxu0 %v4705
      %5174 = vmatpush.bf16.msra.mxu0 %v4701
      %5175 = vmatpush.bf16.msra.mxu0 %v4697
      %5176 = vmatpush.bf16.msra.mxu0 %v4693
      %5177 = vmatpush.bf16.msra.mxu0 %v4689
      %5178 = vmatpush.bf16.msra.mxu0 %v4685
      %5179 = vmatmul.bf16.gmra.mxu0 %v1803
      %v5180 = vpop.f32.mrf.mxu0
      %v5181 = vadd.f32 %v4164, %v5180
      %v5182 = vpop.f32.mrf.mxu0
      %v5183 = vadd.f32 %v4166, %v5182
      %5184 = vmatmul.bf16.gmra.mxu0 %v1807
      %v5185 = vpop.f32.mrf.mxu0
      %v5186 = vadd.f32 %v4169, %v5185
      %v5187 = vpop.f32.mrf.mxu0
      %v5188 = vadd.f32 %v4171, %v5187
      %5189 = vmatmul.bf16.gmra.mxu0 %v1811
      %v5190 = vpop.f32.mrf.mxu0
      %v5191 = vadd.f32 %v4174, %v5190
      %v5192 = vpop.f32.mrf.mxu0
      %v5193 = vadd.f32 %v4176, %v5192
      %5194 = vmatmul.bf16.gmra.mxu0 %v1815
      %v5195 = vpop.f32.mrf.mxu0
      %v5196 = vadd.f32 %v4179, %v5195
      %v5197 = vpop.f32.mrf.mxu0
      %v5198 = vadd.f32 %v4181, %v5197
      %5199 = vdwg.mxu0
      %5200 = vmatpush.bf16.msra.mxu0 %v4745
      %5201 = vmatpush.bf16.msra.mxu0 %v4741
      %5202 = vmatpush.bf16.msra.mxu0 %v4737
      %5203 = vmatpush.bf16.msra.mxu0 %v4733
      %5204 = vmatpush.bf16.msra.mxu0 %v4729
      %5205 = vmatpush.bf16.msra.mxu0 %v4725
      %5206 = vmatpush.bf16.msra.mxu0 %v4721
      %5207 = vmatpush.bf16.msra.mxu0 %v4717
      %5208 = vmatmul.bf16.gmra.mxu0 %v1804
      %v5209 = vpop.f32.mrf.mxu0
      %v5210 = vadd.f32 %v5181, %v5209
      %v5211 = vpop.f32.mrf.mxu0
      %v5212 = vadd.f32 %v5183, %v5211
      %5213 = vmatmul.bf16.gmra.mxu0 %v1808
      %v5214 = vpop.f32.mrf.mxu0
      %v5215 = vadd.f32 %v5186, %v5214
      %v5216 = vpop.f32.mrf.mxu0
      %v5217 = vadd.f32 %v5188, %v5216
      %5218 = vmatmul.bf16.gmra.mxu0 %v1812
      %v5219 = vpop.f32.mrf.mxu0
      %v5220 = vadd.f32 %v5191, %v5219
      %v5221 = vpop.f32.mrf.mxu0
      %v5222 = vadd.f32 %v5193, %v5221
      %5223 = vmatmul.bf16.gmra.mxu0 %v1816
      %v5224 = vpop.f32.mrf.mxu0
      %v5225 = vadd.f32 %v5196, %v5224
      %v5226 = vpop.f32.mrf.mxu0
      %v5227 = vadd.f32 %v5198, %v5226
      %5228 = vdwg.mxu0
      %5229 = vmatpush.bf16.msra.mxu0 %v4777
      %5230 = vmatpush.bf16.msra.mxu0 %v4773
      %5231 = vmatpush.bf16.msra.mxu0 %v4769
      %5232 = vmatpush.bf16.msra.mxu0 %v4765
      %5233 = vmatpush.bf16.msra.mxu0 %v4761
      %5234 = vmatpush.bf16.msra.mxu0 %v4757
      %5235 = vmatpush.bf16.msra.mxu0 %v4753
      %5236 = vmatpush.bf16.msra.mxu0 %v4749
      %5237 = vmatmul.bf16.gmra.mxu0 %v1805
      %v5238 = vpop.f32.mrf.mxu0
      %v5239 = vadd.f32 %v5210, %v5238
      %v5240 = vpop.f32.mrf.mxu0
      %v5241 = vadd.f32 %v5212, %v5240
      %5242 = vmatmul.bf16.gmra.mxu0 %v1809
      %v5243 = vpop.f32.mrf.mxu0
      %v5244 = vadd.f32 %v5215, %v5243
      %v5245 = vpop.f32.mrf.mxu0
      %v5246 = vadd.f32 %v5217, %v5245
      %5247 = vmatmul.bf16.gmra.mxu0 %v1813
      %v5248 = vpop.f32.mrf.mxu0
      %v5249 = vadd.f32 %v5220, %v5248
      %v5250 = vpop.f32.mrf.mxu0
      %v5251 = vadd.f32 %v5222, %v5250
      %5252 = vmatmul.bf16.gmra.mxu0 %v1817
      %v5253 = vpop.f32.mrf.mxu0
      %v5254 = vadd.f32 %v5225, %v5253
      %v5255 = vpop.f32.mrf.mxu0
      %v5256 = vadd.f32 %v5227, %v5255
      %5257 = vdwg.mxu0
      %5258 = vmatpush.bf16.msra.mxu0 %v4809
      %5259 = vmatpush.bf16.msra.mxu0 %v4805
      %5260 = vmatpush.bf16.msra.mxu0 %v4801
      %5261 = vmatpush.bf16.msra.mxu0 %v4797
      %5262 = vmatpush.bf16.msra.mxu0 %v4793
      %5263 = vmatpush.bf16.msra.mxu0 %v4789
      %5264 = vmatpush.bf16.msra.mxu0 %v4785
      %5265 = vmatpush.bf16.msra.mxu0 %v4781
      %5266 = vmatmul.bf16.gmra.mxu0 %v1806
      %v5267 = vpop.f32.mrf.mxu0
      %v5268 = vadd.f32 %v5239, %v5267
      %v5269 = vpop.f32.mrf.mxu0
      %v5270 = vadd.f32 %v5241, %v5269
      %5271 = vmatmul.bf16.gmra.mxu0 %v1810
      %v5272 = vpop.f32.mrf.mxu0
      %v5273 = vadd.f32 %v5244, %v5272
      %v5274 = vpop.f32.mrf.mxu0
      %v5275 = vadd.f32 %v5246, %v5274
      %5276 = vmatmul.bf16.gmra.mxu0 %v1814
      %v5277 = vpop.f32.mrf.mxu0
      %v5278 = vadd.f32 %v5249, %v5277
      %v5279 = vpop.f32.mrf.mxu0
      %v5280 = vadd.f32 %v5251, %v5279
      %5281 = vmatmul.bf16.gmra.mxu0 %v1818
      %v5282 = vpop.f32.mrf.mxu0
      %v5283 = vadd.f32 %v5254, %v5282
      %v5284 = vpop.f32.mrf.mxu0
      %v5285 = vadd.f32 %v5256, %v5284
      %5286 = vdwg.mxu0
      %5287 = vmatpush.bf16.msra.mxu0 %v4714
      %5288 = vmatpush.bf16.msra.mxu0 %v4710
      %5289 = vmatpush.bf16.msra.mxu0 %v4706
      %5290 = vmatpush.bf16.msra.mxu0 %v4702
      %5291 = vmatpush.bf16.msra.mxu0 %v4698
      %5292 = vmatpush.bf16.msra.mxu0 %v4694
      %5293 = vmatpush.bf16.msra.mxu0 %v4690
      %5294 = vmatpush.bf16.msra.mxu0 %v4686
      %5295 = vmatmul.bf16.gmra.mxu0 %v1803
      %v5296 = vpop.f32.mrf.mxu0
      %v5297 = vadd.f32 %v4280, %v5296
      %v5298 = vpop.f32.mrf.mxu0
      %v5299 = vadd.f32 %v4282, %v5298
      %5300 = vmatmul.bf16.gmra.mxu0 %v1807
      %v5301 = vpop.f32.mrf.mxu0
      %v5302 = vadd.f32 %v4285, %v5301
      %v5303 = vpop.f32.mrf.mxu0
      %v5304 = vadd.f32 %v4287, %v5303
      %5305 = vmatmul.bf16.gmra.mxu0 %v1811
      %v5306 = vpop.f32.mrf.mxu0
      %v5307 = vadd.f32 %v4290, %v5306
      %v5308 = vpop.f32.mrf.mxu0
      %v5309 = vadd.f32 %v4292, %v5308
      %5310 = vmatmul.bf16.gmra.mxu0 %v1815
      %v5311 = vpop.f32.mrf.mxu0
      %v5312 = vadd.f32 %v4295, %v5311
      %v5313 = vpop.f32.mrf.mxu0
      %v5314 = vadd.f32 %v4297, %v5313
      %5315 = vdwg.mxu0
      %5316 = vmatpush.bf16.msra.mxu0 %v4746
      %5317 = vmatpush.bf16.msra.mxu0 %v4742
      %5318 = vmatpush.bf16.msra.mxu0 %v4738
      %5319 = vmatpush.bf16.msra.mxu0 %v4734
      %5320 = vmatpush.bf16.msra.mxu0 %v4730
      %5321 = vmatpush.bf16.msra.mxu0 %v4726
      %5322 = vmatpush.bf16.msra.mxu0 %v4722
      %5323 = vmatpush.bf16.msra.mxu0 %v4718
      %5324 = vmatmul.bf16.gmra.mxu0 %v1804
      %v5325 = vpop.f32.mrf.mxu0
      %v5326 = vadd.f32 %v5297, %v5325
      %v5327 = vpop.f32.mrf.mxu0
      %v5328 = vadd.f32 %v5299, %v5327
      %5329 = vmatmul.bf16.gmra.mxu0 %v1808
      %v5330 = vpop.f32.mrf.mxu0
      %v5331 = vadd.f32 %v5302, %v5330
      %v5332 = vpop.f32.mrf.mxu0
      %v5333 = vadd.f32 %v5304, %v5332
      %5334 = vmatmul.bf16.gmra.mxu0 %v1812
      %v5335 = vpop.f32.mrf.mxu0
      %v5336 = vadd.f32 %v5307, %v5335
      %v5337 = vpop.f32.mrf.mxu0
      %v5338 = vadd.f32 %v5309, %v5337
      %5339 = vmatmul.bf16.gmra.mxu0 %v1816
      %v5340 = vpop.f32.mrf.mxu0
      %v5341 = vadd.f32 %v5312, %v5340
      %v5342 = vpop.f32.mrf.mxu0
      %v5343 = vadd.f32 %v5314, %v5342
      %5344 = vdwg.mxu0
      %5345 = vmatpush.bf16.msra.mxu0 %v4778
      %5346 = vmatpush.bf16.msra.mxu0 %v4774
      %5347 = vmatpush.bf16.msra.mxu0 %v4770
      %5348 = vmatpush.bf16.msra.mxu0 %v4766
      %5349 = vmatpush.bf16.msra.mxu0 %v4762
      %5350 = vmatpush.bf16.msra.mxu0 %v4758
      %5351 = vmatpush.bf16.msra.mxu0 %v4754
      %5352 = vmatpush.bf16.msra.mxu0 %v4750
      %5353 = vmatmul.bf16.gmra.mxu0 %v1805
      %v5354 = vpop.f32.mrf.mxu0
      %v5355 = vadd.f32 %v5326, %v5354
      %v5356 = vpop.f32.mrf.mxu0
      %v5357 = vadd.f32 %v5328, %v5356
      %5358 = vmatmul.bf16.gmra.mxu0 %v1809
      %v5359 = vpop.f32.mrf.mxu0
      %v5360 = vadd.f32 %v5331, %v5359
      %v5361 = vpop.f32.mrf.mxu0
      %v5362 = vadd.f32 %v5333, %v5361
      %5363 = vmatmul.bf16.gmra.mxu0 %v1813
      %v5364 = vpop.f32.mrf.mxu0
      %v5365 = vadd.f32 %v5336, %v5364
      %v5366 = vpop.f32.mrf.mxu0
      %v5367 = vadd.f32 %v5338, %v5366
      %5368 = vmatmul.bf16.gmra.mxu0 %v1817
      %v5369 = vpop.f32.mrf.mxu0
      %v5370 = vadd.f32 %v5341, %v5369
      %v5371 = vpop.f32.mrf.mxu0
      %v5372 = vadd.f32 %v5343, %v5371
      %5373 = vdwg.mxu0
      %5374 = vmatpush.bf16.msra.mxu0 %v4810
      %5375 = vmatpush.bf16.msra.mxu0 %v4806
      %5376 = vmatpush.bf16.msra.mxu0 %v4802
      %5377 = vmatpush.bf16.msra.mxu0 %v4798
      %5378 = vmatpush.bf16.msra.mxu0 %v4794
      %5379 = vmatpush.bf16.msra.mxu0 %v4790
      %5380 = vmatpush.bf16.msra.mxu0 %v4786
      %5381 = vmatpush.bf16.msra.mxu0 %v4782
      %5382 = vmatmul.bf16.gmra.mxu0 %v1806
      %v5383 = vpop.f32.mrf.mxu0
      %v5384 = vadd.f32 %v5355, %v5383
      %v5385 = vpop.f32.mrf.mxu0
      %v5386 = vadd.f32 %v5357, %v5385
      %5387 = vmatmul.bf16.gmra.mxu0 %v1810
      %v5388 = vpop.f32.mrf.mxu0
      %v5389 = vadd.f32 %v5360, %v5388
      %v5390 = vpop.f32.mrf.mxu0
      %v5391 = vadd.f32 %v5362, %v5390
      %5392 = vmatmul.bf16.gmra.mxu0 %v1814
      %v5393 = vpop.f32.mrf.mxu0
      %v5394 = vadd.f32 %v5365, %v5393
      %v5395 = vpop.f32.mrf.mxu0
      %v5396 = vadd.f32 %v5367, %v5395
      %5397 = vmatmul.bf16.gmra.mxu0 %v1818
      %v5398 = vpop.f32.mrf.mxu0
      %v5399 = vadd.f32 %v5370, %v5398
      %v5400 = vpop.f32.mrf.mxu0
      %v5401 = vadd.f32 %v5372, %v5400
      %5402 = vdwg.mxu0
      %v5403 = vrot.slane %v5036, 1
      %v5404 = vrot.slane %v5152, 1
      %v5405 = vrot.slane %v5268, 1
      %v5406 = vrot.slane %v5384, 1
      %v5407 = vrot.slane %v5038, 1
      %v5408 = vrot.slane %v5154, 1
      %v5409 = vrot.slane %v5270, 1
      %v5410 = vrot.slane %v5386, 1
      %v5411 = vrot.slane %v5041, 1
      %v5412 = vrot.slane %v5157, 1
      %v5413 = vrot.slane %v5273, 1
      %v5414 = vrot.slane %v5389, 1
      %v5415 = vrot.slane %v5043, 1
      %v5416 = vrot.slane %v5159, 1
      %v5417 = vrot.slane %v5275, 1
      %v5418 = vrot.slane %v5391, 1
      %v5419 = vrot.slane %v5046, 1
      %v5420 = vrot.slane %v5162, 1
      %v5421 = vrot.slane %v5278, 1
      %v5422 = vrot.slane %v5394, 1
      %v5423 = vrot.slane %v5048, 1
      %v5424 = vrot.slane %v5164, 1
      %v5425 = vrot.slane %v5280, 1
      %v5426 = vrot.slane %v5396, 1
      %v5427 = vrot.slane %v5051, 1
      %v5428 = vrot.slane %v5167, 1
      %v5429 = vrot.slane %v5283, 1
      %v5430 = vrot.slane %v5399, 1
      %v5431 = vrot.slane %v5053, 1
      %v5432 = vrot.slane %v5169, 1
      %v5433 = vrot.slane %v5285, 1
      %v5434 = vrot.slane %v5401, 1
      %v5435 = vlaneseq
      %v5436 = vshrl.u32 %v5435, 7
      %vm5437 = vcmp.lt.s32.totalorder %v5436, 7
      %v5438 = vsel %vm5437, %v5427, %v5431
      %v5439 = vsel %vm5437, %v5428, %v5432
      %v5440 = vsel %vm5437, %v5429, %v5433
      %v5441 = vsel %vm5437, %v5430, %v5434
      %v5442 = vsel %vm5437, %v5423, %v5427
      %v5443 = vsel %vm5437, %v5424, %v5428
      %v5444 = vsel %vm5437, %v5425, %v5429
      %v5445 = vsel %vm5437, %v5426, %v5430
      %v5446 = vsel %vm5437, %v5419, %v5423
      %v5447 = vsel %vm5437, %v5420, %v5424
      %v5448 = vsel %vm5437, %v5421, %v5425
      %v5449 = vsel %vm5437, %v5422, %v5426
      %v5450 = vsel %vm5437, %v5415, %v5419
      %v5451 = vsel %vm5437, %v5416, %v5420
      %v5452 = vsel %vm5437, %v5417, %v5421
      %v5453 = vsel %vm5437, %v5418, %v5422
      %v5454 = vsel %vm5437, %v5411, %v5415
      %v5455 = vsel %vm5437, %v5412, %v5416
      %v5456 = vsel %vm5437, %v5413, %v5417
      %v5457 = vsel %vm5437, %v5414, %v5418
      %v5458 = vsel %vm5437, %v5407, %v5411
      %v5459 = vsel %vm5437, %v5408, %v5412
      %v5460 = vsel %vm5437, %v5409, %v5413
      %v5461 = vsel %vm5437, %v5410, %v5414
      %v5462 = vsel %vm5437, %v5403, %v5407
      %v5463 = vsel %vm5437, %v5404, %v5408
      %v5464 = vsel %vm5437, %v5405, %v5409
      %v5465 = vsel %vm5437, %v5406, %v5410
      %v5466 = vsel %vm5437, %v5431, %v5403
      %v5467 = vsel %vm5437, %v5432, %v5404
      %v5468 = vsel %vm5437, %v5433, %v5405
      %v5469 = vsel %vm5437, %v5434, %v5406
      %v5470 = vadd.f32 %v2572, %v5462
      %v5471 = vadd.f32 %v2688, %v5463
      %v5472 = vadd.f32 %v2804, %v5464
      %v5473 = vadd.f32 %v2920, %v5465
      %v5474 = vadd.f32 %v2574, %v5458
      %v5475 = vadd.f32 %v2690, %v5459
      %v5476 = vadd.f32 %v2806, %v5460
      %v5477 = vadd.f32 %v2922, %v5461
      %v5478 = vadd.f32 %v2577, %v5454
      %v5479 = vadd.f32 %v2693, %v5455
      %v5480 = vadd.f32 %v2809, %v5456
      %v5481 = vadd.f32 %v2925, %v5457
      %v5482 = vadd.f32 %v2579, %v5450
      %v5483 = vadd.f32 %v2695, %v5451
      %v5484 = vadd.f32 %v2811, %v5452
      %v5485 = vadd.f32 %v2927, %v5453
      %v5486 = vadd.f32 %v2582, %v5446
      %v5487 = vadd.f32 %v2698, %v5447
      %v5488 = vadd.f32 %v2814, %v5448
      %v5489 = vadd.f32 %v2930, %v5449
      %v5490 = vadd.f32 %v2584, %v5442
      %v5491 = vadd.f32 %v2700, %v5443
      %v5492 = vadd.f32 %v2816, %v5444
      %v5493 = vadd.f32 %v2932, %v5445
      %v5494 = vadd.f32 %v2587, %v5438
      %v5495 = vadd.f32 %v2703, %v5439
      %v5496 = vadd.f32 %v2819, %v5440
      %v5497 = vadd.f32 %v2935, %v5441
      %v5498 = vadd.f32 %v2589, %v5466
      %v5499 = vadd.f32 %v2705, %v5467
      %v5500 = vadd.f32 %v2821, %v5468
      %v5501 = vadd.f32 %v2937, %v5469
      %v5502 = vld [vmem:[%s3] sm:$0xf]
      %v5504 = vperm.slane %v5502, 0
      %v5505 = vperm.slane %v5502, 1
      %v5506 = vperm.slane %v5502, 2
      %v5507 = vperm.slane %v5502, 3
      %v5512 = vadd.f32 %v5470, %v5504
      %v5513 = vadd.f32 %v5471, %v5505
      %v5514 = vadd.f32 %v5472, %v5506
      %v5515 = vadd.f32 %v5473, %v5507
      %v5516 = vadd.f32 %v5474, %v5504
      %v5517 = vadd.f32 %v5475, %v5505
      %v5518 = vadd.f32 %v5476, %v5506
      %v5519 = vadd.f32 %v5477, %v5507
      %v5520 = vadd.f32 %v5478, %v5504
      %v5521 = vadd.f32 %v5479, %v5505
      %v5522 = vadd.f32 %v5480, %v5506
      %v5523 = vadd.f32 %v5481, %v5507
      %v5524 = vadd.f32 %v5482, %v5504
      %v5525 = vadd.f32 %v5483, %v5505
      %v5526 = vadd.f32 %v5484, %v5506
      %v5527 = vadd.f32 %v5485, %v5507
      %v5528 = vadd.f32 %v5486, %v5504
      %v5529 = vadd.f32 %v5487, %v5505
      %v5530 = vadd.f32 %v5488, %v5506
      %v5531 = vadd.f32 %v5489, %v5507
      %v5532 = vadd.f32 %v5490, %v5504
      %v5533 = vadd.f32 %v5491, %v5505
      %v5534 = vadd.f32 %v5492, %v5506
      %v5535 = vadd.f32 %v5493, %v5507
      %v5536 = vadd.f32 %v5494, %v5504
      %v5537 = vadd.f32 %v5495, %v5505
      %v5538 = vadd.f32 %v5496, %v5506
      %v5539 = vadd.f32 %v5497, %v5507
      %v5540 = vadd.f32 %v5498, %v5504
      %v5541 = vadd.f32 %v5499, %v5505
      %v5542 = vadd.f32 %v5500, %v5506
      %v5543 = vadd.f32 %v5501, %v5507
      %v5544 = vmax.f32 %v5512, 0.0
      %v5545 = vmax.f32 %v5513, 0.0
      %v5546 = vmax.f32 %v5514, 0.0
      %v5547 = vmax.f32 %v5515, 0.0
      %v5548 = vmax.f32 %v5516, 0.0
      %v5549 = vmax.f32 %v5517, 0.0
      %v5550 = vmax.f32 %v5518, 0.0
      %v5551 = vmax.f32 %v5519, 0.0
      %v5552 = vmax.f32 %v5520, 0.0
      %v5553 = vmax.f32 %v5521, 0.0
      %v5554 = vmax.f32 %v5522, 0.0
      %v5555 = vmax.f32 %v5523, 0.0
      %v5556 = vmax.f32 %v5524, 0.0
      %v5557 = vmax.f32 %v5525, 0.0
      %v5558 = vmax.f32 %v5526, 0.0
      %v5559 = vmax.f32 %v5527, 0.0
      %v5560 = vmax.f32 %v5528, 0.0
      %v5561 = vmax.f32 %v5529, 0.0
      %v5562 = vmax.f32 %v5530, 0.0
      %v5563 = vmax.f32 %v5531, 0.0
      %v5564 = vmax.f32 %v5532, 0.0
      %v5565 = vmax.f32 %v5533, 0.0
      %v5566 = vmax.f32 %v5534, 0.0
      %v5567 = vmax.f32 %v5535, 0.0
      %v5568 = vmax.f32 %v5536, 0.0
      %v5569 = vmax.f32 %v5537, 0.0
      %v5570 = vmax.f32 %v5538, 0.0
      %v5571 = vmax.f32 %v5539, 0.0
      %v5572 = vmax.f32 %v5540, 0.0
      %v5573 = vmax.f32 %v5541, 0.0
      %v5574 = vmax.f32 %v5542, 0.0
      %v5575 = vmax.f32 %v5543, 0.0
      %v5576 = vpack.c.bf16 %v5548, %v5544
      %v5577 = vpack.c.bf16 %v5549, %v5545
      %v5578 = vpack.c.bf16 %v5550, %v5546
      %v5579 = vpack.c.bf16 %v5551, %v5547
      %v5580 = vpack.c.bf16 %v5556, %v5552
      %v5581 = vpack.c.bf16 %v5557, %v5553
      %v5582 = vpack.c.bf16 %v5558, %v5554
      %v5583 = vpack.c.bf16 %v5559, %v5555
      %v5584 = vpack.c.bf16 %v5564, %v5560
      %v5585 = vpack.c.bf16 %v5565, %v5561
      %v5586 = vpack.c.bf16 %v5566, %v5562
      %v5587 = vpack.c.bf16 %v5567, %v5563
      %v5588 = vpack.c.bf16 %v5572, %v5568
      %v5589 = vpack.c.bf16 %v5573, %v5569
      %v5590 = vpack.c.bf16 %v5574, %v5570
      %v5591 = vpack.c.bf16 %v5575, %v5571
      %v5592 = vld [vmem:[%s4] sm:$0xf]
      %v5593 = vld [vmem:[%s4 + $0x4] sm:$0xf]
      %v5594 = vld [vmem:[%s4 + $0x8] sm:$0xf]
      %v5595 = vld [vmem:[%s4 + $0xc] sm:$0xf]
      %v5596 = vld [vmem:[%s4 + $0x10] sm:$0xf]
      %v5597 = vld [vmem:[%s4 + $0x14] sm:$0xf]
      %v5598 = vld [vmem:[%s4 + $0x18] sm:$0xf]
      %v5599 = vld [vmem:[%s4 + $0x1c] sm:$0xf]
      %v5600 = vld [vmem:[%s4 + $0x20] sm:$0xf]
      %v5601 = vld [vmem:[%s4 + $0x24] sm:$0xf]
      %v5602 = vld [vmem:[%s4 + $0x28] sm:$0xf]
      %v5603 = vld [vmem:[%s4 + $0x2c] sm:$0xf]
      %v5604 = vld [vmem:[%s4 + $0x30] sm:$0xf]
      %v5605 = vld [vmem:[%s4 + $0x34] sm:$0xf]
      %v5606 = vld [vmem:[%s4 + $0x38] sm:$0xf]
      %v5607 = vld [vmem:[%s4 + $0x3c] sm:$0xf]
      %v5608 = vld [vmem:[%s4 + $0x40] sm:$0xf]
      %v5609 = vld [vmem:[%s4 + $0x44] sm:$0xf]
      %v5610 = vld [vmem:[%s4 + $0x48] sm:$0xf]
      %v5611 = vld [vmem:[%s4 + $0x4c] sm:$0xf]
      %v5612 = vld [vmem:[%s4 + $0x50] sm:$0xf]
      %v5613 = vld [vmem:[%s4 + $0x54] sm:$0xf]
      %v5614 = vld [vmem:[%s4 + $0x58] sm:$0xf]
      %v5615 = vld [vmem:[%s4 + $0x5c] sm:$0xf]
      %v5616 = vld [vmem:[%s4 + $0x60] sm:$0xf]
      %v5617 = vld [vmem:[%s4 + $0x64] sm:$0xf]
      %v5618 = vld [vmem:[%s4 + $0x68] sm:$0xf]
      %v5619 = vld [vmem:[%s4 + $0x6c] sm:$0xf]
      %v5620 = vld [vmem:[%s4 + $0x70] sm:$0xf]
      %v5621 = vld [vmem:[%s4 + $0x74] sm:$0xf]
      %v5622 = vld [vmem:[%s4 + $0x78] sm:$0xf]
      %v5623 = vld [vmem:[%s4 + $0x7c] sm:$0xf]
      %v5624 = vld [vmem:[%s4 + $0x80] sm:$0xf]
      %v5625 = vld [vmem:[%s4 + $0x84] sm:$0xf]
      %v5626 = vld [vmem:[%s4 + $0x88] sm:$0xf]
      %v5627 = vld [vmem:[%s4 + $0x8c] sm:$0xf]
      %v5628 = vld [vmem:[%s4 + $0x90] sm:$0xf]
      %v5629 = vld [vmem:[%s4 + $0x94] sm:$0xf]
      %v5630 = vld [vmem:[%s4 + $0x98] sm:$0xf]
      %v5631 = vld [vmem:[%s4 + $0x9c] sm:$0xf]
      %v5632 = vld [vmem:[%s4 + $0xa0] sm:$0xf]
      %v5633 = vld [vmem:[%s4 + $0xa4] sm:$0xf]
      %v5634 = vld [vmem:[%s4 + $0xa8] sm:$0xf]
      %v5635 = vld [vmem:[%s4 + $0xac] sm:$0xf]
      %v5636 = vld [vmem:[%s4 + $0xb0] sm:$0xf]
      %v5637 = vld [vmem:[%s4 + $0xb4] sm:$0xf]
      %v5638 = vld [vmem:[%s4 + $0xb8] sm:$0xf]
      %v5639 = vld [vmem:[%s4 + $0xbc] sm:$0xf]
      %v5640 = vld [vmem:[%s4 + $0xc0] sm:$0xf]
      %v5641 = vld [vmem:[%s4 + $0xc4] sm:$0xf]
      %v5642 = vld [vmem:[%s4 + $0xc8] sm:$0xf]
      %v5643 = vld [vmem:[%s4 + $0xcc] sm:$0xf]
      %v5644 = vld [vmem:[%s4 + $0xd0] sm:$0xf]
      %v5645 = vld [vmem:[%s4 + $0xd4] sm:$0xf]
      %v5646 = vld [vmem:[%s4 + $0xd8] sm:$0xf]
      %v5647 = vld [vmem:[%s4 + $0xdc] sm:$0xf]
      %v5648 = vld [vmem:[%s4 + $0xe0] sm:$0xf]
      %v5649 = vld [vmem:[%s4 + $0xe4] sm:$0xf]
      %v5650 = vld [vmem:[%s4 + $0xe8] sm:$0xf]
      %v5651 = vld [vmem:[%s4 + $0xec] sm:$0xf]
      %v5652 = vld [vmem:[%s4 + $0xf0] sm:$0xf]
      %v5653 = vld [vmem:[%s4 + $0xf4] sm:$0xf]
      %v5654 = vld [vmem:[%s4 + $0xf8] sm:$0xf]
      %v5655 = vld [vmem:[%s4 + $0xfc] sm:$0xf]
      %v5656 = vld [vmem:[%s5] sm:$0x1]
      %v5658 = vperm.slane %v5656, 0
      %v5724 = vunpack.c.l.b16 %v5592
      %v5725 = vunpack.c.l.b16 %v5593
      %v5726 = vunpack.c.l.b16 %v5594
      %v5727 = vunpack.c.l.b16 %v5595
      %v5728 = vunpack.c.l.b16 %v5596
      %v5729 = vunpack.c.l.b16 %v5597
      %v5730 = vunpack.c.l.b16 %v5598
      %v5731 = vunpack.c.l.b16 %v5599
      %v5732 = vunpack.c.l.b16 %v5600
      %v5733 = vunpack.c.l.b16 %v5601
      %v5734 = vunpack.c.l.b16 %v5602
      %v5735 = vunpack.c.l.b16 %v5603
      %v5736 = vunpack.c.l.b16 %v5604
      %v5737 = vunpack.c.l.b16 %v5605
      %v5738 = vunpack.c.l.b16 %v5606
      %v5739 = vunpack.c.l.b16 %v5607
      %v5740 = vunpack.c.l.b16 %v5608
      %v5741 = vunpack.c.l.b16 %v5609
      %v5742 = vunpack.c.l.b16 %v5610
      %v5743 = vunpack.c.l.b16 %v5611
      %v5744 = vunpack.c.l.b16 %v5612
      %v5745 = vunpack.c.l.b16 %v5613
      %v5746 = vunpack.c.l.b16 %v5614
      %v5747 = vunpack.c.l.b16 %v5615
      %v5748 = vunpack.c.l.b16 %v5616
      %v5749 = vunpack.c.l.b16 %v5617
      %v5750 = vunpack.c.l.b16 %v5618
      %v5751 = vunpack.c.l.b16 %v5619
      %v5752 = vunpack.c.l.b16 %v5620
      %v5753 = vunpack.c.l.b16 %v5621
      %v5754 = vunpack.c.l.b16 %v5622
      %v5755 = vunpack.c.l.b16 %v5623
      %v5756 = vunpack.c.l.b16 %v5624
      %v5757 = vunpack.c.l.b16 %v5625
      %v5758 = vunpack.c.l.b16 %v5626
      %v5759 = vunpack.c.l.b16 %v5627
      %v5760 = vunpack.c.l.b16 %v5628
      %v5761 = vunpack.c.l.b16 %v5629
      %v5762 = vunpack.c.l.b16 %v5630
      %v5763 = vunpack.c.l.b16 %v5631
      %v5764 = vunpack.c.l.b16 %v5632
      %v5765 = vunpack.c.l.b16 %v5633
      %v5766 = vunpack.c.l.b16 %v5634
      %v5767 = vunpack.c.l.b16 %v5635
      %v5768 = vunpack.c.l.b16 %v5636
      %v5769 = vunpack.c.l.b16 %v5637
      %v5770 = vunpack.c.l.b16 %v5638
      %v5771 = vunpack.c.l.b16 %v5639
      %v5772 = vunpack.c.l.b16 %v5640
      %v5773 = vunpack.c.l.b16 %v5641
      %v5774 = vunpack.c.l.b16 %v5642
      %v5775 = vunpack.c.l.b16 %v5643
      %v5776 = vunpack.c.l.b16 %v5644
      %v5777 = vunpack.c.l.b16 %v5645
      %v5778 = vunpack.c.l.b16 %v5646
      %v5779 = vunpack.c.l.b16 %v5647
      %v5780 = vunpack.c.l.b16 %v5648
      %v5781 = vunpack.c.l.b16 %v5649
      %v5782 = vunpack.c.l.b16 %v5650
      %v5783 = vunpack.c.l.b16 %v5651
      %v5784 = vunpack.c.l.b16 %v5652
      %v5785 = vunpack.c.l.b16 %v5653
      %v5786 = vunpack.c.l.b16 %v5654
      %v5787 = vunpack.c.l.b16 %v5655
      %v5788 = vpack.c.b16 %v5725, %v5724
      %v5789 = vpack.c.b16 %v5727, %v5726
      %v5790 = vpack.c.b16 %v5729, %v5728
      %v5791 = vpack.c.b16 %v5731, %v5730
      %v5792 = vpack.c.b16 %v5733, %v5732
      %v5793 = vpack.c.b16 %v5735, %v5734
      %v5794 = vpack.c.b16 %v5737, %v5736
      %v5795 = vpack.c.b16 %v5739, %v5738
      %v5796 = vpack.c.b16 %v5741, %v5740
      %v5797 = vpack.c.b16 %v5743, %v5742
      %v5798 = vpack.c.b16 %v5745, %v5744
      %v5799 = vpack.c.b16 %v5747, %v5746
      %v5800 = vpack.c.b16 %v5749, %v5748
      %v5801 = vpack.c.b16 %v5751, %v5750
      %v5802 = vpack.c.b16 %v5753, %v5752
      %v5803 = vpack.c.b16 %v5755, %v5754
      %v5804 = vpack.c.b16 %v5757, %v5756
      %v5805 = vpack.c.b16 %v5759, %v5758
      %v5806 = vpack.c.b16 %v5761, %v5760
      %v5807 = vpack.c.b16 %v5763, %v5762
      %v5808 = vpack.c.b16 %v5765, %v5764
      %v5809 = vpack.c.b16 %v5767, %v5766
      %v5810 = vpack.c.b16 %v5769, %v5768
      %v5811 = vpack.c.b16 %v5771, %v5770
      %v5812 = vpack.c.b16 %v5773, %v5772
      %v5813 = vpack.c.b16 %v5775, %v5774
      %v5814 = vpack.c.b16 %v5777, %v5776
      %v5815 = vpack.c.b16 %v5779, %v5778
      %v5816 = vpack.c.b16 %v5781, %v5780
      %v5817 = vpack.c.b16 %v5783, %v5782
      %v5818 = vpack.c.b16 %v5785, %v5784
      %v5819 = vpack.c.b16 %v5787, %v5786
      %5852 = vmatpush.bf16.msra.mxu0 %v5795
      %5853 = vmatpush.bf16.msra.mxu0 %v5794
      %5854 = vmatpush.bf16.msra.mxu0 %v5793
      %5855 = vmatpush.bf16.msra.mxu0 %v5792
      %5856 = vmatpush.bf16.msra.mxu0 %v5791
      %5857 = vmatpush.bf16.msra.mxu0 %v5790
      %5858 = vmatpush.bf16.msra.mxu0 %v5789
      %5859 = vmatpush.bf16.msra.mxu0 %v5788
      %5860 = vmatmul.bf16.gmra.mxu0 %v5576
      %v5861 = vpop.f32.mrf.mxu0
      %v5862 = vadd.f32 %v5658, %v5861
      %v5863 = vpop.f32.mrf.mxu0
      %v5864 = vadd.f32 %v5658, %v5863
      %5865 = vmatmul.bf16.gmra.mxu0 %v5580
      %v5866 = vpop.f32.mrf.mxu0
      %v5867 = vadd.f32 %v5658, %v5866
      %v5868 = vpop.f32.mrf.mxu0
      %v5869 = vadd.f32 %v5658, %v5868
      %5870 = vmatmul.bf16.gmra.mxu0 %v5584
      %v5871 = vpop.f32.mrf.mxu0
      %v5872 = vadd.f32 %v5658, %v5871
      %v5873 = vpop.f32.mrf.mxu0
      %v5874 = vadd.f32 %v5658, %v5873
      %5875 = vmatmul.bf16.gmra.mxu0 %v5588
      %v5876 = vpop.f32.mrf.mxu0
      %v5877 = vadd.f32 %v5658, %v5876
      %v5878 = vpop.f32.mrf.mxu0
      %v5879 = vadd.f32 %v5658, %v5878
      %5880 = vdwg.mxu0
      %5881 = vmatpush.bf16.msra.mxu0 %v5803
      %5882 = vmatpush.bf16.msra.mxu0 %v5802
      %5883 = vmatpush.bf16.msra.mxu0 %v5801
      %5884 = vmatpush.bf16.msra.mxu0 %v5800
      %5885 = vmatpush.bf16.msra.mxu0 %v5799
      %5886 = vmatpush.bf16.msra.mxu0 %v5798
      %5887 = vmatpush.bf16.msra.mxu0 %v5797
      %5888 = vmatpush.bf16.msra.mxu0 %v5796
      %5889 = vmatmul.bf16.gmra.mxu0 %v5577
      %v5890 = vpop.f32.mrf.mxu0
      %v5891 = vadd.f32 %v5862, %v5890
      %v5892 = vpop.f32.mrf.mxu0
      %v5893 = vadd.f32 %v5864, %v5892
      %5894 = vmatmul.bf16.gmra.mxu0 %v5581
      %v5895 = vpop.f32.mrf.mxu0
      %v5896 = vadd.f32 %v5867, %v5895
      %v5897 = vpop.f32.mrf.mxu0
      %v5898 = vadd.f32 %v5869, %v5897
      %5899 = vmatmul.bf16.gmra.mxu0 %v5585
      %v5900 = vpop.f32.mrf.mxu0
      %v5901 = vadd.f32 %v5872, %v5900
      %v5902 = vpop.f32.mrf.mxu0
      %v5903 = vadd.f32 %v5874, %v5902
      %5904 = vmatmul.bf16.gmra.mxu0 %v5589
      %v5905 = vpop.f32.mrf.mxu0
      %v5906 = vadd.f32 %v5877, %v5905
      %v5907 = vpop.f32.mrf.mxu0
      %v5908 = vadd.f32 %v5879, %v5907
      %5909 = vdwg.mxu0
      %5910 = vmatpush.bf16.msra.mxu0 %v5811
      %5911 = vmatpush.bf16.msra.mxu0 %v5810
      %5912 = vmatpush.bf16.msra.mxu0 %v5809
      %5913 = vmatpush.bf16.msra.mxu0 %v5808
      %5914 = vmatpush.bf16.msra.mxu0 %v5807
      %5915 = vmatpush.bf16.msra.mxu0 %v5806
      %5916 = vmatpush.bf16.msra.mxu0 %v5805
      %5917 = vmatpush.bf16.msra.mxu0 %v5804
      %5918 = vmatmul.bf16.gmra.mxu0 %v5578
      %v5919 = vpop.f32.mrf.mxu0
      %v5920 = vadd.f32 %v5891, %v5919
      %v5921 = vpop.f32.mrf.mxu0
      %v5922 = vadd.f32 %v5893, %v5921
      %5923 = vmatmul.bf16.gmra.mxu0 %v5582
      %v5924 = vpop.f32.mrf.mxu0
      %v5925 = vadd.f32 %v5896, %v5924
      %v5926 = vpop.f32.mrf.mxu0
      %v5927 = vadd.f32 %v5898, %v5926
      %5928 = vmatmul.bf16.gmra.mxu0 %v5586
      %v5929 = vpop.f32.mrf.mxu0
      %v5930 = vadd.f32 %v5901, %v5929
      %v5931 = vpop.f32.mrf.mxu0
      %v5932 = vadd.f32 %v5903, %v5931
      %5933 = vmatmul.bf16.gmra.mxu0 %v5590
      %v5934 = vpop.f32.mrf.mxu0
      %v5935 = vadd.f32 %v5906, %v5934
      %v5936 = vpop.f32.mrf.mxu0
      %v5937 = vadd.f32 %v5908, %v5936
      %5938 = vdwg.mxu0
      %5939 = vmatpush.bf16.msra.mxu0 %v5819
      %5940 = vmatpush.bf16.msra.mxu0 %v5818
      %5941 = vmatpush.bf16.msra.mxu0 %v5817
      %5942 = vmatpush.bf16.msra.mxu0 %v5816
      %5943 = vmatpush.bf16.msra.mxu0 %v5815
      %5944 = vmatpush.bf16.msra.mxu0 %v5814
      %5945 = vmatpush.bf16.msra.mxu0 %v5813
      %5946 = vmatpush.bf16.msra.mxu0 %v5812
      %5947 = vmatmul.bf16.gmra.mxu0 %v5579
      %v5948 = vpop.f32.mrf.mxu0
      %v5949 = vadd.f32 %v5920, %v5948
      %v5950 = vpop.f32.mrf.mxu0
      %v5951 = vadd.f32 %v5922, %v5950
      %5952 = vmatmul.bf16.gmra.mxu0 %v5583
      %v5953 = vpop.f32.mrf.mxu0
      %v5954 = vadd.f32 %v5925, %v5953
      %v5955 = vpop.f32.mrf.mxu0
      %v5956 = vadd.f32 %v5927, %v5955
      %5957 = vmatmul.bf16.gmra.mxu0 %v5587
      %v5958 = vpop.f32.mrf.mxu0
      %v5959 = vadd.f32 %v5930, %v5958
      %v5960 = vpop.f32.mrf.mxu0
      %v5961 = vadd.f32 %v5932, %v5960
      %5962 = vmatmul.bf16.gmra.mxu0 %v5591
      %v5963 = vpop.f32.mrf.mxu0
      %v5964 = vadd.f32 %v5935, %v5963
      %v5965 = vpop.f32.mrf.mxu0
      %v5966 = vadd.f32 %v5937, %v5965
      %5967 = vdwg.mxu0
      %v5968 = vlaneseq
      %v5969 = vand.u32 %v5968, 127
      %vm5970 = vcmp.lt.s32.totalorder %v5969, 15
      %v5971 = vxor.u32 %v5949, 2147483648
      %v5972 = vxor.u32 %v5951, 2147483648
      %v5973 = vxor.u32 %v5954, 2147483648
      %v5974 = vxor.u32 %v5956, 2147483648
      %v5975 = vxor.u32 %v5959, 2147483648
      %v5976 = vxor.u32 %v5961, 2147483648
      %v5977 = vxor.u32 %v5964, 2147483648
      %v5978 = vxor.u32 %v5966, 2147483648
      %v5979 = vmul.f32 %v5971, 1.442695
      %v5980 = vpow.pop %v5979
      %v5981 = vmul.f32 %v5972, 1.442695
      %v5982 = vpow.pop %v5981
      %v5983 = vmul.f32 %v5973, 1.442695
      %v5984 = vpow.pop %v5983
      %v5985 = vmul.f32 %v5974, 1.442695
      %v5986 = vpow.pop %v5985
      %v5987 = vmul.f32 %v5975, 1.442695
      %v5988 = vpow.pop %v5987
      %v5989 = vmul.f32 %v5976, 1.442695
      %v5990 = vpow.pop %v5989
      %v5991 = vmul.f32 %v5977, 1.442695
      %v5992 = vpow.pop %v5991
      %v5993 = vmul.f32 %v5978, 1.442695
      %v5994 = vpow.pop %v5993
      %v5995 = vadd.f32 %v5980, 1.0
      %v5996 = vadd.f32 %v5982, 1.0
      %v5997 = vadd.f32 %v5984, 1.0
      %v5998 = vadd.f32 %v5986, 1.0
      %v5999 = vadd.f32 %v5988, 1.0
      %v6000 = vadd.f32 %v5990, 1.0
      %v6001 = vadd.f32 %v5992, 1.0
      %v6002 = vadd.f32 %v5994, 1.0
      %v6003 = vrcp.pop %v5995
      %v6004 = vmul.f32 %v5995, %v6003
      %v6005 = vsub.f32 1.0, %v6004
      %v6006 = vmul.f32 %v6003, %v6005
      %v6007 = vadd.f32 %v6003, %v6006
      %vm6008 = vweird.f32 %v5995
      %vm6009 = vweird.f32 %v6003
      %vm6010 = vmor %vm6008, %vm6009
      %v6011 = vsel %vm6010, %v6003, %v6007
      %v6012 = vand.u32 2147483647, %v5995
      %vm6013 = vcmp.eq.f32.partialorder %v6012, 8.507059e+37
      %v6014 = vand.u32 %v5995, 2147483648
      %v6015 = vor.u32 1.1754944e-38, %v6014
      %v6016 = vsel %vm6013, %v6015, %v6011
      %v6017 = vmul.f32 1.0, %v6016
      %v6018 = vrcp.pop %v5996
      %v6019 = vmul.f32 %v5996, %v6018
      %v6020 = vsub.f32 1.0, %v6019
      %v6021 = vmul.f32 %v6018, %v6020
      %v6022 = vadd.f32 %v6018, %v6021
      %vm6023 = vweird.f32 %v5996
      %vm6024 = vweird.f32 %v6018
      %vm6025 = vmor %vm6023, %vm6024
      %v6026 = vsel %vm6025, %v6018, %v6022
      %v6027 = vand.u32 2147483647, %v5996
      %vm6028 = vcmp.eq.f32.partialorder %v6027, 8.507059e+37
      %v6029 = vand.u32 %v5996, 2147483648
      %v6030 = vor.u32 1.1754944e-38, %v6029
      %v6031 = vsel %vm6028, %v6030, %v6026
      %v6032 = vmul.f32 1.0, %v6031
      %v6033 = vrcp.pop %v5997
      %v6034 = vmul.f32 %v5997, %v6033
      %v6035 = vsub.f32 1.0, %v6034
      %v6036 = vmul.f32 %v6033, %v6035
      %v6037 = vadd.f32 %v6033, %v6036
      %vm6038 = vweird.f32 %v5997
      %vm6039 = vweird.f32 %v6033
      %vm6040 = vmor %vm6038, %vm6039
      %v6041 = vsel %vm6040, %v6033, %v6037
      %v6042 = vand.u32 2147483647, %v5997
      %vm6043 = vcmp.eq.f32.partialorder %v6042, 8.507059e+37
      %v6044 = vand.u32 %v5997, 2147483648
      %v6045 = vor.u32 1.1754944e-38, %v6044
      %v6046 = vsel %vm6043, %v6045, %v6041
      %v6047 = vmul.f32 1.0, %v6046
      %v6048 = vrcp.pop %v5998
      %v6049 = vmul.f32 %v5998, %v6048
      %v6050 = vsub.f32 1.0, %v6049
      %v6051 = vmul.f32 %v6048, %v6050
      %v6052 = vadd.f32 %v6048, %v6051
      %vm6053 = vweird.f32 %v5998
      %vm6054 = vweird.f32 %v6048
      %vm6055 = vmor %vm6053, %vm6054
      %v6056 = vsel %vm6055, %v6048, %v6052
      %v6057 = vand.u32 2147483647, %v5998
      %vm6058 = vcmp.eq.f32.partialorder %v6057, 8.507059e+37
      %v6059 = vand.u32 %v5998, 2147483648
      %v6060 = vor.u32 1.1754944e-38, %v6059
      %v6061 = vsel %vm6058, %v6060, %v6056
      %v6062 = vmul.f32 1.0, %v6061
      %v6063 = vrcp.pop %v5999
      %v6064 = vmul.f32 %v5999, %v6063
      %v6065 = vsub.f32 1.0, %v6064
      %v6066 = vmul.f32 %v6063, %v6065
      %v6067 = vadd.f32 %v6063, %v6066
      %vm6068 = vweird.f32 %v5999
      %vm6069 = vweird.f32 %v6063
      %vm6070 = vmor %vm6068, %vm6069
      %v6071 = vsel %vm6070, %v6063, %v6067
      %v6072 = vand.u32 2147483647, %v5999
      %vm6073 = vcmp.eq.f32.partialorder %v6072, 8.507059e+37
      %v6074 = vand.u32 %v5999, 2147483648
      %v6075 = vor.u32 1.1754944e-38, %v6074
      %v6076 = vsel %vm6073, %v6075, %v6071
      %v6077 = vmul.f32 1.0, %v6076
      %v6078 = vrcp.pop %v6000
      %v6079 = vmul.f32 %v6000, %v6078
      %v6080 = vsub.f32 1.0, %v6079
      %v6081 = vmul.f32 %v6078, %v6080
      %v6082 = vadd.f32 %v6078, %v6081
      %vm6083 = vweird.f32 %v6000
      %vm6084 = vweird.f32 %v6078
      %vm6085 = vmor %vm6083, %vm6084
      %v6086 = vsel %vm6085, %v6078, %v6082
      %v6087 = vand.u32 2147483647, %v6000
      %vm6088 = vcmp.eq.f32.partialorder %v6087, 8.507059e+37
      %v6089 = vand.u32 %v6000, 2147483648
      %v6090 = vor.u32 1.1754944e-38, %v6089
      %v6091 = vsel %vm6088, %v6090, %v6086
      %v6092 = vmul.f32 1.0, %v6091
      %v6093 = vrcp.pop %v6001
      %v6094 = vmul.f32 %v6001, %v6093
      %v6095 = vsub.f32 1.0, %v6094
      %v6096 = vmul.f32 %v6093, %v6095
      %v6097 = vadd.f32 %v6093, %v6096
      %vm6098 = vweird.f32 %v6001
      %vm6099 = vweird.f32 %v6093
      %vm6100 = vmor %vm6098, %vm6099
      %v6101 = vsel %vm6100, %v6093, %v6097
      %v6102 = vand.u32 2147483647, %v6001
      %vm6103 = vcmp.eq.f32.partialorder %v6102, 8.507059e+37
      %v6104 = vand.u32 %v6001, 2147483648
      %v6105 = vor.u32 1.1754944e-38, %v6104
      %v6106 = vsel %vm6103, %v6105, %v6101
      %v6107 = vmul.f32 1.0, %v6106
      %v6108 = vrcp.pop %v6002
      %v6109 = vmul.f32 %v6002, %v6108
      %v6110 = vsub.f32 1.0, %v6109
      %v6111 = vmul.f32 %v6108, %v6110
      %v6112 = vadd.f32 %v6108, %v6111
      %vm6113 = vweird.f32 %v6002
      %vm6114 = vweird.f32 %v6108
      %vm6115 = vmor %vm6113, %vm6114
      %v6116 = vsel %vm6115, %v6108, %v6112
      %v6117 = vand.u32 2147483647, %v6002
      %vm6118 = vcmp.eq.f32.partialorder %v6117, 8.507059e+37
      %v6119 = vand.u32 %v6002, 2147483648
      %v6120 = vor.u32 1.1754944e-38, %v6119
      %v6121 = vsel %vm6118, %v6120, %v6116
      %v6122 = vmul.f32 1.0, %v6121
      %v6123 = vmax.f32 %v5949, 0.0
      %v6124 = vmax.f32 %v5951, 0.0
      %v6125 = vmax.f32 %v5954, 0.0
      %v6126 = vmax.f32 %v5956, 0.0
      %v6127 = vmax.f32 %v5959, 0.0
      %v6128 = vmax.f32 %v5961, 0.0
      %v6129 = vmax.f32 %v5964, 0.0
      %v6130 = vmax.f32 %v5966, 0.0
      %v6131 = vsel %vm5970, %v6017, %v6123
      %v6132 = vsel %vm5970, %v6032, %v6124
      %v6133 = vsel %vm5970, %v6047, %v6125
      %v6134 = vsel %vm5970, %v6062, %v6126
      %v6135 = vsel %vm5970, %v6077, %v6127
      %v6136 = vsel %vm5970, %v6092, %v6128
      %v6137 = vsel %vm5970, %v6107, %v6129
      %v6138 = vsel %vm5970, %v6122, %v6130
      %6139 = vst [vmem:[%s281] sm:$0xff] %v6131
      %6140 = vst [vmem:[%s281 + $0x8] sm:$0xff] %v6132
      %6141 = vst [vmem:[%s281 + $0x10] sm:$0xff] %v6133
      %6142 = vst [vmem:[%s281 + $0x18] sm:$0xff] %v6134
      %6143 = vst [vmem:[%s281 + $0x20] sm:$0xff] %v6135
      %6144 = vst [vmem:[%s281 + $0x28] sm:$0xff] %v6136
      %6145 = vst [vmem:[%s281 + $0x30] sm:$0xff] %v6137
      %6146 = vst [vmem:[%s281 + $0x38] sm:$0xff] %v6138
      %s6147 = smul.u32 8, %s17
      %p6148 = scmp.lt.s32.totalorder %s6147, 15
      %s6149 = scalar_select %p6148, %s6147, 15
      %s6150 = smul.addr %s6149, 8
      %s6151 = scalar_lea.vmem %s6, %s6150
      // Predicated region
      $region45: #{rcnn_forward.1} parent=43 // pred_check
        %p6152 = pneg %p171
      $region46: #{rcnn_forward.1} parent=43 // pred_check_branch
        %6154 = sbr.rel (%p6152) target = $region48
      $region47: #{rcnn_forward.1} parent=43 // pred_region
        %s6155 = smul.u32 8, %s17
      $region48: #{rcnn_forward.1} parent=43 // pred_fallthru
        _
    $region44: #{rcnn_forward.1} parent=5 // pred_fallthru
      _
    %p6156 = scmp.le.s32.totalorder 2, %s12
    // Predicated region
    $region49: #{rcnn_forward.1} parent=5 // pred_check
      %p6157 = pneg %p6156
    $region50: #{rcnn_forward.1} parent=5 // pred_check_branch
      %6159 = sbr.rel (%p6157) target = $region52
    $region51: #{rcnn_forward.1} parent=5 // pred_region
      %s6160 = ssub.s32 %s12, 2
      // Predicated region
      $region53: #{rcnn_forward.1} parent=51 // pred_check
        %p6161 = pneg %p177
      $region54: #{rcnn_forward.1} parent=51 // pred_check_branch
        %6163 = sbr.rel (%p6161) target = $region56
      $region55: #{rcnn_forward.1} parent=51 // pred_region
        %s6164 = smul.u32 8, %s18
        %p6165 = scmp.lt.s32.totalorder %s6164, 15
        %s6166 = scalar_select %p6165, %s6164, 15
        %s6167 = smul.addr %s6166, 8
        %s6168 = scalar_lea.vmem %s6, %s6167
      $region56: #{rcnn_forward.1} parent=51 // pred_fallthru
        _
    $region52: #{rcnn_forward.1} parent=5 // pred_fallthru
      _
  $region6: #{rcnn_forward.1} parent=0 // loop_footer
    %s16 = sadd.s32 1, %s12
  $region7: #{rcnn_forward.1} parent=0 // loop_footer_branch
    %11 = sbr.rel target = $region3
  $region8: #{rcnn_forward.1} parent=0 // loop_exit
    _

</llo_original>
